<compile_context>
chip_gen: v7x
topology: tpu7x:2x2x1
jax: 0.10.0
libtpu: 0.0.40
codegen_flags: <defaults>
</compile_context>

<pallas_src>
import jax
import jax.numpy as jnp
from jax.experimental import pallas as pl
from jax.experimental.pallas import tpu as pltpu

_EPS = 1e-5


def _resblock_kernel(x_ref, gamma_ref, beta_ref, wt_ref, bt_ref,
                     w1t_ref, b1_ref, w2t_ref, b2_ref, o_ref):
    Bt, S, D = x_ref.shape
    mxu_dt = wt_ref.dtype          # weights pre-cast to bf16 in the wrapper

    # Residual / LayerNorm math in f32; leading dims merged (layout-free).
    x2 = x_ref[...].reshape(Bt * S, D).astype(jnp.float32)       # (Bt*S, D)
    gamma = gamma_ref[...].astype(jnp.float32)                    # (1, D)
    beta = beta_ref[...].astype(jnp.float32)                      # (1, D)

    def layernorm(v):
        # One-pass statistics: var = E[x^2] - mu^2 (biased, matches LayerNorm).
        mu = jnp.mean(v, axis=-1, keepdims=True)
        var = jnp.mean(v * v, axis=-1, keepdims=True) - mu * mu
        return (v - mu) * jax.lax.rsqrt(var + _EPS) * gamma + beta

    # ---- temporal mixing: z[b,s,d] = relu(sum_k Wt[s,k] * xn[b,k,d] + bt[s]) ----
    # Per-batch (S,S)@(S,D) matmuls with Wt stationary: no input/output
    # transpose relayouts (old version swapped S<->D twice per grid step).
    xn = layernorm(x2).astype(mxu_dt).reshape(Bt, S, D)
    wt = wt_ref[...]
    z = jnp.stack([jnp.dot(wt, xn[b], preferred_element_type=jnp.float32)
                   for b in range(Bt)])                           # (Bt, S, D) f32
    z = jnp.maximum(z + bt_ref[...].astype(jnp.float32), 0.0)     # (S,1) bias bcast over D
    # TODO(synk): dropout is identity (inference mode); no RNG mask applied.
    x1 = z.reshape(Bt * S, D) + x2                                # residual (f32)

    # ---- feature-mixing MLP, batch fused into the matmul M dimension ----
    xn2 = layernorm(x1).astype(mxu_dt)                            # (Bt*S, D)
    h = jnp.dot(xn2, w1t_ref[...], preferred_element_type=jnp.float32)
    h = jnp.maximum(h + b1_ref[...].astype(jnp.float32), 0.0)     # (Bt*S, ff)
    y = jnp.dot(h.astype(mxu_dt), w2t_ref[...], preferred_element_type=jnp.float32)
    y = y + b2_ref[...].astype(jnp.float32)                       # (Bt*S, D)

    # TODO(synk): with D (=32) < 128 lanes this store is lane-masked; see
    # module docstring for the lane-dense output trade-off.
    o_ref[...] = (y + x2).reshape(Bt, S, D).astype(o_ref.dtype)


def _round_up(x, m):
    return (x + m - 1) // m * m


def _padded_bytes(rows, cols, itemsize):
    """(8, 128)-tiled VMEM footprint of a 2-D tile."""
    return _round_up(rows, 8) * _round_up(cols, 128) * itemsize


def _tpu_generation_info():
    """Best-effort (tensorcores-per-device, VMEM capacity bytes)."""
    vmem_cap = 128 * 1024 * 1024
    try:
        info = pltpu.get_tpu_info()
        vmem_cap = int(getattr(info, "vmem_capacity_bytes", vmem_cap))
    except Exception:
        pass
    if vmem_cap < 16 * 1024 * 1024:          # defensive: bogus / missing query
        vmem_cap = 128 * 1024 * 1024
    kind = ""
    try:
        kind = jax.devices()[0].device_kind.lower()
    except Exception:
        pass
    # Chips that expose >1 TensorCore to a single Pallas grid.
    multi_tc = any(tag in kind for tag in ("v4", "v5p", "v7"))
    return (2 if multi_tc else 1), vmem_cap


def _vmem_estimate(block_b, S, D, ff, x_itemsize, w_itemsize=2):
    """Approximate VMEM resident set for one grid step (lane/sublane padded)."""
    # x and out blocks, double-buffered.
    xo = 2 * 2 * block_b * _padded_bytes(S, D, x_itemsize)
    # Grid-invariant weights/biases (double-buffered by the default pipeline).
    w = 2 * (_padded_bytes(S, S, w_itemsize)
             + _padded_bytes(D, ff, w_itemsize)
             + _padded_bytes(ff, D, w_itemsize)
             + _padded_bytes(S, 1, 4)
             + _padded_bytes(1, ff, 4)
             + 3 * _padded_bytes(1, D, 4))
    # In-kernel f32 intermediates (x2, xn, z, x1, xn2, h, y, out-tmp).
    inter = 8 * _padded_bytes(block_b * S, max(D, ff), 4)
    return xo + w + inter


def _choose_block_b(B, S, D, ff, x_itemsize, num_tc, vmem_cap):
    """Largest divisor of B fitting the VMEM budget, keeping >= num_tc steps."""
    budget = int(0.6 * min(vmem_cap, 128 * 1024 * 1024))
    divisors = [b for b in range(1, B + 1) if B % b == 0]
    fits = [b for b in divisors
            if _vmem_estimate(b, S, D, ff, x_itemsize) <= budget] or [1]
    cand = [b for b in fits if B // b >= num_tc] or fits
    return max(cand)


def resblock_forward(x, params, block_b=None, mxu_dtype=jnp.bfloat16):
    """x: (B, S, D) with S == D (required by the reference module)."""
    B, S, D = x.shape
    assert S == D, "ResBlock forward requires seq_len == input_dim"
    gamma, beta, wt, bt, w1, b1, w2, b2 = params
    ff = w1.shape[0]

    num_tc, vmem_cap = _tpu_generation_info()
    if block_b is None:
        block_b = _choose_block_b(B, S, D, ff, x.dtype.itemsize, num_tc, vmem_cap)
    assert B % block_b == 0, "batch must be divisible by the batch block"
    n_blocks = B // block_b

    f32 = jnp.float32
    # MXU operands in bf16 (native single-pass MXU on every generation);
    # LayerNorm / bias / residual math stays in f32.
    gamma2 = gamma.reshape(1, D).astype(f32)
    beta2 = beta.reshape(1, D).astype(f32)
    wt_m = wt.astype(mxu_dtype)                     # (S, S), stationary LHS
    bt_col = bt.reshape(S, 1).astype(f32)           # sublane bias column
    w1t = w1.T.astype(mxu_dtype)                    # (D, ff)
    b1r = b1.reshape(1, ff).astype(f32)
    w2t = w2.T.astype(mxu_dtype)                    # (ff, D)
    b2r = b2.reshape(1, D).astype(f32)

    # TODO(synk): at production sizes these grid-invariant weight specs could
    # be single-buffered (pipeline_mode=pl.Buffered(1)) to halve their VMEM
    # footprint on v7x; left at the default depth here.
    def const_spec(shape):
        n = len(shape)
        return pl.BlockSpec(shape, lambda b, _n=n: (0,) * _n)

    w_item = jnp.dtype(mxu_dtype).itemsize
    est = _vmem_estimate(block_b, S, D, ff, x.dtype.itemsize, w_item)
    vmem_limit = int(min(0.9 * vmem_cap, max(32 * 1024 * 1024, 2 * est)))

    itemsize = x.dtype.itemsize
    flops = 2 * B * S * D * (S + 2 * ff) + 16 * B * S * D
    bytes_accessed = (2 * B * S * D) * itemsize + \
        (S * S + 2 * D * ff) * w_item + (S + ff + 3 * D) * 4

    return pl.pallas_call(
        _resblock_kernel,
        out_shape=jax.ShapeDtypeStruct((B, S, D), x.dtype),
        grid=(n_blocks,),
        in_specs=[
            pl.BlockSpec((block_b, S, D), lambda b: (b, 0, 0)),  # x block
            const_spec((1, D)),    # gamma
            const_spec((1, D)),    # beta
            const_spec((S, S)),    # Wt (stationary LHS of the temporal mix)
            const_spec((S, 1)),    # bt column
            const_spec((D, ff)),   # W1^T
            const_spec((1, ff)),   # b1
            const_spec((ff, D)),   # W2^T
            const_spec((1, D)),    # b2
        ],
        out_specs=pl.BlockSpec((block_b, S, D), lambda b: (b, 0, 0)),
        compiler_params=pltpu.CompilerParams(
            dimension_semantics=("parallel",),
            vmem_limit_bytes=vmem_limit),
        cost_estimate=pl.CostEstimate(
            flops=flops,
            transcendentals=2 * B * S,
            bytes_accessed=bytes_accessed),
    )(x, gamma2, beta2, wt_m, bt_col, w1t, b1r, w2t, b2r)


def resblock_reference(x, params):
    """Pure-JAX (f32) reference mirroring the PyTorch forward (eval mode)."""
    gamma, beta, wt, bt, w1, b1, w2, b2 = params

    def ln(v):
        mu = jnp.mean(v, axis=-1, keepdims=True)
        var = jnp.mean((v - mu) ** 2, axis=-1, keepdims=True)
        return (v - mu) / jnp.sqrt(var + _EPS) * gamma + beta

    res = x
    h = ln(x)
    h = jnp.swapaxes(h, 1, 2)                   # (B, D, S)
    h = jax.nn.relu(h @ wt.T + bt)              # Linear(D, D) over last dim
    h = jnp.swapaxes(h, 1, 2)                   # (B, S, D)
    x1 = h + res
    h2 = ln(x1)
    h2 = jax.nn.relu(h2 @ w1.T + b1)
    h2 = h2 @ w2.T + b2
    return h2 + res


def make_params(key, input_dim, ff_dim, dtype=jnp.float32):
    ks = jax.random.split(key, 6)
    d, ff = input_dim, ff_dim
    gamma = jnp.ones((d,), dtype)
    beta = jnp.zeros((d,), dtype)
    # torch.nn.Linear default init: U(-1/sqrt(fan_in), 1/sqrt(fan_in))
    wt = jax.random.uniform(ks[0], (d, d), dtype, -1.0, 1.0) / jnp.sqrt(d)
    bt = jax.random.uniform(ks[1], (d,), dtype, -1.0, 1.0) / jnp.sqrt(d)
    w1 = jax.random.uniform(ks[2], (ff, d), dtype, -1.0, 1.0) / jnp.sqrt(d)
    b1 = jax.random.uniform(ks[3], (ff,), dtype, -1.0, 1.0) / jnp.sqrt(d)
    w2 = jax.random.uniform(ks[4], (d, ff), dtype, -1.0, 1.0) / jnp.sqrt(ff)
    b2 = jax.random.uniform(ks[5], (d,), dtype, -1.0, 1.0) / jnp.sqrt(ff)
    return (gamma, beta, wt, bt, w1, b1, w2, b2)


if __name__ == "__main__":
    # TODO(synk): norm_type == 'B' (BatchNorm1d) branch not instantiated here;
    # this script implements the norm_type == 'L' (LayerNorm) configuration.
    B, input_dim, ff_dim = 16, 32, 64
    S = input_dim  # seq_len must equal input_dim for this module's forward

    key = jax.random.PRNGKey(0)
    kx, kp = jax.random.split(key)
    x = jax.random.normal(kx, (B, S, input_dim), jnp.float32)
    params = make_params(kp, input_dim, ff_dim)

    out = resblock_forward(x, params)
    out = jax.block_until_ready(out)

    ref = resblock_reference(x, params)
    assert out.shape == (B, S, input_dim)
    # bf16 MXU operands vs. the pure-f32 reference: tolerance loosened.
    assert jnp.allclose(out, ref, atol=5e-2, rtol=5e-2), (
        f"max err {jnp.max(jnp.abs(out - ref))}")

    print("KERNEL_OK")
</pallas_src>

<mosaic_0001>
module attributes {stable_mosaic.version = 11 : i64} {
  func.func @_resblock_kernel(%arg0: i32, %arg1: memref<16x32x32xf32, #tpu.memory_space<vmem>>, %arg2: memref<1x32xf32, #tpu.memory_space<vmem>>, %arg3: memref<1x32xf32, #tpu.memory_space<vmem>>, %arg4: memref<32x32xbf16, #tpu.memory_space<vmem>>, %arg5: memref<32x1xf32, #tpu.memory_space<vmem>>, %arg6: memref<32x64xbf16, #tpu.memory_space<vmem>>, %arg7: memref<1x64xf32, #tpu.memory_space<vmem>>, %arg8: memref<64x32xbf16, #tpu.memory_space<vmem>>, %arg9: memref<1x32xf32, #tpu.memory_space<vmem>>, %arg10: memref<16x32x32xf32, #tpu.memory_space<vmem>>) attributes {dimension_semantics = [#tpu.dimension_semantics<parallel>], iteration_bounds = array<i64: 1>, scalar_prefetch = 0 : i64, scratch_operands = 0 : i64, tpu.core_type = #tpu.core_type<tc>, window_params = [{transform_indices = @transform_0, window_bounds = array<i64: 16, 32, 32>}, {pipeline_mode = #tpu.pipeline_mode<synchronous>, transform_indices = @transform_1, window_bounds = array<i64: 1, 32>}, {pipeline_mode = #tpu.pipeline_mode<synchronous>, transform_indices = @transform_2, window_bounds = array<i64: 1, 32>}, {pipeline_mode = #tpu.pipeline_mode<synchronous>, transform_indices = @transform_3, window_bounds = array<i64: 32, 32>}, {pipeline_mode = #tpu.pipeline_mode<synchronous>, transform_indices = @transform_4, window_bounds = array<i64: 32, 1>}, {pipeline_mode = #tpu.pipeline_mode<synchronous>, transform_indices = @transform_5, window_bounds = array<i64: 32, 64>}, {pipeline_mode = #tpu.pipeline_mode<synchronous>, transform_indices = @transform_6, window_bounds = array<i64: 1, 64>}, {pipeline_mode = #tpu.pipeline_mode<synchronous>, transform_indices = @transform_7, window_bounds = array<i64: 64, 32>}, {pipeline_mode = #tpu.pipeline_mode<synchronous>, transform_indices = @transform_8, window_bounds = array<i64: 1, 32>}, {transform_indices = @transform_9, window_bounds = array<i64: 16, 32, 32>}]} {
    %c0 = arith.constant 0 : index
    %c0_0 = arith.constant 0 : index
    %c0_1 = arith.constant 0 : index
    %0 = vector.load %arg1[%c0, %c0_0, %c0_1] : memref<16x32x32xf32, #tpu.memory_space<vmem>>, vector<16x32x32xf32>
    %1 = vector.shape_cast %0 : vector<16x32x32xf32> to vector<512x32xf32>
    %c0_2 = arith.constant 0 : index
    %c0_3 = arith.constant 0 : index
    %2 = vector.load %arg2[%c0_2, %c0_3] : memref<1x32xf32, #tpu.memory_space<vmem>>, vector<1x32xf32>
    %c0_4 = arith.constant 0 : index
    %c0_5 = arith.constant 0 : index
    %3 = vector.load %arg3[%c0_4, %c0_5] : memref<1x32xf32, #tpu.memory_space<vmem>>, vector<1x32xf32>
    %cst = arith.constant dense<0.000000e+00> : vector<512xf32>
    %4 = vector.multi_reduction <add>, %1, %cst [1] : vector<512x32xf32> to vector<512xf32>
    %5 = vector.shape_cast %4 : vector<512xf32> to vector<512x1xf32>
    %cst_6 = arith.constant 3.200000e+01 : f32
    %6 = vector.broadcast %cst_6 : f32 to vector<512x1xf32>
    %7 = arith.divf %5, %6 : vector<512x1xf32>
    %8 = arith.mulf %1, %1 : vector<512x32xf32>
    %cst_7 = arith.constant dense<0.000000e+00> : vector<512xf32>
    %9 = vector.multi_reduction <add>, %8, %cst_7 [1] : vector<512x32xf32> to vector<512xf32>
    %10 = vector.shape_cast %9 : vector<512xf32> to vector<512x1xf32>
    %cst_8 = arith.constant 3.200000e+01 : f32
    %11 = vector.broadcast %cst_8 : f32 to vector<512x1xf32>
    %12 = arith.divf %10, %11 : vector<512x1xf32>
    %13 = arith.mulf %7, %7 : vector<512x1xf32>
    %14 = arith.subf %12, %13 : vector<512x1xf32>
    %15 = vector.broadcast %7 : vector<512x1xf32> to vector<512x32xf32>
    %16 = arith.subf %1, %15 : vector<512x32xf32>
    %cst_9 = arith.constant 9.99999974E-6 : f32
    %17 = vector.broadcast %cst_9 : f32 to vector<512x1xf32>
    %18 = arith.addf %14, %17 : vector<512x1xf32>
    %19 = math.rsqrt %18 : vector<512x1xf32>
    %20 = vector.broadcast %19 : vector<512x1xf32> to vector<512x32xf32>
    %21 = arith.mulf %16, %20 : vector<512x32xf32>
    %22 = vector.broadcast %2 : vector<1x32xf32> to vector<512x32xf32>
    %23 = arith.mulf %21, %22 : vector<512x32xf32>
    %24 = vector.broadcast %3 : vector<1x32xf32> to vector<512x32xf32>
    %25 = arith.addf %23, %24 : vector<512x32xf32>
    %26 = arith.truncf %25 : vector<512x32xf32> to vector<512x32xbf16>
    %27 = vector.shape_cast %26 : vector<512x32xbf16> to vector<16x32x32xbf16>
    %c0_10 = arith.constant 0 : index
    %c0_11 = arith.constant 0 : index
    %28 = vector.load %arg4[%c0_10, %c0_11] : memref<32x32xbf16, #tpu.memory_space<vmem>>, vector<32x32xbf16>
    %29 = vector.extract_strided_slice %27 {offsets = [0, 0, 0], sizes = [1, 32, 32], strides = [1, 1, 1]} : vector<16x32x32xbf16> to vector<1x32x32xbf16>
    %30 = vector.shape_cast %29 : vector<1x32x32xbf16> to vector<32x32xbf16>
    %cst_12 = arith.constant dense<0.000000e+00> : vector<32x32xf32>
    %31 = tpu.matmul %28, %30, %cst_12 {dimension_numbers = #tpu.dot_dimension_numbers<[1], [0], [0], [1], [0, 0, 1, 1], [], []>} : vector<32x32xbf16>, vector<32x32xbf16>, vector<32x32xf32> -> vector<32x32xf32>
    %32 = vector.extract_strided_slice %27 {offsets = [1, 0, 0], sizes = [1, 32, 32], strides = [1, 1, 1]} : vector<16x32x32xbf16> to vector<1x32x32xbf16>
    %33 = vector.shape_cast %32 : vector<1x32x32xbf16> to vector<32x32xbf16>
    %cst_13 = arith.constant dense<0.000000e+00> : vector<32x32xf32>
    %34 = tpu.matmul %28, %33, %cst_13 {dimension_numbers = #tpu.dot_dimension_numbers<[1], [0], [0], [1], [0, 0, 1, 1], [], []>} : vector<32x32xbf16>, vector<32x32xbf16>, vector<32x32xf32> -> vector<32x32xf32>
    %35 = vector.extract_strided_slice %27 {offsets = [2, 0, 0], sizes = [1, 32, 32], strides = [1, 1, 1]} : vector<16x32x32xbf16> to vector<1x32x32xbf16>
    %36 = vector.shape_cast %35 : vector<1x32x32xbf16> to vector<32x32xbf16>
    %cst_14 = arith.constant dense<0.000000e+00> : vector<32x32xf32>
    %37 = tpu.matmul %28, %36, %cst_14 {dimension_numbers = #tpu.dot_dimension_numbers<[1], [0], [0], [1], [0, 0, 1, 1], [], []>} : vector<32x32xbf16>, vector<32x32xbf16>, vector<32x32xf32> -> vector<32x32xf32>
    %38 = vector.extract_strided_slice %27 {offsets = [3, 0, 0], sizes = [1, 32, 32], strides = [1, 1, 1]} : vector<16x32x32xbf16> to vector<1x32x32xbf16>
    %39 = vector.shape_cast %38 : vector<1x32x32xbf16> to vector<32x32xbf16>
    %cst_15 = arith.constant dense<0.000000e+00> : vector<32x32xf32>
    %40 = tpu.matmul %28, %39, %cst_15 {dimension_numbers = #tpu.dot_dimension_numbers<[1], [0], [0], [1], [0, 0, 1, 1], [], []>} : vector<32x32xbf16>, vector<32x32xbf16>, vector<32x32xf32> -> vector<32x32xf32>
    %41 = vector.extract_strided_slice %27 {offsets = [4, 0, 0], sizes = [1, 32, 32], strides = [1, 1, 1]} : vector<16x32x32xbf16> to vector<1x32x32xbf16>
    %42 = vector.shape_cast %41 : vector<1x32x32xbf16> to vector<32x32xbf16>
    %cst_16 = arith.constant dense<0.000000e+00> : vector<32x32xf32>
    %43 = tpu.matmul %28, %42, %cst_16 {dimension_numbers = #tpu.dot_dimension_numbers<[1], [0], [0], [1], [0, 0, 1, 1], [], []>} : vector<32x32xbf16>, vector<32x32xbf16>, vector<32x32xf32> -> vector<32x32xf32>
    %44 = vector.extract_strided_slice %27 {offsets = [5, 0, 0], sizes = [1, 32, 32], strides = [1, 1, 1]} : vector<16x32x32xbf16> to vector<1x32x32xbf16>
    %45 = vector.shape_cast %44 : vector<1x32x32xbf16> to vector<32x32xbf16>
    %cst_17 = arith.constant dense<0.000000e+00> : vector<32x32xf32>
    %46 = tpu.matmul %28, %45, %cst_17 {dimension_numbers = #tpu.dot_dimension_numbers<[1], [0], [0], [1], [0, 0, 1, 1], [], []>} : vector<32x32xbf16>, vector<32x32xbf16>, vector<32x32xf32> -> vector<32x32xf32>
    %47 = vector.extract_strided_slice %27 {offsets = [6, 0, 0], sizes = [1, 32, 32], strides = [1, 1, 1]} : vector<16x32x32xbf16> to vector<1x32x32xbf16>
    %48 = vector.shape_cast %47 : vector<1x32x32xbf16> to vector<32x32xbf16>
    %cst_18 = arith.constant dense<0.000000e+00> : vector<32x32xf32>
    %49 = tpu.matmul %28, %48, %cst_18 {dimension_numbers = #tpu.dot_dimension_numbers<[1], [0], [0], [1], [0, 0, 1, 1], [], []>} : vector<32x32xbf16>, vector<32x32xbf16>, vector<32x32xf32> -> vector<32x32xf32>
    %50 = vector.extract_strided_slice %27 {offsets = [7, 0, 0], sizes = [1, 32, 32], strides = [1, 1, 1]} : vector<16x32x32xbf16> to vector<1x32x32xbf16>
    %51 = vector.shape_cast %50 : vector<1x32x32xbf16> to vector<32x32xbf16>
    %cst_19 = arith.constant dense<0.000000e+00> : vector<32x32xf32>
    %52 = tpu.matmul %28, %51, %cst_19 {dimension_numbers = #tpu.dot_dimension_numbers<[1], [0], [0], [1], [0, 0, 1, 1], [], []>} : vector<32x32xbf16>, vector<32x32xbf16>, vector<32x32xf32> -> vector<32x32xf32>
    %53 = vector.extract_strided_slice %27 {offsets = [8, 0, 0], sizes = [1, 32, 32], strides = [1, 1, 1]} : vector<16x32x32xbf16> to vector<1x32x32xbf16>
    %54 = vector.shape_cast %53 : vector<1x32x32xbf16> to vector<32x32xbf16>
    %cst_20 = arith.constant dense<0.000000e+00> : vector<32x32xf32>
    %55 = tpu.matmul %28, %54, %cst_20 {dimension_numbers = #tpu.dot_dimension_numbers<[1], [0], [0], [1], [0, 0, 1, 1], [], []>} : vector<32x32xbf16>, vector<32x32xbf16>, vector<32x32xf32> -> vector<32x32xf32>
    %56 = vector.extract_strided_slice %27 {offsets = [9, 0, 0], sizes = [1, 32, 32], strides = [1, 1, 1]} : vector<16x32x32xbf16> to vector<1x32x32xbf16>
    %57 = vector.shape_cast %56 : vector<1x32x32xbf16> to vector<32x32xbf16>
    %cst_21 = arith.constant dense<0.000000e+00> : vector<32x32xf32>
    %58 = tpu.matmul %28, %57, %cst_21 {dimension_numbers = #tpu.dot_dimension_numbers<[1], [0], [0], [1], [0, 0, 1, 1], [], []>} : vector<32x32xbf16>, vector<32x32xbf16>, vector<32x32xf32> -> vector<32x32xf32>
    %59 = vector.extract_strided_slice %27 {offsets = [10, 0, 0], sizes = [1, 32, 32], strides = [1, 1, 1]} : vector<16x32x32xbf16> to vector<1x32x32xbf16>
    %60 = vector.shape_cast %59 : vector<1x32x32xbf16> to vector<32x32xbf16>
    %cst_22 = arith.constant dense<0.000000e+00> : vector<32x32xf32>
    %61 = tpu.matmul %28, %60, %cst_22 {dimension_numbers = #tpu.dot_dimension_numbers<[1], [0], [0], [1], [0, 0, 1, 1], [], []>} : vector<32x32xbf16>, vector<32x32xbf16>, vector<32x32xf32> -> vector<32x32xf32>
    %62 = vector.extract_strided_slice %27 {offsets = [11, 0, 0], sizes = [1, 32, 32], strides = [1, 1, 1]} : vector<16x32x32xbf16> to vector<1x32x32xbf16>
    %63 = vector.shape_cast %62 : vector<1x32x32xbf16> to vector<32x32xbf16>
    %cst_23 = arith.constant dense<0.000000e+00> : vector<32x32xf32>
    %64 = tpu.matmul %28, %63, %cst_23 {dimension_numbers = #tpu.dot_dimension_numbers<[1], [0], [0], [1], [0, 0, 1, 1], [], []>} : vector<32x32xbf16>, vector<32x32xbf16>, vector<32x32xf32> -> vector<32x32xf32>
    %65 = vector.extract_strided_slice %27 {offsets = [12, 0, 0], sizes = [1, 32, 32], strides = [1, 1, 1]} : vector<16x32x32xbf16> to vector<1x32x32xbf16>
    %66 = vector.shape_cast %65 : vector<1x32x32xbf16> to vector<32x32xbf16>
    %cst_24 = arith.constant dense<0.000000e+00> : vector<32x32xf32>
    %67 = tpu.matmul %28, %66, %cst_24 {dimension_numbers = #tpu.dot_dimension_numbers<[1], [0], [0], [1], [0, 0, 1, 1], [], []>} : vector<32x32xbf16>, vector<32x32xbf16>, vector<32x32xf32> -> vector<32x32xf32>
    %68 = vector.extract_strided_slice %27 {offsets = [13, 0, 0], sizes = [1, 32, 32], strides = [1, 1, 1]} : vector<16x32x32xbf16> to vector<1x32x32xbf16>
    %69 = vector.shape_cast %68 : vector<1x32x32xbf16> to vector<32x32xbf16>
    %cst_25 = arith.constant dense<0.000000e+00> : vector<32x32xf32>
    %70 = tpu.matmul %28, %69, %cst_25 {dimension_numbers = #tpu.dot_dimension_numbers<[1], [0], [0], [1], [0, 0, 1, 1], [], []>} : vector<32x32xbf16>, vector<32x32xbf16>, vector<32x32xf32> -> vector<32x32xf32>
    %71 = vector.extract_strided_slice %27 {offsets = [14, 0, 0], sizes = [1, 32, 32], strides = [1, 1, 1]} : vector<16x32x32xbf16> to vector<1x32x32xbf16>
    %72 = vector.shape_cast %71 : vector<1x32x32xbf16> to vector<32x32xbf16>
    %cst_26 = arith.constant dense<0.000000e+00> : vector<32x32xf32>
    %73 = tpu.matmul %28, %72, %cst_26 {dimension_numbers = #tpu.dot_dimension_numbers<[1], [0], [0], [1], [0, 0, 1, 1], [], []>} : vector<32x32xbf16>, vector<32x32xbf16>, vector<32x32xf32> -> vector<32x32xf32>
    %74 = vector.extract_strided_slice %27 {offsets = [15, 0, 0], sizes = [1, 32, 32], strides = [1, 1, 1]} : vector<16x32x32xbf16> to vector<1x32x32xbf16>
    %75 = vector.shape_cast %74 : vector<1x32x32xbf16> to vector<32x32xbf16>
    %cst_27 = arith.constant dense<0.000000e+00> : vector<32x32xf32>
    %76 = tpu.matmul %28, %75, %cst_27 {dimension_numbers = #tpu.dot_dimension_numbers<[1], [0], [0], [1], [0, 0, 1, 1], [], []>} : vector<32x32xbf16>, vector<32x32xbf16>, vector<32x32xf32> -> vector<32x32xf32>
    %77 = vector.shape_cast %31 : vector<32x32xf32> to vector<1x32x32xf32>
    %78 = vector.shape_cast %34 : vector<32x32xf32> to vector<1x32x32xf32>
    %79 = vector.shape_cast %37 : vector<32x32xf32> to vector<1x32x32xf32>
    %80 = vector.shape_cast %40 : vector<32x32xf32> to vector<1x32x32xf32>
    %81 = vector.shape_cast %43 : vector<32x32xf32> to vector<1x32x32xf32>
    %82 = vector.shape_cast %46 : vector<32x32xf32> to vector<1x32x32xf32>
    %83 = vector.shape_cast %49 : vector<32x32xf32> to vector<1x32x32xf32>
    %84 = vector.shape_cast %52 : vector<32x32xf32> to vector<1x32x32xf32>
    %85 = vector.shape_cast %55 : vector<32x32xf32> to vector<1x32x32xf32>
    %86 = vector.shape_cast %58 : vector<32x32xf32> to vector<1x32x32xf32>
    %87 = vector.shape_cast %61 : vector<32x32xf32> to vector<1x32x32xf32>
    %88 = vector.shape_cast %64 : vector<32x32xf32> to vector<1x32x32xf32>
    %89 = vector.shape_cast %67 : vector<32x32xf32> to vector<1x32x32xf32>
    %90 = vector.shape_cast %70 : vector<32x32xf32> to vector<1x32x32xf32>
    %91 = vector.shape_cast %73 : vector<32x32xf32> to vector<1x32x32xf32>
    %92 = vector.shape_cast %76 : vector<32x32xf32> to vector<1x32x32xf32>
    %93 = tpu.concatenate %77, %78, %79, %80, %81, %82, %83, %84, %85, %86, %87, %88, %89, %90, %91, %92 in 0 : vector<1x32x32xf32>, vector<1x32x32xf32>, vector<1x32x32xf32>, vector<1x32x32xf32>, vector<1x32x32xf32>, vector<1x32x32xf32>, vector<1x32x32xf32>, vector<1x32x32xf32>, vector<1x32x32xf32>, vector<1x32x32xf32>, vector<1x32x32xf32>, vector<1x32x32xf32>, vector<1x32x32xf32>, vector<1x32x32xf32>, vector<1x32x32xf32>, vector<1x32x32xf32> -> vector<16x32x32xf32>
    %c0_28 = arith.constant 0 : index
    %c0_29 = arith.constant 0 : index
    %94 = vector.load %arg5[%c0_28, %c0_29] : memref<32x1xf32, #tpu.memory_space<vmem>>, vector<32x1xf32>
    %95 = vector.shape_cast %94 : vector<32x1xf32> to vector<1x32x1xf32>
    %96 = vector.broadcast %95 : vector<1x32x1xf32> to vector<16x32x32xf32>
    %97 = arith.addf %93, %96 : vector<16x32x32xf32>
    %cst_30 = arith.constant 0.000000e+00 : f32
    %98 = vector.broadcast %cst_30 : f32 to vector<16x32x32xf32>
    %99 = arith.maximumf %97, %98 : vector<16x32x32xf32>
    %100 = vector.shape_cast %99 : vector<16x32x32xf32> to vector<512x32xf32>
    %101 = arith.addf %100, %1 : vector<512x32xf32>
    %cst_31 = arith.constant dense<0.000000e+00> : vector<512xf32>
    %102 = vector.multi_reduction <add>, %101, %cst_31 [1] : vector<512x32xf32> to vector<512xf32>
    %103 = vector.shape_cast %102 : vector<512xf32> to vector<512x1xf32>
    %cst_32 = arith.constant 3.200000e+01 : f32
    %104 = vector.broadcast %cst_32 : f32 to vector<512x1xf32>
    %105 = arith.divf %103, %104 : vector<512x1xf32>
    %106 = arith.mulf %101, %101 : vector<512x32xf32>
    %cst_33 = arith.constant dense<0.000000e+00> : vector<512xf32>
    %107 = vector.multi_reduction <add>, %106, %cst_33 [1] : vector<512x32xf32> to vector<512xf32>
    %108 = vector.shape_cast %107 : vector<512xf32> to vector<512x1xf32>
    %cst_34 = arith.constant 3.200000e+01 : f32
    %109 = vector.broadcast %cst_34 : f32 to vector<512x1xf32>
    %110 = arith.divf %108, %109 : vector<512x1xf32>
    %111 = arith.mulf %105, %105 : vector<512x1xf32>
    %112 = arith.subf %110, %111 : vector<512x1xf32>
    %113 = vector.broadcast %105 : vector<512x1xf32> to vector<512x32xf32>
    %114 = arith.subf %101, %113 : vector<512x32xf32>
    %cst_35 = arith.constant 9.99999974E-6 : f32
    %115 = vector.broadcast %cst_35 : f32 to vector<512x1xf32>
    %116 = arith.addf %112, %115 : vector<512x1xf32>
    %117 = math.rsqrt %116 : vector<512x1xf32>
    %118 = vector.broadcast %117 : vector<512x1xf32> to vector<512x32xf32>
    %119 = arith.mulf %114, %118 : vector<512x32xf32>
    %120 = vector.broadcast %2 : vector<1x32xf32> to vector<512x32xf32>
    %121 = arith.mulf %119, %120 : vector<512x32xf32>
    %122 = vector.broadcast %3 : vector<1x32xf32> to vector<512x32xf32>
    %123 = arith.addf %121, %122 : vector<512x32xf32>
    %124 = arith.truncf %123 : vector<512x32xf32> to vector<512x32xbf16>
    %c0_36 = arith.constant 0 : index
    %c0_37 = arith.constant 0 : index
    %125 = vector.load %arg6[%c0_36, %c0_37] : memref<32x64xbf16, #tpu.memory_space<vmem>>, vector<32x64xbf16>
    %cst_38 = arith.constant dense<0.000000e+00> : vector<512x64xf32>
    %126 = tpu.matmul %124, %125, %cst_38 {dimension_numbers = #tpu.dot_dimension_numbers<[1], [0], [0], [1], [0, 0, 1, 1], [], []>} : vector<512x32xbf16>, vector<32x64xbf16>, vector<512x64xf32> -> vector<512x64xf32>
    %c0_39 = arith.constant 0 : index
    %c0_40 = arith.constant 0 : index
    %127 = vector.load %arg7[%c0_39, %c0_40] : memref<1x64xf32, #tpu.memory_space<vmem>>, vector<1x64xf32>
    %128 = vector.broadcast %127 : vector<1x64xf32> to vector<512x64xf32>
    %129 = arith.addf %126, %128 : vector<512x64xf32>
    %cst_41 = arith.constant 0.000000e+00 : f32
    %130 = vector.broadcast %cst_41 : f32 to vector<512x64xf32>
    %131 = arith.maximumf %129, %130 : vector<512x64xf32>
    %132 = arith.truncf %131 : vector<512x64xf32> to vector<512x64xbf16>
    %c0_42 = arith.constant 0 : index
    %c0_43 = arith.constant 0 : index
    %133 = vector.load %arg8[%c0_42, %c0_43] : memref<64x32xbf16, #tpu.memory_space<vmem>>, vector<64x32xbf16>
    %cst_44 = arith.constant dense<0.000000e+00> : vector<512x32xf32>
    %134 = tpu.matmul %132, %133, %cst_44 {dimension_numbers = #tpu.dot_dimension_numbers<[1], [0], [0], [1], [0, 0, 1, 1], [], []>} : vector<512x64xbf16>, vector<64x32xbf16>, vector<512x32xf32> -> vector<512x32xf32>
    %c0_45 = arith.constant 0 : index
    %c0_46 = arith.constant 0 : index
    %135 = vector.load %arg9[%c0_45, %c0_46] : memref<1x32xf32, #tpu.memory_space<vmem>>, vector<1x32xf32>
    %136 = vector.broadcast %135 : vector<1x32xf32> to vector<512x32xf32>
    %137 = arith.addf %134, %136 : vector<512x32xf32>
    %138 = arith.addf %137, %1 : vector<512x32xf32>
    %139 = vector.shape_cast %138 : vector<512x32xf32> to vector<16x32x32xf32>
    %c0_47 = arith.constant 0 : index
    %c0_48 = arith.constant 0 : index
    %c0_49 = arith.constant 0 : index
    %140 = vector.load %arg10[%c0_47, %c0_48, %c0_49] : memref<16x32x32xf32, #tpu.memory_space<vmem>>, vector<16x32x32xf32>
    tpu.vector_store %arg10[%c0_47, %c0_48, %c0_49], %139 {strides = array<i32>} : memref<16x32x32xf32, #tpu.memory_space<vmem>>, vector<16x32x32xf32>,
    return
  }
  func.func @transform_0(%arg0: i32) -> (i32, i32, i32) {
    %c0_i32 = arith.constant 0 : i32
    %c0_i32_0 = arith.constant 0 : i32
    %c0_i32_1 = arith.constant 0 : i32
    return %arg0, %c0_i32, %c0_i32_0 : i32, i32, i32
  }
  func.func @transform_1(%arg0: i32) -> (i32, i32) {
    %c0_i32 = arith.constant 0 : i32
    %c0_i32_0 = arith.constant 0 : i32
    %c0_i32_1 = arith.constant 0 : i32
    return %c0_i32, %c0_i32_0 : i32, i32
  }
  func.func @transform_2(%arg0: i32) -> (i32, i32) {
    %c0_i32 = arith.constant 0 : i32
    %c0_i32_0 = arith.constant 0 : i32
    %c0_i32_1 = arith.constant 0 : i32
    return %c0_i32, %c0_i32_0 : i32, i32
  }
  func.func @transform_3(%arg0: i32) -> (i32, i32) {
    %c0_i32 = arith.constant 0 : i32
    %c0_i32_0 = arith.constant 0 : i32
    %c0_i32_1 = arith.constant 0 : i32
    return %c0_i32, %c0_i32_0 : i32, i32
  }
  func.func @transform_4(%arg0: i32) -> (i32, i32) {
    %c0_i32 = arith.constant 0 : i32
    %c0_i32_0 = arith.constant 0 : i32
    %c0_i32_1 = arith.constant 0 : i32
    return %c0_i32, %c0_i32_0 : i32, i32
  }
  func.func @transform_5(%arg0: i32) -> (i32, i32) {
    %c0_i32 = arith.constant 0 : i32
    %c0_i32_0 = arith.constant 0 : i32
    %c0_i32_1 = arith.constant 0 : i32
    return %c0_i32, %c0_i32_0 : i32, i32
  }
  func.func @transform_6(%arg0: i32) -> (i32, i32) {
    %c0_i32 = arith.constant 0 : i32
    %c0_i32_0 = arith.constant 0 : i32
    %c0_i32_1 = arith.constant 0 : i32
    return %c0_i32, %c0_i32_0 : i32, i32
  }
  func.func @transform_7(%arg0: i32) -> (i32, i32) {
    %c0_i32 = arith.constant 0 : i32
    %c0_i32_0 = arith.constant 0 : i32
    %c0_i32_1 = arith.constant 0 : i32
    return %c0_i32, %c0_i32_0 : i32, i32
  }
  func.func @transform_8(%arg0: i32) -> (i32, i32) {
    %c0_i32 = arith.constant 0 : i32
    %c0_i32_0 = arith.constant 0 : i32
    %c0_i32_1 = arith.constant 0 : i32
    return %c0_i32, %c0_i32_0 : i32, i32
  }
  func.func @transform_9(%arg0: i32) -> (i32, i32, i32) {
    %c0_i32 = arith.constant 0 : i32
    %c0_i32_0 = arith.constant 0 : i32
    %c0_i32_1 = arith.constant 0 : i32
    return %arg0, %c0_i32, %c0_i32_0 : i32, i32, i32
  }
}

</mosaic_0001>

<llo_original>
// kernel: tpu_custom_call.1
$region0: #{tpu_custom_call.1}
  #allocation0 [shape = 'u32[]', space=smem, size = 0x4, offset = 0x4, fixed_abs, tag = 'smem constant byte address 0x4 - core index']
  #allocation1 [shape = 'u32[144,128]{1,0:T(1,128)}', space=vmem, size = 0x12000, scoped, tag = 'internal scratch']
  %s0 = inlined_call_operand.hbm [shape: f32[16,32,32], index: 0, kind: input, shape index: {}]
  %s1 = inlined_call_operand.vmem [shape: f32[1,32], index: 1, kind: input, shape index: {}]
  %s2 = inlined_call_operand.vmem [shape: f32[1,32], index: 2, kind: input, shape index: {}]
  %s3 = inlined_call_operand.vmem [shape: bf16[32,32], index: 3, kind: input, shape index: {}]
  %s4 = inlined_call_operand.vmem [shape: f32[32,1], index: 4, kind: input, shape index: {}]
  %s5 = inlined_call_operand.vmem [shape: bf16[32,64], index: 5, kind: input, shape index: {}]
  %s6 = inlined_call_operand.vmem [shape: f32[1,64], index: 6, kind: input, shape index: {}]
  %s7 = inlined_call_operand.vmem [shape: bf16[64,32], index: 7, kind: input, shape index: {}]
  %s8 = inlined_call_operand.vmem [shape: f32[1,32], index: 8, kind: input, shape index: {}]
  %s9 = inlined_call_operand.hbm [shape: f32[16,32,32], index: 9, kind: output, shape index: {}]
  %s10 = sld [smem:[#allocation0]]
  $region50: #{tpu_custom_call.1} parent=0
    _
  %s12 = ssub.s32 1, %s10
  %s13 = scalar_select 0, %s12, %s10
  $region1: #{tpu_custom_call.1} parent=0
    #allocation2 [shape = 'u8[262144]{0}', space=vmem, size = 0x40000, scoped, tag = 'input window, operand 0, single buffered']
    #allocation3 [shape = 's32[1]{0}', space=sflag, size = 0x4, scoped, tag = 'scoped memory for tpu_custom_call.1']
    #allocation4 [shape = 's32[1]{0}', space=sflag, size = 0x4, scoped, tag = 'scoped memory for tpu_custom_call.1']
    #allocation5 [shape = 'u8[262144]{0}', space=vmem, size = 0x40000, scoped, tag = 'output window, operand 0, single buffered']
    %14 = vsyncpa [#allocation3], 0
    %15 = vsyncpa [#allocation4], 0
    // Predicated region
    $region2: #{tpu_custom_call.1} parent=1 // pred_check
      _
    $region3: #{tpu_custom_call.1} parent=1 // pred_check_branch
      %17 = sbr.rel (0) target = $region5
    $region4: #{tpu_custom_call.1} parent=1 // pred_region
      %s19 = ssub.s32 8192, 8192
      %20 = vsyncadd [#allocation3], %s19
      %s21 = sshll.u32 [#allocation2], 4
      %s22 = int_to_ptr.vmem [resolvable:$true] %s21
      %27 = dma.hbm_to_vmem [thread:$0]  %s0, 8192, %s22, [#allocation3], 128, 128, 8
    $region5: #{tpu_custom_call.1} parent=1 // pred_fallthru
      _
    // Predicated region
    $region6: #{tpu_custom_call.1} parent=1 // pred_check
      _
    $region7: #{tpu_custom_call.1} parent=1 // pred_check_branch
      %29 = sbr.rel (0) target = $region9
    $region8: #{tpu_custom_call.1} parent=1 // pred_region
      _
    $region9: #{tpu_custom_call.1} parent=1 // pred_fallthru
      _
    // Predicated region
    $region10: #{tpu_custom_call.1} parent=1 // pred_check
      _
    $region11: #{tpu_custom_call.1} parent=1 // pred_check_branch
      %31 = sbr.rel (0) target = $region13
    $region12: #{tpu_custom_call.1} parent=1 // pred_region
      _
    $region13: #{tpu_custom_call.1} parent=1 // pred_fallthru
      _
    // Predicated region
    $region14: #{tpu_custom_call.1} parent=1 // pred_check
      _
    $region15: #{tpu_custom_call.1} parent=1 // pred_check_branch
      %33 = sbr.rel (0) target = $region17
    $region16: #{tpu_custom_call.1} parent=1 // pred_region
      _
    $region17: #{tpu_custom_call.1} parent=1 // pred_fallthru
      _
    // Predicated region
    $region18: #{tpu_custom_call.1} parent=1 // pred_check
      _
    $region19: #{tpu_custom_call.1} parent=1 // pred_check_branch
      %35 = sbr.rel (0) target = $region21
    $region20: #{tpu_custom_call.1} parent=1 // pred_region
      _
    $region21: #{tpu_custom_call.1} parent=1 // pred_fallthru
      _
    // Predicated region
    $region22: #{tpu_custom_call.1} parent=1 // pred_check
      _
    $region23: #{tpu_custom_call.1} parent=1 // pred_check_branch
      %37 = sbr.rel (0) target = $region25
    $region24: #{tpu_custom_call.1} parent=1 // pred_region
      _
    $region25: #{tpu_custom_call.1} parent=1 // pred_fallthru
      _
    // Predicated region
    $region26: #{tpu_custom_call.1} parent=1 // pred_check
      _
    $region27: #{tpu_custom_call.1} parent=1 // pred_check_branch
      %39 = sbr.rel (0) target = $region29
    $region28: #{tpu_custom_call.1} parent=1 // pred_region
      _
    $region29: #{tpu_custom_call.1} parent=1 // pred_fallthru
      _
    // Predicated region
    $region30: #{tpu_custom_call.1} parent=1 // pred_check
      _
    $region31: #{tpu_custom_call.1} parent=1 // pred_check_branch
      %41 = sbr.rel (0) target = $region33
    $region32: #{tpu_custom_call.1} parent=1 // pred_region
      _
    $region33: #{tpu_custom_call.1} parent=1 // pred_fallthru
      _
    // Predicated region
    $region34: #{tpu_custom_call.1} parent=1 // pred_check
      _
    $region35: #{tpu_custom_call.1} parent=1 // pred_check_branch
      %43 = sbr.rel (0) target = $region37
    $region36: #{tpu_custom_call.1} parent=1 // pred_region
      _
    $region37: #{tpu_custom_call.1} parent=1 // pred_fallthru
      _
    // Predicated region
    $region38: #{tpu_custom_call.1} parent=1 // pred_check
      _
    $region39: #{tpu_custom_call.1} parent=1 // pred_check_branch
      %45 = sbr.rel (0) target = $region41
    $region40: #{tpu_custom_call.1} parent=1 // pred_region
      %46 = dma.done [#allocation3], 8192
    $region41: #{tpu_custom_call.1} parent=1 // pred_fallthru
      _
    %v48 = vld [vmem:[#allocation2] sm:$0xff]
    %v49 = vld [vmem:[#allocation2 + $0x8] sm:$0xff]
    %v50 = vld [vmem:[#allocation2 + $0x10] sm:$0xff]
    %v51 = vld [vmem:[#allocation2 + $0x18] sm:$0xff]
    %v52 = vld [vmem:[#allocation2 + $0x20] sm:$0xff]
    %v53 = vld [vmem:[#allocation2 + $0x28] sm:$0xff]
    %v54 = vld [vmem:[#allocation2 + $0x30] sm:$0xff]
    %v55 = vld [vmem:[#allocation2 + $0x38] sm:$0xff]
    %v56 = vld [vmem:[#allocation2 + $0x40] sm:$0xff]
    %v57 = vld [vmem:[#allocation2 + $0x48] sm:$0xff]
    %v58 = vld [vmem:[#allocation2 + $0x50] sm:$0xff]
    %v59 = vld [vmem:[#allocation2 + $0x58] sm:$0xff]
    %v60 = vld [vmem:[#allocation2 + $0x60] sm:$0xff]
    %v61 = vld [vmem:[#allocation2 + $0x68] sm:$0xff]
    %v62 = vld [vmem:[#allocation2 + $0x70] sm:$0xff]
    %v63 = vld [vmem:[#allocation2 + $0x78] sm:$0xff]
    %v64 = vld [vmem:[#allocation2 + $0x80] sm:$0xff]
    %v65 = vld [vmem:[#allocation2 + $0x88] sm:$0xff]
    %v66 = vld [vmem:[#allocation2 + $0x90] sm:$0xff]
    %v67 = vld [vmem:[#allocation2 + $0x98] sm:$0xff]
    %v68 = vld [vmem:[#allocation2 + $0xa0] sm:$0xff]
    %v69 = vld [vmem:[#allocation2 + $0xa8] sm:$0xff]
    %v70 = vld [vmem:[#allocation2 + $0xb0] sm:$0xff]
    %v71 = vld [vmem:[#allocation2 + $0xb8] sm:$0xff]
    %v72 = vld [vmem:[#allocation2 + $0xc0] sm:$0xff]
    %v73 = vld [vmem:[#allocation2 + $0xc8] sm:$0xff]
    %v74 = vld [vmem:[#allocation2 + $0xd0] sm:$0xff]
    %v75 = vld [vmem:[#allocation2 + $0xd8] sm:$0xff]
    %v76 = vld [vmem:[#allocation2 + $0xe0] sm:$0xff]
    %v77 = vld [vmem:[#allocation2 + $0xe8] sm:$0xff]
    %v78 = vld [vmem:[#allocation2 + $0xf0] sm:$0xff]
    %v79 = vld [vmem:[#allocation2 + $0xf8] sm:$0xff]
    %v80 = vld [vmem:[#allocation2 + $0x100] sm:$0xff]
    %v81 = vld [vmem:[#allocation2 + $0x108] sm:$0xff]
    %v82 = vld [vmem:[#allocation2 + $0x110] sm:$0xff]
    %v83 = vld [vmem:[#allocation2 + $0x118] sm:$0xff]
    %v84 = vld [vmem:[#allocation2 + $0x120] sm:$0xff]
    %v85 = vld [vmem:[#allocation2 + $0x128] sm:$0xff]
    %v86 = vld [vmem:[#allocation2 + $0x130] sm:$0xff]
    %v87 = vld [vmem:[#allocation2 + $0x138] sm:$0xff]
    %v88 = vld [vmem:[#allocation2 + $0x140] sm:$0xff]
    %v89 = vld [vmem:[#allocation2 + $0x148] sm:$0xff]
    %v90 = vld [vmem:[#allocation2 + $0x150] sm:$0xff]
    %v91 = vld [vmem:[#allocation2 + $0x158] sm:$0xff]
    %v92 = vld [vmem:[#allocation2 + $0x160] sm:$0xff]
    %v93 = vld [vmem:[#allocation2 + $0x168] sm:$0xff]
    %v94 = vld [vmem:[#allocation2 + $0x170] sm:$0xff]
    %v95 = vld [vmem:[#allocation2 + $0x178] sm:$0xff]
    %v96 = vld [vmem:[#allocation2 + $0x180] sm:$0xff]
    %v97 = vld [vmem:[#allocation2 + $0x188] sm:$0xff]
    %v98 = vld [vmem:[#allocation2 + $0x190] sm:$0xff]
    %v99 = vld [vmem:[#allocation2 + $0x198] sm:$0xff]
    %v100 = vld [vmem:[#allocation2 + $0x1a0] sm:$0xff]
    %v101 = vld [vmem:[#allocation2 + $0x1a8] sm:$0xff]
    %v102 = vld [vmem:[#allocation2 + $0x1b0] sm:$0xff]
    %v103 = vld [vmem:[#allocation2 + $0x1b8] sm:$0xff]
    %v104 = vld [vmem:[#allocation2 + $0x1c0] sm:$0xff]
    %v105 = vld [vmem:[#allocation2 + $0x1c8] sm:$0xff]
    %v106 = vld [vmem:[#allocation2 + $0x1d0] sm:$0xff]
    %v107 = vld [vmem:[#allocation2 + $0x1d8] sm:$0xff]
    %v108 = vld [vmem:[#allocation2 + $0x1e0] sm:$0xff]
    %v109 = vld [vmem:[#allocation2 + $0x1e8] sm:$0xff]
    %v110 = vld [vmem:[#allocation2 + $0x1f0] sm:$0xff]
    %v111 = vld [vmem:[#allocation2 + $0x1f8] sm:$0xff]
    %v112 = vld [vmem:[%s1] sm:$0x1]
    %v113 = vld [vmem:[%s2] sm:$0x1]
    %vm114 = vcmask 261120
    %v115 = vsel %vm114, %v48, 0.0
    %116 = vadd.xlane.f32.xlu0 %v115
    %v117 = vpop.xlane.xlu0 %116
    %v118 = vsel %vm114, %v49, 0.0
    %119 = vadd.xlane.f32.xlu0 %v118
    %v120 = vpop.xlane.xlu0 %119
    %v121 = vsel %vm114, %v50, 0.0
    %122 = vadd.xlane.f32.xlu0 %v121
    %v123 = vpop.xlane.xlu0 %122
    %v124 = vsel %vm114, %v51, 0.0
    %125 = vadd.xlane.f32.xlu0 %v124
    %v126 = vpop.xlane.xlu0 %125
    %v127 = vsel %vm114, %v52, 0.0
    %128 = vadd.xlane.f32.xlu0 %v127
    %v129 = vpop.xlane.xlu0 %128
    %v130 = vsel %vm114, %v53, 0.0
    %131 = vadd.xlane.f32.xlu0 %v130
    %v132 = vpop.xlane.xlu0 %131
    %v133 = vsel %vm114, %v54, 0.0
    %134 = vadd.xlane.f32.xlu0 %v133
    %v135 = vpop.xlane.xlu0 %134
    %v136 = vsel %vm114, %v55, 0.0
    %137 = vadd.xlane.f32.xlu0 %v136
    %v138 = vpop.xlane.xlu0 %137
    %v139 = vsel %vm114, %v56, 0.0
    %140 = vadd.xlane.f32.xlu0 %v139
    %v141 = vpop.xlane.xlu0 %140
    %v142 = vsel %vm114, %v57, 0.0
    %143 = vadd.xlane.f32.xlu0 %v142
    %v144 = vpop.xlane.xlu0 %143
    %v145 = vsel %vm114, %v58, 0.0
    %146 = vadd.xlane.f32.xlu0 %v145
    %v147 = vpop.xlane.xlu0 %146
    %v148 = vsel %vm114, %v59, 0.0
    %149 = vadd.xlane.f32.xlu0 %v148
    %v150 = vpop.xlane.xlu0 %149
    %v151 = vsel %vm114, %v60, 0.0
    %152 = vadd.xlane.f32.xlu0 %v151
    %v153 = vpop.xlane.xlu0 %152
    %v154 = vsel %vm114, %v61, 0.0
    %155 = vadd.xlane.f32.xlu0 %v154
    %v156 = vpop.xlane.xlu0 %155
    %v157 = vsel %vm114, %v62, 0.0
    %158 = vadd.xlane.f32.xlu0 %v157
    %v159 = vpop.xlane.xlu0 %158
    %v160 = vsel %vm114, %v63, 0.0
    %161 = vadd.xlane.f32.xlu0 %v160
    %v162 = vpop.xlane.xlu0 %161
    %v163 = vsel %vm114, %v64, 0.0
    %164 = vadd.xlane.f32.xlu0 %v163
    %v165 = vpop.xlane.xlu0 %164
    %v166 = vsel %vm114, %v65, 0.0
    %167 = vadd.xlane.f32.xlu0 %v166
    %v168 = vpop.xlane.xlu0 %167
    %v169 = vsel %vm114, %v66, 0.0
    %170 = vadd.xlane.f32.xlu0 %v169
    %v171 = vpop.xlane.xlu0 %170
    %v172 = vsel %vm114, %v67, 0.0
    %173 = vadd.xlane.f32.xlu0 %v172
    %v174 = vpop.xlane.xlu0 %173
    %v175 = vsel %vm114, %v68, 0.0
    %176 = vadd.xlane.f32.xlu0 %v175
    %v177 = vpop.xlane.xlu0 %176
    %v178 = vsel %vm114, %v69, 0.0
    %179 = vadd.xlane.f32.xlu0 %v178
    %v180 = vpop.xlane.xlu0 %179
    %v181 = vsel %vm114, %v70, 0.0
    %182 = vadd.xlane.f32.xlu0 %v181
    %v183 = vpop.xlane.xlu0 %182
    %v184 = vsel %vm114, %v71, 0.0
    %185 = vadd.xlane.f32.xlu0 %v184
    %v186 = vpop.xlane.xlu0 %185
    %v187 = vsel %vm114, %v72, 0.0
    %188 = vadd.xlane.f32.xlu0 %v187
    %v189 = vpop.xlane.xlu0 %188
    %v190 = vsel %vm114, %v73, 0.0
    %191 = vadd.xlane.f32.xlu0 %v190
    %v192 = vpop.xlane.xlu0 %191
    %v193 = vsel %vm114, %v74, 0.0
    %194 = vadd.xlane.f32.xlu0 %v193
    %v195 = vpop.xlane.xlu0 %194
    %v196 = vsel %vm114, %v75, 0.0
    %197 = vadd.xlane.f32.xlu0 %v196
    %v198 = vpop.xlane.xlu0 %197
    %v199 = vsel %vm114, %v76, 0.0
    %200 = vadd.xlane.f32.xlu0 %v199
    %v201 = vpop.xlane.xlu0 %200
    %v202 = vsel %vm114, %v77, 0.0
    %203 = vadd.xlane.f32.xlu0 %v202
    %v204 = vpop.xlane.xlu0 %203
    %v205 = vsel %vm114, %v78, 0.0
    %206 = vadd.xlane.f32.xlu0 %v205
    %v207 = vpop.xlane.xlu0 %206
    %v208 = vsel %vm114, %v79, 0.0
    %209 = vadd.xlane.f32.xlu0 %v208
    %v210 = vpop.xlane.xlu0 %209
    %v211 = vsel %vm114, %v80, 0.0
    %212 = vadd.xlane.f32.xlu0 %v211
    %v213 = vpop.xlane.xlu0 %212
    %v214 = vsel %vm114, %v81, 0.0
    %215 = vadd.xlane.f32.xlu0 %v214
    %v216 = vpop.xlane.xlu0 %215
    %v217 = vsel %vm114, %v82, 0.0
    %218 = vadd.xlane.f32.xlu0 %v217
    %v219 = vpop.xlane.xlu0 %218
    %v220 = vsel %vm114, %v83, 0.0
    %221 = vadd.xlane.f32.xlu0 %v220
    %v222 = vpop.xlane.xlu0 %221
    %v223 = vsel %vm114, %v84, 0.0
    %224 = vadd.xlane.f32.xlu0 %v223
    %v225 = vpop.xlane.xlu0 %224
    %v226 = vsel %vm114, %v85, 0.0
    %227 = vadd.xlane.f32.xlu0 %v226
    %v228 = vpop.xlane.xlu0 %227
    %v229 = vsel %vm114, %v86, 0.0
    %230 = vadd.xlane.f32.xlu0 %v229
    %v231 = vpop.xlane.xlu0 %230
    %v232 = vsel %vm114, %v87, 0.0
    %233 = vadd.xlane.f32.xlu0 %v232
    %v234 = vpop.xlane.xlu0 %233
    %v235 = vsel %vm114, %v88, 0.0
    %236 = vadd.xlane.f32.xlu0 %v235
    %v237 = vpop.xlane.xlu0 %236
    %v238 = vsel %vm114, %v89, 0.0
    %239 = vadd.xlane.f32.xlu0 %v238
    %v240 = vpop.xlane.xlu0 %239
    %v241 = vsel %vm114, %v90, 0.0
    %242 = vadd.xlane.f32.xlu0 %v241
    %v243 = vpop.xlane.xlu0 %242
    %v244 = vsel %vm114, %v91, 0.0
    %245 = vadd.xlane.f32.xlu0 %v244
    %v246 = vpop.xlane.xlu0 %245
    %v247 = vsel %vm114, %v92, 0.0
    %248 = vadd.xlane.f32.xlu0 %v247
    %v249 = vpop.xlane.xlu0 %248
    %v250 = vsel %vm114, %v93, 0.0
    %251 = vadd.xlane.f32.xlu0 %v250
    %v252 = vpop.xlane.xlu0 %251
    %v253 = vsel %vm114, %v94, 0.0
    %254 = vadd.xlane.f32.xlu0 %v253
    %v255 = vpop.xlane.xlu0 %254
    %v256 = vsel %vm114, %v95, 0.0
    %257 = vadd.xlane.f32.xlu0 %v256
    %v258 = vpop.xlane.xlu0 %257
    %v259 = vsel %vm114, %v96, 0.0
    %260 = vadd.xlane.f32.xlu0 %v259
    %v261 = vpop.xlane.xlu0 %260
    %v262 = vsel %vm114, %v97, 0.0
    %263 = vadd.xlane.f32.xlu0 %v262
    %v264 = vpop.xlane.xlu0 %263
    %v265 = vsel %vm114, %v98, 0.0
    %266 = vadd.xlane.f32.xlu0 %v265
    %v267 = vpop.xlane.xlu0 %266
    %v268 = vsel %vm114, %v99, 0.0
    %269 = vadd.xlane.f32.xlu0 %v268
    %v270 = vpop.xlane.xlu0 %269
    %v271 = vsel %vm114, %v100, 0.0
    %272 = vadd.xlane.f32.xlu0 %v271
    %v273 = vpop.xlane.xlu0 %272
    %v274 = vsel %vm114, %v101, 0.0
    %275 = vadd.xlane.f32.xlu0 %v274
    %v276 = vpop.xlane.xlu0 %275
    %v277 = vsel %vm114, %v102, 0.0
    %278 = vadd.xlane.f32.xlu0 %v277
    %v279 = vpop.xlane.xlu0 %278
    %v280 = vsel %vm114, %v103, 0.0
    %281 = vadd.xlane.f32.xlu0 %v280
    %v282 = vpop.xlane.xlu0 %281
    %v283 = vsel %vm114, %v104, 0.0
    %284 = vadd.xlane.f32.xlu0 %v283
    %v285 = vpop.xlane.xlu0 %284
    %v286 = vsel %vm114, %v105, 0.0
    %287 = vadd.xlane.f32.xlu0 %v286
    %v288 = vpop.xlane.xlu0 %287
    %v289 = vsel %vm114, %v106, 0.0
    %290 = vadd.xlane.f32.xlu0 %v289
    %v291 = vpop.xlane.xlu0 %290
    %v292 = vsel %vm114, %v107, 0.0
    %293 = vadd.xlane.f32.xlu0 %v292
    %v294 = vpop.xlane.xlu0 %293
    %v295 = vsel %vm114, %v108, 0.0
    %296 = vadd.xlane.f32.xlu0 %v295
    %v297 = vpop.xlane.xlu0 %296
    %v298 = vsel %vm114, %v109, 0.0
    %299 = vadd.xlane.f32.xlu0 %v298
    %v300 = vpop.xlane.xlu0 %299
    %v301 = vsel %vm114, %v110, 0.0
    %302 = vadd.xlane.f32.xlu0 %v301
    %v303 = vpop.xlane.xlu0 %302
    %v304 = vsel %vm114, %v111, 0.0
    %305 = vadd.xlane.f32.xlu0 %v304
    %v306 = vpop.xlane.xlu0 %305
    %v307 = vrcp.pop 32.0
    %v308 = vmul.f32 %v117, %v307
    %v309 = vmul.f32 %v120, %v307
    %v310 = vmul.f32 %v123, %v307
    %v311 = vmul.f32 %v126, %v307
    %v312 = vmul.f32 %v129, %v307
    %v313 = vmul.f32 %v132, %v307
    %v314 = vmul.f32 %v135, %v307
    %v315 = vmul.f32 %v138, %v307
    %v316 = vmul.f32 %v141, %v307
    %v317 = vmul.f32 %v144, %v307
    %v318 = vmul.f32 %v147, %v307
    %v319 = vmul.f32 %v150, %v307
    %v320 = vmul.f32 %v153, %v307
    %v321 = vmul.f32 %v156, %v307
    %v322 = vmul.f32 %v159, %v307
    %v323 = vmul.f32 %v162, %v307
    %v324 = vmul.f32 %v165, %v307
    %v325 = vmul.f32 %v168, %v307
    %v326 = vmul.f32 %v171, %v307
    %v327 = vmul.f32 %v174, %v307
    %v328 = vmul.f32 %v177, %v307
    %v329 = vmul.f32 %v180, %v307
    %v330 = vmul.f32 %v183, %v307
    %v331 = vmul.f32 %v186, %v307
    %v332 = vmul.f32 %v189, %v307
    %v333 = vmul.f32 %v192, %v307
    %v334 = vmul.f32 %v195, %v307
    %v335 = vmul.f32 %v198, %v307
    %v336 = vmul.f32 %v201, %v307
    %v337 = vmul.f32 %v204, %v307
    %v338 = vmul.f32 %v207, %v307
    %v339 = vmul.f32 %v210, %v307
    %v340 = vmul.f32 %v213, %v307
    %v341 = vmul.f32 %v216, %v307
    %v342 = vmul.f32 %v219, %v307
    %v343 = vmul.f32 %v222, %v307
    %v344 = vmul.f32 %v225, %v307
    %v345 = vmul.f32 %v228, %v307
    %v346 = vmul.f32 %v231, %v307
    %v347 = vmul.f32 %v234, %v307
    %v348 = vmul.f32 %v237, %v307
    %v349 = vmul.f32 %v240, %v307
    %v350 = vmul.f32 %v243, %v307
    %v351 = vmul.f32 %v246, %v307
    %v352 = vmul.f32 %v249, %v307
    %v353 = vmul.f32 %v252, %v307
    %v354 = vmul.f32 %v255, %v307
    %v355 = vmul.f32 %v258, %v307
    %v356 = vmul.f32 %v261, %v307
    %v357 = vmul.f32 %v264, %v307
    %v358 = vmul.f32 %v267, %v307
    %v359 = vmul.f32 %v270, %v307
    %v360 = vmul.f32 %v273, %v307
    %v361 = vmul.f32 %v276, %v307
    %v362 = vmul.f32 %v279, %v307
    %v363 = vmul.f32 %v282, %v307
    %v364 = vmul.f32 %v285, %v307
    %v365 = vmul.f32 %v288, %v307
    %v366 = vmul.f32 %v291, %v307
    %v367 = vmul.f32 %v294, %v307
    %v368 = vmul.f32 %v297, %v307
    %v369 = vmul.f32 %v300, %v307
    %v370 = vmul.f32 %v303, %v307
    %v371 = vmul.f32 %v306, %v307
    %v372 = vmul.f32 %v48, %v48
    %v373 = vmul.f32 %v49, %v49
    %v374 = vmul.f32 %v50, %v50
    %v375 = vmul.f32 %v51, %v51
    %v376 = vmul.f32 %v52, %v52
    %v377 = vmul.f32 %v53, %v53
    %v378 = vmul.f32 %v54, %v54
    %v379 = vmul.f32 %v55, %v55
    %v380 = vmul.f32 %v56, %v56
    %v381 = vmul.f32 %v57, %v57
    %v382 = vmul.f32 %v58, %v58
    %v383 = vmul.f32 %v59, %v59
    %v384 = vmul.f32 %v60, %v60
    %v385 = vmul.f32 %v61, %v61
    %v386 = vmul.f32 %v62, %v62
    %v387 = vmul.f32 %v63, %v63
    %v388 = vmul.f32 %v64, %v64
    %v389 = vmul.f32 %v65, %v65
    %v390 = vmul.f32 %v66, %v66
    %v391 = vmul.f32 %v67, %v67
    %v392 = vmul.f32 %v68, %v68
    %v393 = vmul.f32 %v69, %v69
    %v394 = vmul.f32 %v70, %v70
    %v395 = vmul.f32 %v71, %v71
    %v396 = vmul.f32 %v72, %v72
    %v397 = vmul.f32 %v73, %v73
    %v398 = vmul.f32 %v74, %v74
    %v399 = vmul.f32 %v75, %v75
    %v400 = vmul.f32 %v76, %v76
    %v401 = vmul.f32 %v77, %v77
    %v402 = vmul.f32 %v78, %v78
    %v403 = vmul.f32 %v79, %v79
    %v404 = vmul.f32 %v80, %v80
    %v405 = vmul.f32 %v81, %v81
    %v406 = vmul.f32 %v82, %v82
    %v407 = vmul.f32 %v83, %v83
    %v408 = vmul.f32 %v84, %v84
    %v409 = vmul.f32 %v85, %v85
    %v410 = vmul.f32 %v86, %v86
    %v411 = vmul.f32 %v87, %v87
    %v412 = vmul.f32 %v88, %v88
    %v413 = vmul.f32 %v89, %v89
    %v414 = vmul.f32 %v90, %v90
    %v415 = vmul.f32 %v91, %v91
    %v416 = vmul.f32 %v92, %v92
    %v417 = vmul.f32 %v93, %v93
    %v418 = vmul.f32 %v94, %v94
    %v419 = vmul.f32 %v95, %v95
    %v420 = vmul.f32 %v96, %v96
    %v421 = vmul.f32 %v97, %v97
    %v422 = vmul.f32 %v98, %v98
    %v423 = vmul.f32 %v99, %v99
    %v424 = vmul.f32 %v100, %v100
    %v425 = vmul.f32 %v101, %v101
    %v426 = vmul.f32 %v102, %v102
    %v427 = vmul.f32 %v103, %v103
    %v428 = vmul.f32 %v104, %v104
    %v429 = vmul.f32 %v105, %v105
    %v430 = vmul.f32 %v106, %v106
    %v431 = vmul.f32 %v107, %v107
    %v432 = vmul.f32 %v108, %v108
    %v433 = vmul.f32 %v109, %v109
    %v434 = vmul.f32 %v110, %v110
    %v435 = vmul.f32 %v111, %v111
    %v436 = vsel %vm114, %v372, 0.0
    %437 = vadd.xlane.f32.xlu0 %v436
    %v438 = vpop.xlane.xlu0 %437
    %v439 = vsel %vm114, %v373, 0.0
    %440 = vadd.xlane.f32.xlu0 %v439
    %v441 = vpop.xlane.xlu0 %440
    %v442 = vsel %vm114, %v374, 0.0
    %443 = vadd.xlane.f32.xlu0 %v442
    %v444 = vpop.xlane.xlu0 %443
    %v445 = vsel %vm114, %v375, 0.0
    %446 = vadd.xlane.f32.xlu0 %v445
    %v447 = vpop.xlane.xlu0 %446
    %v448 = vsel %vm114, %v376, 0.0
    %449 = vadd.xlane.f32.xlu0 %v448
    %v450 = vpop.xlane.xlu0 %449
    %v451 = vsel %vm114, %v377, 0.0
    %452 = vadd.xlane.f32.xlu0 %v451
    %v453 = vpop.xlane.xlu0 %452
    %v454 = vsel %vm114, %v378, 0.0
    %455 = vadd.xlane.f32.xlu0 %v454
    %v456 = vpop.xlane.xlu0 %455
    %v457 = vsel %vm114, %v379, 0.0
    %458 = vadd.xlane.f32.xlu0 %v457
    %v459 = vpop.xlane.xlu0 %458
    %v460 = vsel %vm114, %v380, 0.0
    %461 = vadd.xlane.f32.xlu0 %v460
    %v462 = vpop.xlane.xlu0 %461
    %v463 = vsel %vm114, %v381, 0.0
    %464 = vadd.xlane.f32.xlu0 %v463
    %v465 = vpop.xlane.xlu0 %464
    %v466 = vsel %vm114, %v382, 0.0
    %467 = vadd.xlane.f32.xlu0 %v466
    %v468 = vpop.xlane.xlu0 %467
    %v469 = vsel %vm114, %v383, 0.0
    %470 = vadd.xlane.f32.xlu0 %v469
    %v471 = vpop.xlane.xlu0 %470
    %v472 = vsel %vm114, %v384, 0.0
    %473 = vadd.xlane.f32.xlu0 %v472
    %v474 = vpop.xlane.xlu0 %473
    %v475 = vsel %vm114, %v385, 0.0
    %476 = vadd.xlane.f32.xlu0 %v475
    %v477 = vpop.xlane.xlu0 %476
    %v478 = vsel %vm114, %v386, 0.0
    %479 = vadd.xlane.f32.xlu0 %v478
    %v480 = vpop.xlane.xlu0 %479
    %v481 = vsel %vm114, %v387, 0.0
    %482 = vadd.xlane.f32.xlu0 %v481
    %v483 = vpop.xlane.xlu0 %482
    %v484 = vsel %vm114, %v388, 0.0
    %485 = vadd.xlane.f32.xlu0 %v484
    %v486 = vpop.xlane.xlu0 %485
    %v487 = vsel %vm114, %v389, 0.0
    %488 = vadd.xlane.f32.xlu0 %v487
    %v489 = vpop.xlane.xlu0 %488
    %v490 = vsel %vm114, %v390, 0.0
    %491 = vadd.xlane.f32.xlu0 %v490
    %v492 = vpop.xlane.xlu0 %491
    %v493 = vsel %vm114, %v391, 0.0
    %494 = vadd.xlane.f32.xlu0 %v493
    %v495 = vpop.xlane.xlu0 %494
    %v496 = vsel %vm114, %v392, 0.0
    %497 = vadd.xlane.f32.xlu0 %v496
    %v498 = vpop.xlane.xlu0 %497
    %v499 = vsel %vm114, %v393, 0.0
    %500 = vadd.xlane.f32.xlu0 %v499
    %v501 = vpop.xlane.xlu0 %500
    %v502 = vsel %vm114, %v394, 0.0
    %503 = vadd.xlane.f32.xlu0 %v502
    %v504 = vpop.xlane.xlu0 %503
    %v505 = vsel %vm114, %v395, 0.0
    %506 = vadd.xlane.f32.xlu0 %v505
    %v507 = vpop.xlane.xlu0 %506
    %v508 = vsel %vm114, %v396, 0.0
    %509 = vadd.xlane.f32.xlu0 %v508
    %v510 = vpop.xlane.xlu0 %509
    %v511 = vsel %vm114, %v397, 0.0
    %512 = vadd.xlane.f32.xlu0 %v511
    %v513 = vpop.xlane.xlu0 %512
    %v514 = vsel %vm114, %v398, 0.0
    %515 = vadd.xlane.f32.xlu0 %v514
    %v516 = vpop.xlane.xlu0 %515
    %v517 = vsel %vm114, %v399, 0.0
    %518 = vadd.xlane.f32.xlu0 %v517
    %v519 = vpop.xlane.xlu0 %518
    %v520 = vsel %vm114, %v400, 0.0
    %521 = vadd.xlane.f32.xlu0 %v520
    %v522 = vpop.xlane.xlu0 %521
    %v523 = vsel %vm114, %v401, 0.0
    %524 = vadd.xlane.f32.xlu0 %v523
    %v525 = vpop.xlane.xlu0 %524
    %v526 = vsel %vm114, %v402, 0.0
    %527 = vadd.xlane.f32.xlu0 %v526
    %v528 = vpop.xlane.xlu0 %527
    %v529 = vsel %vm114, %v403, 0.0
    %530 = vadd.xlane.f32.xlu0 %v529
    %v531 = vpop.xlane.xlu0 %530
    %v532 = vsel %vm114, %v404, 0.0
    %533 = vadd.xlane.f32.xlu0 %v532
    %v534 = vpop.xlane.xlu0 %533
    %v535 = vsel %vm114, %v405, 0.0
    %536 = vadd.xlane.f32.xlu0 %v535
    %v537 = vpop.xlane.xlu0 %536
    %v538 = vsel %vm114, %v406, 0.0
    %539 = vadd.xlane.f32.xlu0 %v538
    %v540 = vpop.xlane.xlu0 %539
    %v541 = vsel %vm114, %v407, 0.0
    %542 = vadd.xlane.f32.xlu0 %v541
    %v543 = vpop.xlane.xlu0 %542
    %v544 = vsel %vm114, %v408, 0.0
    %545 = vadd.xlane.f32.xlu0 %v544
    %v546 = vpop.xlane.xlu0 %545
    %v547 = vsel %vm114, %v409, 0.0
    %548 = vadd.xlane.f32.xlu0 %v547
    %v549 = vpop.xlane.xlu0 %548
    %v550 = vsel %vm114, %v410, 0.0
    %551 = vadd.xlane.f32.xlu0 %v550
    %v552 = vpop.xlane.xlu0 %551
    %v553 = vsel %vm114, %v411, 0.0
    %554 = vadd.xlane.f32.xlu0 %v553
    %v555 = vpop.xlane.xlu0 %554
    %v556 = vsel %vm114, %v412, 0.0
    %557 = vadd.xlane.f32.xlu0 %v556
    %v558 = vpop.xlane.xlu0 %557
    %v559 = vsel %vm114, %v413, 0.0
    %560 = vadd.xlane.f32.xlu0 %v559
    %v561 = vpop.xlane.xlu0 %560
    %v562 = vsel %vm114, %v414, 0.0
    %563 = vadd.xlane.f32.xlu0 %v562
    %v564 = vpop.xlane.xlu0 %563
    %v565 = vsel %vm114, %v415, 0.0
    %566 = vadd.xlane.f32.xlu0 %v565
    %v567 = vpop.xlane.xlu0 %566
    %v568 = vsel %vm114, %v416, 0.0
    %569 = vadd.xlane.f32.xlu0 %v568
    %v570 = vpop.xlane.xlu0 %569
    %v571 = vsel %vm114, %v417, 0.0
    %572 = vadd.xlane.f32.xlu0 %v571
    %v573 = vpop.xlane.xlu0 %572
    %v574 = vsel %vm114, %v418, 0.0
    %575 = vadd.xlane.f32.xlu0 %v574
    %v576 = vpop.xlane.xlu0 %575
    %v577 = vsel %vm114, %v419, 0.0
    %578 = vadd.xlane.f32.xlu0 %v577
    %v579 = vpop.xlane.xlu0 %578
    %v580 = vsel %vm114, %v420, 0.0
    %581 = vadd.xlane.f32.xlu0 %v580
    %v582 = vpop.xlane.xlu0 %581
    %v583 = vsel %vm114, %v421, 0.0
    %584 = vadd.xlane.f32.xlu0 %v583
    %v585 = vpop.xlane.xlu0 %584
    %v586 = vsel %vm114, %v422, 0.0
    %587 = vadd.xlane.f32.xlu0 %v586
    %v588 = vpop.xlane.xlu0 %587
    %v589 = vsel %vm114, %v423, 0.0
    %590 = vadd.xlane.f32.xlu0 %v589
    %v591 = vpop.xlane.xlu0 %590
    %v592 = vsel %vm114, %v424, 0.0
    %593 = vadd.xlane.f32.xlu0 %v592
    %v594 = vpop.xlane.xlu0 %593
    %v595 = vsel %vm114, %v425, 0.0
    %596 = vadd.xlane.f32.xlu0 %v595
    %v597 = vpop.xlane.xlu0 %596
    %v598 = vsel %vm114, %v426, 0.0
    %599 = vadd.xlane.f32.xlu0 %v598
    %v600 = vpop.xlane.xlu0 %599
    %v601 = vsel %vm114, %v427, 0.0
    %602 = vadd.xlane.f32.xlu0 %v601
    %v603 = vpop.xlane.xlu0 %602
    %v604 = vsel %vm114, %v428, 0.0
    %605 = vadd.xlane.f32.xlu0 %v604
    %v606 = vpop.xlane.xlu0 %605
    %v607 = vsel %vm114, %v429, 0.0
    %608 = vadd.xlane.f32.xlu0 %v607
    %v609 = vpop.xlane.xlu0 %608
    %v610 = vsel %vm114, %v430, 0.0
    %611 = vadd.xlane.f32.xlu0 %v610
    %v612 = vpop.xlane.xlu0 %611
    %v613 = vsel %vm114, %v431, 0.0
    %614 = vadd.xlane.f32.xlu0 %v613
    %v615 = vpop.xlane.xlu0 %614
    %v616 = vsel %vm114, %v432, 0.0
    %617 = vadd.xlane.f32.xlu0 %v616
    %v618 = vpop.xlane.xlu0 %617
    %v619 = vsel %vm114, %v433, 0.0
    %620 = vadd.xlane.f32.xlu0 %v619
    %v621 = vpop.xlane.xlu0 %620
    %v622 = vsel %vm114, %v434, 0.0
    %623 = vadd.xlane.f32.xlu0 %v622
    %v624 = vpop.xlane.xlu0 %623
    %v625 = vsel %vm114, %v435, 0.0
    %626 = vadd.xlane.f32.xlu0 %v625
    %v627 = vpop.xlane.xlu0 %626
    %v628 = vmul.f32 %v438, %v307
    %v629 = vmul.f32 %v441, %v307
    %v630 = vmul.f32 %v444, %v307
    %v631 = vmul.f32 %v447, %v307
    %v632 = vmul.f32 %v450, %v307
    %v633 = vmul.f32 %v453, %v307
    %v634 = vmul.f32 %v456, %v307
    %v635 = vmul.f32 %v459, %v307
    %v636 = vmul.f32 %v462, %v307
    %v637 = vmul.f32 %v465, %v307
    %v638 = vmul.f32 %v468, %v307
    %v639 = vmul.f32 %v471, %v307
    %v640 = vmul.f32 %v474, %v307
    %v641 = vmul.f32 %v477, %v307
    %v642 = vmul.f32 %v480, %v307
    %v643 = vmul.f32 %v483, %v307
    %v644 = vmul.f32 %v486, %v307
    %v645 = vmul.f32 %v489, %v307
    %v646 = vmul.f32 %v492, %v307
    %v647 = vmul.f32 %v495, %v307
    %v648 = vmul.f32 %v498, %v307
    %v649 = vmul.f32 %v501, %v307
    %v650 = vmul.f32 %v504, %v307
    %v651 = vmul.f32 %v507, %v307
    %v652 = vmul.f32 %v510, %v307
    %v653 = vmul.f32 %v513, %v307
    %v654 = vmul.f32 %v516, %v307
    %v655 = vmul.f32 %v519, %v307
    %v656 = vmul.f32 %v522, %v307
    %v657 = vmul.f32 %v525, %v307
    %v658 = vmul.f32 %v528, %v307
    %v659 = vmul.f32 %v531, %v307
    %v660 = vmul.f32 %v534, %v307
    %v661 = vmul.f32 %v537, %v307
    %v662 = vmul.f32 %v540, %v307
    %v663 = vmul.f32 %v543, %v307
    %v664 = vmul.f32 %v546, %v307
    %v665 = vmul.f32 %v549, %v307
    %v666 = vmul.f32 %v552, %v307
    %v667 = vmul.f32 %v555, %v307
    %v668 = vmul.f32 %v558, %v307
    %v669 = vmul.f32 %v561, %v307
    %v670 = vmul.f32 %v564, %v307
    %v671 = vmul.f32 %v567, %v307
    %v672 = vmul.f32 %v570, %v307
    %v673 = vmul.f32 %v573, %v307
    %v674 = vmul.f32 %v576, %v307
    %v675 = vmul.f32 %v579, %v307
    %v676 = vmul.f32 %v582, %v307
    %v677 = vmul.f32 %v585, %v307
    %v678 = vmul.f32 %v588, %v307
    %v679 = vmul.f32 %v591, %v307
    %v680 = vmul.f32 %v594, %v307
    %v681 = vmul.f32 %v597, %v307
    %v682 = vmul.f32 %v600, %v307
    %v683 = vmul.f32 %v603, %v307
    %v684 = vmul.f32 %v606, %v307
    %v685 = vmul.f32 %v609, %v307
    %v686 = vmul.f32 %v612, %v307
    %v687 = vmul.f32 %v615, %v307
    %v688 = vmul.f32 %v618, %v307
    %v689 = vmul.f32 %v621, %v307
    %v690 = vmul.f32 %v624, %v307
    %v691 = vmul.f32 %v627, %v307
    %v692 = vmul.f32 %v308, %v308
    %v693 = vmul.f32 %v309, %v309
    %v694 = vmul.f32 %v310, %v310
    %v695 = vmul.f32 %v311, %v311
    %v696 = vmul.f32 %v312, %v312
    %v697 = vmul.f32 %v313, %v313
    %v698 = vmul.f32 %v314, %v314
    %v699 = vmul.f32 %v315, %v315
    %v700 = vmul.f32 %v316, %v316
    %v701 = vmul.f32 %v317, %v317
    %v702 = vmul.f32 %v318, %v318
    %v703 = vmul.f32 %v319, %v319
    %v704 = vmul.f32 %v320, %v320
    %v705 = vmul.f32 %v321, %v321
    %v706 = vmul.f32 %v322, %v322
    %v707 = vmul.f32 %v323, %v323
    %v708 = vmul.f32 %v324, %v324
    %v709 = vmul.f32 %v325, %v325
    %v710 = vmul.f32 %v326, %v326
    %v711 = vmul.f32 %v327, %v327
    %v712 = vmul.f32 %v328, %v328
    %v713 = vmul.f32 %v329, %v329
    %v714 = vmul.f32 %v330, %v330
    %v715 = vmul.f32 %v331, %v331
    %v716 = vmul.f32 %v332, %v332
    %v717 = vmul.f32 %v333, %v333
    %v718 = vmul.f32 %v334, %v334
    %v719 = vmul.f32 %v335, %v335
    %v720 = vmul.f32 %v336, %v336
    %v721 = vmul.f32 %v337, %v337
    %v722 = vmul.f32 %v338, %v338
    %v723 = vmul.f32 %v339, %v339
    %v724 = vmul.f32 %v340, %v340
    %v725 = vmul.f32 %v341, %v341
    %v726 = vmul.f32 %v342, %v342
    %v727 = vmul.f32 %v343, %v343
    %v728 = vmul.f32 %v344, %v344
    %v729 = vmul.f32 %v345, %v345
    %v730 = vmul.f32 %v346, %v346
    %v731 = vmul.f32 %v347, %v347
    %v732 = vmul.f32 %v348, %v348
    %v733 = vmul.f32 %v349, %v349
    %v734 = vmul.f32 %v350, %v350
    %v735 = vmul.f32 %v351, %v351
    %v736 = vmul.f32 %v352, %v352
    %v737 = vmul.f32 %v353, %v353
    %v738 = vmul.f32 %v354, %v354
    %v739 = vmul.f32 %v355, %v355
    %v740 = vmul.f32 %v356, %v356
    %v741 = vmul.f32 %v357, %v357
    %v742 = vmul.f32 %v358, %v358
    %v743 = vmul.f32 %v359, %v359
    %v744 = vmul.f32 %v360, %v360
    %v745 = vmul.f32 %v361, %v361
    %v746 = vmul.f32 %v362, %v362
    %v747 = vmul.f32 %v363, %v363
    %v748 = vmul.f32 %v364, %v364
    %v749 = vmul.f32 %v365, %v365
    %v750 = vmul.f32 %v366, %v366
    %v751 = vmul.f32 %v367, %v367
    %v752 = vmul.f32 %v368, %v368
    %v753 = vmul.f32 %v369, %v369
    %v754 = vmul.f32 %v370, %v370
    %v755 = vmul.f32 %v371, %v371
    %v756 = vsub.f32 %v628, %v692
    %v757 = vsub.f32 %v629, %v693
    %v758 = vsub.f32 %v630, %v694
    %v759 = vsub.f32 %v631, %v695
    %v760 = vsub.f32 %v632, %v696
    %v761 = vsub.f32 %v633, %v697
    %v762 = vsub.f32 %v634, %v698
    %v763 = vsub.f32 %v635, %v699
    %v764 = vsub.f32 %v636, %v700
    %v765 = vsub.f32 %v637, %v701
    %v766 = vsub.f32 %v638, %v702
    %v767 = vsub.f32 %v639, %v703
    %v768 = vsub.f32 %v640, %v704
    %v769 = vsub.f32 %v641, %v705
    %v770 = vsub.f32 %v642, %v706
    %v771 = vsub.f32 %v643, %v707
    %v772 = vsub.f32 %v644, %v708
    %v773 = vsub.f32 %v645, %v709
    %v774 = vsub.f32 %v646, %v710
    %v775 = vsub.f32 %v647, %v711
    %v776 = vsub.f32 %v648, %v712
    %v777 = vsub.f32 %v649, %v713
    %v778 = vsub.f32 %v650, %v714
    %v779 = vsub.f32 %v651, %v715
    %v780 = vsub.f32 %v652, %v716
    %v781 = vsub.f32 %v653, %v717
    %v782 = vsub.f32 %v654, %v718
    %v783 = vsub.f32 %v655, %v719
    %v784 = vsub.f32 %v656, %v720
    %v785 = vsub.f32 %v657, %v721
    %v786 = vsub.f32 %v658, %v722
    %v787 = vsub.f32 %v659, %v723
    %v788 = vsub.f32 %v660, %v724
    %v789 = vsub.f32 %v661, %v725
    %v790 = vsub.f32 %v662, %v726
    %v791 = vsub.f32 %v663, %v727
    %v792 = vsub.f32 %v664, %v728
    %v793 = vsub.f32 %v665, %v729
    %v794 = vsub.f32 %v666, %v730
    %v795 = vsub.f32 %v667, %v731
    %v796 = vsub.f32 %v668, %v732
    %v797 = vsub.f32 %v669, %v733
    %v798 = vsub.f32 %v670, %v734
    %v799 = vsub.f32 %v671, %v735
    %v800 = vsub.f32 %v672, %v736
    %v801 = vsub.f32 %v673, %v737
    %v802 = vsub.f32 %v674, %v738
    %v803 = vsub.f32 %v675, %v739
    %v804 = vsub.f32 %v676, %v740
    %v805 = vsub.f32 %v677, %v741
    %v806 = vsub.f32 %v678, %v742
    %v807 = vsub.f32 %v679, %v743
    %v808 = vsub.f32 %v680, %v744
    %v809 = vsub.f32 %v681, %v745
    %v810 = vsub.f32 %v682, %v746
    %v811 = vsub.f32 %v683, %v747
    %v812 = vsub.f32 %v684, %v748
    %v813 = vsub.f32 %v685, %v749
    %v814 = vsub.f32 %v686, %v750
    %v815 = vsub.f32 %v687, %v751
    %v816 = vsub.f32 %v688, %v752
    %v817 = vsub.f32 %v689, %v753
    %v818 = vsub.f32 %v690, %v754
    %v819 = vsub.f32 %v691, %v755
    %v820 = vsub.f32 %v48, %v308
    %v821 = vsub.f32 %v49, %v309
    %v822 = vsub.f32 %v50, %v310
    %v823 = vsub.f32 %v51, %v311
    %v824 = vsub.f32 %v52, %v312
    %v825 = vsub.f32 %v53, %v313
    %v826 = vsub.f32 %v54, %v314
    %v827 = vsub.f32 %v55, %v315
    %v828 = vsub.f32 %v56, %v316
    %v829 = vsub.f32 %v57, %v317
    %v830 = vsub.f32 %v58, %v318
    %v831 = vsub.f32 %v59, %v319
    %v832 = vsub.f32 %v60, %v320
    %v833 = vsub.f32 %v61, %v321
    %v834 = vsub.f32 %v62, %v322
    %v835 = vsub.f32 %v63, %v323
    %v836 = vsub.f32 %v64, %v324
    %v837 = vsub.f32 %v65, %v325
    %v838 = vsub.f32 %v66, %v326
    %v839 = vsub.f32 %v67, %v327
    %v840 = vsub.f32 %v68, %v328
    %v841 = vsub.f32 %v69, %v329
    %v842 = vsub.f32 %v70, %v330
    %v843 = vsub.f32 %v71, %v331
    %v844 = vsub.f32 %v72, %v332
    %v845 = vsub.f32 %v73, %v333
    %v846 = vsub.f32 %v74, %v334
    %v847 = vsub.f32 %v75, %v335
    %v848 = vsub.f32 %v76, %v336
    %v849 = vsub.f32 %v77, %v337
    %v850 = vsub.f32 %v78, %v338
    %v851 = vsub.f32 %v79, %v339
    %v852 = vsub.f32 %v80, %v340
    %v853 = vsub.f32 %v81, %v341
    %v854 = vsub.f32 %v82, %v342
    %v855 = vsub.f32 %v83, %v343
    %v856 = vsub.f32 %v84, %v344
    %v857 = vsub.f32 %v85, %v345
    %v858 = vsub.f32 %v86, %v346
    %v859 = vsub.f32 %v87, %v347
    %v860 = vsub.f32 %v88, %v348
    %v861 = vsub.f32 %v89, %v349
    %v862 = vsub.f32 %v90, %v350
    %v863 = vsub.f32 %v91, %v351
    %v864 = vsub.f32 %v92, %v352
    %v865 = vsub.f32 %v93, %v353
    %v866 = vsub.f32 %v94, %v354
    %v867 = vsub.f32 %v95, %v355
    %v868 = vsub.f32 %v96, %v356
    %v869 = vsub.f32 %v97, %v357
    %v870 = vsub.f32 %v98, %v358
    %v871 = vsub.f32 %v99, %v359
    %v872 = vsub.f32 %v100, %v360
    %v873 = vsub.f32 %v101, %v361
    %v874 = vsub.f32 %v102, %v362
    %v875 = vsub.f32 %v103, %v363
    %v876 = vsub.f32 %v104, %v364
    %v877 = vsub.f32 %v105, %v365
    %v878 = vsub.f32 %v106, %v366
    %v879 = vsub.f32 %v107, %v367
    %v880 = vsub.f32 %v108, %v368
    %v881 = vsub.f32 %v109, %v369
    %v882 = vsub.f32 %v110, %v370
    %v883 = vsub.f32 %v111, %v371
    %v884 = vadd.f32 %v756, 1e-05
    %v885 = vadd.f32 %v757, 1e-05
    %v886 = vadd.f32 %v758, 1e-05
    %v887 = vadd.f32 %v759, 1e-05
    %v888 = vadd.f32 %v760, 1e-05
    %v889 = vadd.f32 %v761, 1e-05
    %v890 = vadd.f32 %v762, 1e-05
    %v891 = vadd.f32 %v763, 1e-05
    %v892 = vadd.f32 %v764, 1e-05
    %v893 = vadd.f32 %v765, 1e-05
    %v894 = vadd.f32 %v766, 1e-05
    %v895 = vadd.f32 %v767, 1e-05
    %v896 = vadd.f32 %v768, 1e-05
    %v897 = vadd.f32 %v769, 1e-05
    %v898 = vadd.f32 %v770, 1e-05
    %v899 = vadd.f32 %v771, 1e-05
    %v900 = vadd.f32 %v772, 1e-05
    %v901 = vadd.f32 %v773, 1e-05
    %v902 = vadd.f32 %v774, 1e-05
    %v903 = vadd.f32 %v775, 1e-05
    %v904 = vadd.f32 %v776, 1e-05
    %v905 = vadd.f32 %v777, 1e-05
    %v906 = vadd.f32 %v778, 1e-05
    %v907 = vadd.f32 %v779, 1e-05
    %v908 = vadd.f32 %v780, 1e-05
    %v909 = vadd.f32 %v781, 1e-05
    %v910 = vadd.f32 %v782, 1e-05
    %v911 = vadd.f32 %v783, 1e-05
    %v912 = vadd.f32 %v784, 1e-05
    %v913 = vadd.f32 %v785, 1e-05
    %v914 = vadd.f32 %v786, 1e-05
    %v915 = vadd.f32 %v787, 1e-05
    %v916 = vadd.f32 %v788, 1e-05
    %v917 = vadd.f32 %v789, 1e-05
    %v918 = vadd.f32 %v790, 1e-05
    %v919 = vadd.f32 %v791, 1e-05
    %v920 = vadd.f32 %v792, 1e-05
    %v921 = vadd.f32 %v793, 1e-05
    %v922 = vadd.f32 %v794, 1e-05
    %v923 = vadd.f32 %v795, 1e-05
    %v924 = vadd.f32 %v796, 1e-05
    %v925 = vadd.f32 %v797, 1e-05
    %v926 = vadd.f32 %v798, 1e-05
    %v927 = vadd.f32 %v799, 1e-05
    %v928 = vadd.f32 %v800, 1e-05
    %v929 = vadd.f32 %v801, 1e-05
    %v930 = vadd.f32 %v802, 1e-05
    %v931 = vadd.f32 %v803, 1e-05
    %v932 = vadd.f32 %v804, 1e-05
    %v933 = vadd.f32 %v805, 1e-05
    %v934 = vadd.f32 %v806, 1e-05
    %v935 = vadd.f32 %v807, 1e-05
    %v936 = vadd.f32 %v808, 1e-05
    %v937 = vadd.f32 %v809, 1e-05
    %v938 = vadd.f32 %v810, 1e-05
    %v939 = vadd.f32 %v811, 1e-05
    %v940 = vadd.f32 %v812, 1e-05
    %v941 = vadd.f32 %v813, 1e-05
    %v942 = vadd.f32 %v814, 1e-05
    %v943 = vadd.f32 %v815, 1e-05
    %v944 = vadd.f32 %v816, 1e-05
    %v945 = vadd.f32 %v817, 1e-05
    %v946 = vadd.f32 %v818, 1e-05
    %v947 = vadd.f32 %v819, 1e-05
    %v948 = vrsqrt.pop %v884
    %v949 = vrsqrt.pop %v885
    %v950 = vrsqrt.pop %v886
    %v951 = vrsqrt.pop %v887
    %v952 = vrsqrt.pop %v888
    %v953 = vrsqrt.pop %v889
    %v954 = vrsqrt.pop %v890
    %v955 = vrsqrt.pop %v891
    %v956 = vrsqrt.pop %v892
    %v957 = vrsqrt.pop %v893
    %v958 = vrsqrt.pop %v894
    %v959 = vrsqrt.pop %v895
    %v960 = vrsqrt.pop %v896
    %v961 = vrsqrt.pop %v897
    %v962 = vrsqrt.pop %v898
    %v963 = vrsqrt.pop %v899
    %v964 = vrsqrt.pop %v900
    %v965 = vrsqrt.pop %v901
    %v966 = vrsqrt.pop %v902
    %v967 = vrsqrt.pop %v903
    %v968 = vrsqrt.pop %v904
    %v969 = vrsqrt.pop %v905
    %v970 = vrsqrt.pop %v906
    %v971 = vrsqrt.pop %v907
    %v972 = vrsqrt.pop %v908
    %v973 = vrsqrt.pop %v909
    %v974 = vrsqrt.pop %v910
    %v975 = vrsqrt.pop %v911
    %v976 = vrsqrt.pop %v912
    %v977 = vrsqrt.pop %v913
    %v978 = vrsqrt.pop %v914
    %v979 = vrsqrt.pop %v915
    %v980 = vrsqrt.pop %v916
    %v981 = vrsqrt.pop %v917
    %v982 = vrsqrt.pop %v918
    %v983 = vrsqrt.pop %v919
    %v984 = vrsqrt.pop %v920
    %v985 = vrsqrt.pop %v921
    %v986 = vrsqrt.pop %v922
    %v987 = vrsqrt.pop %v923
    %v988 = vrsqrt.pop %v924
    %v989 = vrsqrt.pop %v925
    %v990 = vrsqrt.pop %v926
    %v991 = vrsqrt.pop %v927
    %v992 = vrsqrt.pop %v928
    %v993 = vrsqrt.pop %v929
    %v994 = vrsqrt.pop %v930
    %v995 = vrsqrt.pop %v931
    %v996 = vrsqrt.pop %v932
    %v997 = vrsqrt.pop %v933
    %v998 = vrsqrt.pop %v934
    %v999 = vrsqrt.pop %v935
    %v1000 = vrsqrt.pop %v936
    %v1001 = vrsqrt.pop %v937
    %v1002 = vrsqrt.pop %v938
    %v1003 = vrsqrt.pop %v939
    %v1004 = vrsqrt.pop %v940
    %v1005 = vrsqrt.pop %v941
    %v1006 = vrsqrt.pop %v942
    %v1007 = vrsqrt.pop %v943
    %v1008 = vrsqrt.pop %v944
    %v1009 = vrsqrt.pop %v945
    %v1010 = vrsqrt.pop %v946
    %v1011 = vrsqrt.pop %v947
    %v1012 = vmul.f32 %v820, %v948
    %v1013 = vmul.f32 %v821, %v949
    %v1014 = vmul.f32 %v822, %v950
    %v1015 = vmul.f32 %v823, %v951
    %v1016 = vmul.f32 %v824, %v952
    %v1017 = vmul.f32 %v825, %v953
    %v1018 = vmul.f32 %v826, %v954
    %v1019 = vmul.f32 %v827, %v955
    %v1020 = vmul.f32 %v828, %v956
    %v1021 = vmul.f32 %v829, %v957
    %v1022 = vmul.f32 %v830, %v958
    %v1023 = vmul.f32 %v831, %v959
    %v1024 = vmul.f32 %v832, %v960
    %v1025 = vmul.f32 %v833, %v961
    %v1026 = vmul.f32 %v834, %v962
    %v1027 = vmul.f32 %v835, %v963
    %v1028 = vmul.f32 %v836, %v964
    %v1029 = vmul.f32 %v837, %v965
    %v1030 = vmul.f32 %v838, %v966
    %v1031 = vmul.f32 %v839, %v967
    %v1032 = vmul.f32 %v840, %v968
    %v1033 = vmul.f32 %v841, %v969
    %v1034 = vmul.f32 %v842, %v970
    %v1035 = vmul.f32 %v843, %v971
    %v1036 = vmul.f32 %v844, %v972
    %v1037 = vmul.f32 %v845, %v973
    %v1038 = vmul.f32 %v846, %v974
    %v1039 = vmul.f32 %v847, %v975
    %v1040 = vmul.f32 %v848, %v976
    %v1041 = vmul.f32 %v849, %v977
    %v1042 = vmul.f32 %v850, %v978
    %v1043 = vmul.f32 %v851, %v979
    %v1044 = vmul.f32 %v852, %v980
    %v1045 = vmul.f32 %v853, %v981
    %v1046 = vmul.f32 %v854, %v982
    %v1047 = vmul.f32 %v855, %v983
    %v1048 = vmul.f32 %v856, %v984
    %v1049 = vmul.f32 %v857, %v985
    %v1050 = vmul.f32 %v858, %v986
    %v1051 = vmul.f32 %v859, %v987
    %v1052 = vmul.f32 %v860, %v988
    %v1053 = vmul.f32 %v861, %v989
    %v1054 = vmul.f32 %v862, %v990
    %v1055 = vmul.f32 %v863, %v991
    %v1056 = vmul.f32 %v864, %v992
    %v1057 = vmul.f32 %v865, %v993
    %v1058 = vmul.f32 %v866, %v994
    %v1059 = vmul.f32 %v867, %v995
    %v1060 = vmul.f32 %v868, %v996
    %v1061 = vmul.f32 %v869, %v997
    %v1062 = vmul.f32 %v870, %v998
    %v1063 = vmul.f32 %v871, %v999
    %v1064 = vmul.f32 %v872, %v1000
    %v1065 = vmul.f32 %v873, %v1001
    %v1066 = vmul.f32 %v874, %v1002
    %v1067 = vmul.f32 %v875, %v1003
    %v1068 = vmul.f32 %v876, %v1004
    %v1069 = vmul.f32 %v877, %v1005
    %v1070 = vmul.f32 %v878, %v1006
    %v1071 = vmul.f32 %v879, %v1007
    %v1072 = vmul.f32 %v880, %v1008
    %v1073 = vmul.f32 %v881, %v1009
    %v1074 = vmul.f32 %v882, %v1010
    %v1075 = vmul.f32 %v883, %v1011
    %v1077 = vlaneseq
    %v1078 = vshrl.u32 %v1077, 7
    %v1079 = vsub.s32 0, %v1078
    %v1080 = vrot.slane %v112, %v1079
    %v1082 = vmul.f32 %v1012, %v1080
    %v1083 = vmul.f32 %v1013, %v1080
    %v1084 = vmul.f32 %v1014, %v1080
    %v1085 = vmul.f32 %v1015, %v1080
    %v1086 = vmul.f32 %v1016, %v1080
    %v1087 = vmul.f32 %v1017, %v1080
    %v1088 = vmul.f32 %v1018, %v1080
    %v1089 = vmul.f32 %v1019, %v1080
    %v1090 = vmul.f32 %v1020, %v1080
    %v1091 = vmul.f32 %v1021, %v1080
    %v1092 = vmul.f32 %v1022, %v1080
    %v1093 = vmul.f32 %v1023, %v1080
    %v1094 = vmul.f32 %v1024, %v1080
    %v1095 = vmul.f32 %v1025, %v1080
    %v1096 = vmul.f32 %v1026, %v1080
    %v1097 = vmul.f32 %v1027, %v1080
    %v1098 = vmul.f32 %v1028, %v1080
    %v1099 = vmul.f32 %v1029, %v1080
    %v1100 = vmul.f32 %v1030, %v1080
    %v1101 = vmul.f32 %v1031, %v1080
    %v1102 = vmul.f32 %v1032, %v1080
    %v1103 = vmul.f32 %v1033, %v1080
    %v1104 = vmul.f32 %v1034, %v1080
    %v1105 = vmul.f32 %v1035, %v1080
    %v1106 = vmul.f32 %v1036, %v1080
    %v1107 = vmul.f32 %v1037, %v1080
    %v1108 = vmul.f32 %v1038, %v1080
    %v1109 = vmul.f32 %v1039, %v1080
    %v1110 = vmul.f32 %v1040, %v1080
    %v1111 = vmul.f32 %v1041, %v1080
    %v1112 = vmul.f32 %v1042, %v1080
    %v1113 = vmul.f32 %v1043, %v1080
    %v1114 = vmul.f32 %v1044, %v1080
    %v1115 = vmul.f32 %v1045, %v1080
    %v1116 = vmul.f32 %v1046, %v1080
    %v1117 = vmul.f32 %v1047, %v1080
    %v1118 = vmul.f32 %v1048, %v1080
    %v1119 = vmul.f32 %v1049, %v1080
    %v1120 = vmul.f32 %v1050, %v1080
    %v1121 = vmul.f32 %v1051, %v1080
    %v1122 = vmul.f32 %v1052, %v1080
    %v1123 = vmul.f32 %v1053, %v1080
    %v1124 = vmul.f32 %v1054, %v1080
    %v1125 = vmul.f32 %v1055, %v1080
    %v1126 = vmul.f32 %v1056, %v1080
    %v1127 = vmul.f32 %v1057, %v1080
    %v1128 = vmul.f32 %v1058, %v1080
    %v1129 = vmul.f32 %v1059, %v1080
    %v1130 = vmul.f32 %v1060, %v1080
    %v1131 = vmul.f32 %v1061, %v1080
    %v1132 = vmul.f32 %v1062, %v1080
    %v1133 = vmul.f32 %v1063, %v1080
    %v1134 = vmul.f32 %v1064, %v1080
    %v1135 = vmul.f32 %v1065, %v1080
    %v1136 = vmul.f32 %v1066, %v1080
    %v1137 = vmul.f32 %v1067, %v1080
    %v1138 = vmul.f32 %v1068, %v1080
    %v1139 = vmul.f32 %v1069, %v1080
    %v1140 = vmul.f32 %v1070, %v1080
    %v1141 = vmul.f32 %v1071, %v1080
    %v1142 = vmul.f32 %v1072, %v1080
    %v1143 = vmul.f32 %v1073, %v1080
    %v1144 = vmul.f32 %v1074, %v1080
    %v1145 = vmul.f32 %v1075, %v1080
    %v1147 = vlaneseq
    %v1148 = vshrl.u32 %v1147, 7
    %v1149 = vsub.s32 0, %v1148
    %v1150 = vrot.slane %v113, %v1149
    %v1152 = vadd.f32 %v1082, %v1150
    %v1153 = vadd.f32 %v1083, %v1150
    %v1154 = vadd.f32 %v1084, %v1150
    %v1155 = vadd.f32 %v1085, %v1150
    %v1156 = vadd.f32 %v1086, %v1150
    %v1157 = vadd.f32 %v1087, %v1150
    %v1158 = vadd.f32 %v1088, %v1150
    %v1159 = vadd.f32 %v1089, %v1150
    %v1160 = vadd.f32 %v1090, %v1150
    %v1161 = vadd.f32 %v1091, %v1150
    %v1162 = vadd.f32 %v1092, %v1150
    %v1163 = vadd.f32 %v1093, %v1150
    %v1164 = vadd.f32 %v1094, %v1150
    %v1165 = vadd.f32 %v1095, %v1150
    %v1166 = vadd.f32 %v1096, %v1150
    %v1167 = vadd.f32 %v1097, %v1150
    %v1168 = vadd.f32 %v1098, %v1150
    %v1169 = vadd.f32 %v1099, %v1150
    %v1170 = vadd.f32 %v1100, %v1150
    %v1171 = vadd.f32 %v1101, %v1150
    %v1172 = vadd.f32 %v1102, %v1150
    %v1173 = vadd.f32 %v1103, %v1150
    %v1174 = vadd.f32 %v1104, %v1150
    %v1175 = vadd.f32 %v1105, %v1150
    %v1176 = vadd.f32 %v1106, %v1150
    %v1177 = vadd.f32 %v1107, %v1150
    %v1178 = vadd.f32 %v1108, %v1150
    %v1179 = vadd.f32 %v1109, %v1150
    %v1180 = vadd.f32 %v1110, %v1150
    %v1181 = vadd.f32 %v1111, %v1150
    %v1182 = vadd.f32 %v1112, %v1150
    %v1183 = vadd.f32 %v1113, %v1150
    %v1184 = vadd.f32 %v1114, %v1150
    %v1185 = vadd.f32 %v1115, %v1150
    %v1186 = vadd.f32 %v1116, %v1150
    %v1187 = vadd.f32 %v1117, %v1150
    %v1188 = vadd.f32 %v1118, %v1150
    %v1189 = vadd.f32 %v1119, %v1150
    %v1190 = vadd.f32 %v1120, %v1150
    %v1191 = vadd.f32 %v1121, %v1150
    %v1192 = vadd.f32 %v1122, %v1150
    %v1193 = vadd.f32 %v1123, %v1150
    %v1194 = vadd.f32 %v1124, %v1150
    %v1195 = vadd.f32 %v1125, %v1150
    %v1196 = vadd.f32 %v1126, %v1150
    %v1197 = vadd.f32 %v1127, %v1150
    %v1198 = vadd.f32 %v1128, %v1150
    %v1199 = vadd.f32 %v1129, %v1150
    %v1200 = vadd.f32 %v1130, %v1150
    %v1201 = vadd.f32 %v1131, %v1150
    %v1202 = vadd.f32 %v1132, %v1150
    %v1203 = vadd.f32 %v1133, %v1150
    %v1204 = vadd.f32 %v1134, %v1150
    %v1205 = vadd.f32 %v1135, %v1150
    %v1206 = vadd.f32 %v1136, %v1150
    %v1207 = vadd.f32 %v1137, %v1150
    %v1208 = vadd.f32 %v1138, %v1150
    %v1209 = vadd.f32 %v1139, %v1150
    %v1210 = vadd.f32 %v1140, %v1150
    %v1211 = vadd.f32 %v1141, %v1150
    %v1212 = vadd.f32 %v1142, %v1150
    %v1213 = vadd.f32 %v1143, %v1150
    %v1214 = vadd.f32 %v1144, %v1150
    %v1215 = vadd.f32 %v1145, %v1150
    %v1216 = vpack.c.bf16 %v1153, %v1152
    %v1217 = vpack.c.bf16 %v1155, %v1154
    %v1218 = vpack.c.bf16 %v1157, %v1156
    %v1219 = vpack.c.bf16 %v1159, %v1158
    %v1220 = vpack.c.bf16 %v1161, %v1160
    %v1221 = vpack.c.bf16 %v1163, %v1162
    %v1222 = vpack.c.bf16 %v1165, %v1164
    %v1223 = vpack.c.bf16 %v1167, %v1166
    %v1224 = vpack.c.bf16 %v1169, %v1168
    %v1225 = vpack.c.bf16 %v1171, %v1170
    %v1226 = vpack.c.bf16 %v1173, %v1172
    %v1227 = vpack.c.bf16 %v1175, %v1174
    %v1228 = vpack.c.bf16 %v1177, %v1176
    %v1229 = vpack.c.bf16 %v1179, %v1178
    %v1230 = vpack.c.bf16 %v1181, %v1180
    %v1231 = vpack.c.bf16 %v1183, %v1182
    %v1232 = vpack.c.bf16 %v1185, %v1184
    %v1233 = vpack.c.bf16 %v1187, %v1186
    %v1234 = vpack.c.bf16 %v1189, %v1188
    %v1235 = vpack.c.bf16 %v1191, %v1190
    %v1236 = vpack.c.bf16 %v1193, %v1192
    %v1237 = vpack.c.bf16 %v1195, %v1194
    %v1238 = vpack.c.bf16 %v1197, %v1196
    %v1239 = vpack.c.bf16 %v1199, %v1198
    %v1240 = vpack.c.bf16 %v1201, %v1200
    %v1241 = vpack.c.bf16 %v1203, %v1202
    %v1242 = vpack.c.bf16 %v1205, %v1204
    %v1243 = vpack.c.bf16 %v1207, %v1206
    %v1244 = vpack.c.bf16 %v1209, %v1208
    %v1245 = vpack.c.bf16 %v1211, %v1210
    %v1246 = vpack.c.bf16 %v1213, %v1212
    %v1247 = vpack.c.bf16 %v1215, %v1214
    %v1248 = vld [vmem:[%s3] sm:$0xf]
    %v1249 = vld [vmem:[%s3 + $0x4] sm:$0xf]
    %v1250 = vld [vmem:[%s3 + $0x8] sm:$0xf]
    %v1251 = vld [vmem:[%s3 + $0xc] sm:$0xf]
    %v1256 = vunpack.c.l.b16 %v1248
    %v1257 = vunpack.c.l.b16 %v1249
    %v1258 = vunpack.c.l.b16 %v1250
    %v1259 = vunpack.c.l.b16 %v1251
    %v1260 = vpack.c.b16 %v1257, %v1256
    %v1261 = vpack.c.b16 %v1259, %v1258
    %v1263 = vsel %vm114, %v1260, 0
    %v1266 = vsel %vm114, %v1261, 0
    %1268 = vmatprep.subr.bf16.mxu0 0
    %1269 = vmatpush1.bf16.msra.mxu0 %v1216
    %1270 = vmatprep.subr.bf16.mxu0 0
    %1271 = vmatpush1.bf16.msra.mxu0 %v1217
    %1272 = vmatprep.subr.bf16.mxu0 0
    %1273 = vmatpush1.bf16.msra.mxu0 0
    %1274 = vmatprep.subr.bf16.mxu0 0
    %1275 = vmatpush1.bf16.msra.mxu0 0
    %1276 = vmatprep.subr.bf16.mxu0 0
    %1277 = vmatpush1.bf16.msra.mxu0 0
    %1278 = vmatprep.subr.bf16.mxu0 0
    %1279 = vmatpush1.bf16.msra.mxu0 0
    %1280 = vmatprep.subr.bf16.mxu0 0
    %1281 = vmatpush1.bf16.msra.mxu0 0
    %1282 = vmatprep.subr.bf16.mxu0 0
    %1283 = vmatpush1.bf16.msra.mxu0 0
    %1284 = vmatprep.subr.bf16.mxu0 0
    %1285 = vmatpush1.bf16.msra.mxu0 0
    %1286 = vmatprep.subr.bf16.mxu0 0
    %1287 = vmatpush1.bf16.msra.mxu0 0
    %1288 = vmatprep.subr.bf16.mxu0 0
    %1289 = vmatpush1.bf16.msra.mxu0 0
    %1290 = vmatprep.subr.bf16.mxu0 0
    %1291 = vmatpush1.bf16.msra.mxu0 0
    %1292 = vmatprep.subr.bf16.mxu0 0
    %1293 = vmatpush1.bf16.msra.mxu0 0
    %1294 = vmatprep.subr.bf16.mxu0 0
    %1295 = vmatpush1.bf16.msra.mxu0 0
    %1296 = vmatprep.subr.bf16.mxu0 0
    %1297 = vmatpush1.bf16.msra.mxu0 0
    %1298 = vmatprep.subr.bf16.mxu0 0
    %1299 = vmatpush1.bf16.msra.mxu0 0
    %1300 = vmatprep.mubr.bf16.mxu0 0
    %1301 = vmatmul.mubr.bf16.gmra.mrb[0].mxu0 %v1263
    %v1302 = vpop.f32.mrb[0].mxu0
    %v1303 = vadd.f32 0.0, %v1302
    %v1304 = vpop.f32.mrb[0].mxu0
    %v1305 = vpop.f32.mrb[0].mxu0
    %v1306 = vadd.f32 0.0, %v1305
    %v1307 = vpop.f32.mrb[0].mxu0
    %1308 = vmatprep.mubr.bf16.mxu0 0
    %1309 = vmatmul.mubr.bf16.gmra.mrb[0].mxu0 %v1266
    %v1310 = vpop.f32.mrb[0].mxu0
    %v1311 = vadd.f32 0.0, %v1310
    %v1312 = vpop.f32.mrb[0].mxu0
    %v1313 = vpop.f32.mrb[0].mxu0
    %v1314 = vadd.f32 0.0, %v1313
    %v1315 = vpop.f32.mrb[0].mxu0
    %1316 = vdwg.mxu0
    %1317 = vmatprep.subr.bf16.mxu0 0
    %1318 = vmatpush1.bf16.msra.mxu0 %v1218
    %1319 = vmatprep.subr.bf16.mxu0 0
    %1320 = vmatpush1.bf16.msra.mxu0 %v1219
    %1321 = vmatprep.subr.bf16.mxu0 0
    %1322 = vmatpush1.bf16.msra.mxu0 0
    %1323 = vmatprep.subr.bf16.mxu0 0
    %1324 = vmatpush1.bf16.msra.mxu0 0
    %1325 = vmatprep.subr.bf16.mxu0 0
    %1326 = vmatpush1.bf16.msra.mxu0 0
    %1327 = vmatprep.subr.bf16.mxu0 0
    %1328 = vmatpush1.bf16.msra.mxu0 0
    %1329 = vmatprep.subr.bf16.mxu0 0
    %1330 = vmatpush1.bf16.msra.mxu0 0
    %1331 = vmatprep.subr.bf16.mxu0 0
    %1332 = vmatpush1.bf16.msra.mxu0 0
    %1333 = vmatprep.subr.bf16.mxu0 0
    %1334 = vmatpush1.bf16.msra.mxu0 0
    %1335 = vmatprep.subr.bf16.mxu0 0
    %1336 = vmatpush1.bf16.msra.mxu0 0
    %1337 = vmatprep.subr.bf16.mxu0 0
    %1338 = vmatpush1.bf16.msra.mxu0 0
    %1339 = vmatprep.subr.bf16.mxu0 0
    %1340 = vmatpush1.bf16.msra.mxu0 0
    %1341 = vmatprep.subr.bf16.mxu0 0
    %1342 = vmatpush1.bf16.msra.mxu0 0
    %1343 = vmatprep.subr.bf16.mxu0 0
    %1344 = vmatpush1.bf16.msra.mxu0 0
    %1345 = vmatprep.subr.bf16.mxu0 0
    %1346 = vmatpush1.bf16.msra.mxu0 0
    %1347 = vmatprep.subr.bf16.mxu0 0
    %1348 = vmatpush1.bf16.msra.mxu0 0
    %1349 = vmatprep.mubr.bf16.mxu0 0
    %1350 = vmatmul.mubr.bf16.gmra.mrb[0].mxu0 %v1263
    %v1351 = vpop.f32.mrb[0].mxu0
    %v1352 = vadd.f32 0.0, %v1351
    %v1353 = vpop.f32.mrb[0].mxu0
    %v1354 = vpop.f32.mrb[0].mxu0
    %v1355 = vadd.f32 0.0, %v1354
    %v1356 = vpop.f32.mrb[0].mxu0
    %1357 = vmatprep.mubr.bf16.mxu0 0
    %1358 = vmatmul.mubr.bf16.gmra.mrb[0].mxu0 %v1266
    %v1359 = vpop.f32.mrb[0].mxu0
    %v1360 = vadd.f32 0.0, %v1359
    %v1361 = vpop.f32.mrb[0].mxu0
    %v1362 = vpop.f32.mrb[0].mxu0
    %v1363 = vadd.f32 0.0, %v1362
    %v1364 = vpop.f32.mrb[0].mxu0
    %1365 = vdwg.mxu0
    %1366 = vmatprep.subr.bf16.mxu0 0
    %1367 = vmatpush1.bf16.msra.mxu0 %v1220
    %1368 = vmatprep.subr.bf16.mxu0 0
    %1369 = vmatpush1.bf16.msra.mxu0 %v1221
    %1370 = vmatprep.subr.bf16.mxu0 0
    %1371 = vmatpush1.bf16.msra.mxu0 0
    %1372 = vmatprep.subr.bf16.mxu0 0
    %1373 = vmatpush1.bf16.msra.mxu0 0
    %1374 = vmatprep.subr.bf16.mxu0 0
    %1375 = vmatpush1.bf16.msra.mxu0 0
    %1376 = vmatprep.subr.bf16.mxu0 0
    %1377 = vmatpush1.bf16.msra.mxu0 0
    %1378 = vmatprep.subr.bf16.mxu0 0
    %1379 = vmatpush1.bf16.msra.mxu0 0
    %1380 = vmatprep.subr.bf16.mxu0 0
    %1381 = vmatpush1.bf16.msra.mxu0 0
    %1382 = vmatprep.subr.bf16.mxu0 0
    %1383 = vmatpush1.bf16.msra.mxu0 0
    %1384 = vmatprep.subr.bf16.mxu0 0
    %1385 = vmatpush1.bf16.msra.mxu0 0
    %1386 = vmatprep.subr.bf16.mxu0 0
    %1387 = vmatpush1.bf16.msra.mxu0 0
    %1388 = vmatprep.subr.bf16.mxu0 0
    %1389 = vmatpush1.bf16.msra.mxu0 0
    %1390 = vmatprep.subr.bf16.mxu0 0
    %1391 = vmatpush1.bf16.msra.mxu0 0
    %1392 = vmatprep.subr.bf16.mxu0 0
    %1393 = vmatpush1.bf16.msra.mxu0 0
    %1394 = vmatprep.subr.bf16.mxu0 0
    %1395 = vmatpush1.bf16.msra.mxu0 0
    %1396 = vmatprep.subr.bf16.mxu0 0
    %1397 = vmatpush1.bf16.msra.mxu0 0
    %1398 = vmatprep.mubr.bf16.mxu0 0
    %1399 = vmatmul.mubr.bf16.gmra.mrb[0].mxu0 %v1263
    %v1400 = vpop.f32.mrb[0].mxu0
    %v1401 = vadd.f32 0.0, %v1400
    %v1402 = vpop.f32.mrb[0].mxu0
    %v1403 = vpop.f32.mrb[0].mxu0
    %v1404 = vadd.f32 0.0, %v1403
    %v1405 = vpop.f32.mrb[0].mxu0
    %1406 = vmatprep.mubr.bf16.mxu0 0
    %1407 = vmatmul.mubr.bf16.gmra.mrb[0].mxu0 %v1266
    %v1408 = vpop.f32.mrb[0].mxu0
    %v1409 = vadd.f32 0.0, %v1408
    %v1410 = vpop.f32.mrb[0].mxu0
    %v1411 = vpop.f32.mrb[0].mxu0
    %v1412 = vadd.f32 0.0, %v1411
    %v1413 = vpop.f32.mrb[0].mxu0
    %1414 = vdwg.mxu0
    %1415 = vmatprep.subr.bf16.mxu0 0
    %1416 = vmatpush1.bf16.msra.mxu0 %v1222
    %1417 = vmatprep.subr.bf16.mxu0 0
    %1418 = vmatpush1.bf16.msra.mxu0 %v1223
    %1419 = vmatprep.subr.bf16.mxu0 0
    %1420 = vmatpush1.bf16.msra.mxu0 0
    %1421 = vmatprep.subr.bf16.mxu0 0
    %1422 = vmatpush1.bf16.msra.mxu0 0
    %1423 = vmatprep.subr.bf16.mxu0 0
    %1424 = vmatpush1.bf16.msra.mxu0 0
    %1425 = vmatprep.subr.bf16.mxu0 0
    %1426 = vmatpush1.bf16.msra.mxu0 0
    %1427 = vmatprep.subr.bf16.mxu0 0
    %1428 = vmatpush1.bf16.msra.mxu0 0
    %1429 = vmatprep.subr.bf16.mxu0 0
    %1430 = vmatpush1.bf16.msra.mxu0 0
    %1431 = vmatprep.subr.bf16.mxu0 0
    %1432 = vmatpush1.bf16.msra.mxu0 0
    %1433 = vmatprep.subr.bf16.mxu0 0
    %1434 = vmatpush1.bf16.msra.mxu0 0
    %1435 = vmatprep.subr.bf16.mxu0 0
    %1436 = vmatpush1.bf16.msra.mxu0 0
    %1437 = vmatprep.subr.bf16.mxu0 0
    %1438 = vmatpush1.bf16.msra.mxu0 0
    %1439 = vmatprep.subr.bf16.mxu0 0
    %1440 = vmatpush1.bf16.msra.mxu0 0
    %1441 = vmatprep.subr.bf16.mxu0 0
    %1442 = vmatpush1.bf16.msra.mxu0 0
    %1443 = vmatprep.subr.bf16.mxu0 0
    %1444 = vmatpush1.bf16.msra.mxu0 0
    %1445 = vmatprep.subr.bf16.mxu0 0
    %1446 = vmatpush1.bf16.msra.mxu0 0
    %1447 = vmatprep.mubr.bf16.mxu0 0
    %1448 = vmatmul.mubr.bf16.gmra.mrb[0].mxu0 %v1263
    %v1449 = vpop.f32.mrb[0].mxu0
    %v1450 = vadd.f32 0.0, %v1449
    %v1451 = vpop.f32.mrb[0].mxu0
    %v1452 = vpop.f32.mrb[0].mxu0
    %v1453 = vadd.f32 0.0, %v1452
    %v1454 = vpop.f32.mrb[0].mxu0
    %1455 = vmatprep.mubr.bf16.mxu0 0
    %1456 = vmatmul.mubr.bf16.gmra.mrb[0].mxu0 %v1266
    %v1457 = vpop.f32.mrb[0].mxu0
    %v1458 = vadd.f32 0.0, %v1457
    %v1459 = vpop.f32.mrb[0].mxu0
    %v1460 = vpop.f32.mrb[0].mxu0
    %v1461 = vadd.f32 0.0, %v1460
    %v1462 = vpop.f32.mrb[0].mxu0
    %1463 = vdwg.mxu0
    %1464 = vmatprep.subr.bf16.mxu0 0
    %1465 = vmatpush1.bf16.msra.mxu0 %v1224
    %1466 = vmatprep.subr.bf16.mxu0 0
    %1467 = vmatpush1.bf16.msra.mxu0 %v1225
    %1468 = vmatprep.subr.bf16.mxu0 0
    %1469 = vmatpush1.bf16.msra.mxu0 0
    %1470 = vmatprep.subr.bf16.mxu0 0
    %1471 = vmatpush1.bf16.msra.mxu0 0
    %1472 = vmatprep.subr.bf16.mxu0 0
    %1473 = vmatpush1.bf16.msra.mxu0 0
    %1474 = vmatprep.subr.bf16.mxu0 0
    %1475 = vmatpush1.bf16.msra.mxu0 0
    %1476 = vmatprep.subr.bf16.mxu0 0
    %1477 = vmatpush1.bf16.msra.mxu0 0
    %1478 = vmatprep.subr.bf16.mxu0 0
    %1479 = vmatpush1.bf16.msra.mxu0 0
    %1480 = vmatprep.subr.bf16.mxu0 0
    %1481 = vmatpush1.bf16.msra.mxu0 0
    %1482 = vmatprep.subr.bf16.mxu0 0
    %1483 = vmatpush1.bf16.msra.mxu0 0
    %1484 = vmatprep.subr.bf16.mxu0 0
    %1485 = vmatpush1.bf16.msra.mxu0 0
    %1486 = vmatprep.subr.bf16.mxu0 0
    %1487 = vmatpush1.bf16.msra.mxu0 0
    %1488 = vmatprep.subr.bf16.mxu0 0
    %1489 = vmatpush1.bf16.msra.mxu0 0
    %1490 = vmatprep.subr.bf16.mxu0 0
    %1491 = vmatpush1.bf16.msra.mxu0 0
    %1492 = vmatprep.subr.bf16.mxu0 0
    %1493 = vmatpush1.bf16.msra.mxu0 0
    %1494 = vmatprep.subr.bf16.mxu0 0
    %1495 = vmatpush1.bf16.msra.mxu0 0
    %1496 = vmatprep.mubr.bf16.mxu0 0
    %1497 = vmatmul.mubr.bf16.gmra.mrb[0].mxu0 %v1263
    %v1498 = vpop.f32.mrb[0].mxu0
    %v1499 = vadd.f32 0.0, %v1498
    %v1500 = vpop.f32.mrb[0].mxu0
    %v1501 = vpop.f32.mrb[0].mxu0
    %v1502 = vadd.f32 0.0, %v1501
    %v1503 = vpop.f32.mrb[0].mxu0
    %1504 = vmatprep.mubr.bf16.mxu0 0
    %1505 = vmatmul.mubr.bf16.gmra.mrb[0].mxu0 %v1266
    %v1506 = vpop.f32.mrb[0].mxu0
    %v1507 = vadd.f32 0.0, %v1506
    %v1508 = vpop.f32.mrb[0].mxu0
    %v1509 = vpop.f32.mrb[0].mxu0
    %v1510 = vadd.f32 0.0, %v1509
    %v1511 = vpop.f32.mrb[0].mxu0
    %1512 = vdwg.mxu0
    %1513 = vmatprep.subr.bf16.mxu0 0
    %1514 = vmatpush1.bf16.msra.mxu0 %v1226
    %1515 = vmatprep.subr.bf16.mxu0 0
    %1516 = vmatpush1.bf16.msra.mxu0 %v1227
    %1517 = vmatprep.subr.bf16.mxu0 0
    %1518 = vmatpush1.bf16.msra.mxu0 0
    %1519 = vmatprep.subr.bf16.mxu0 0
    %1520 = vmatpush1.bf16.msra.mxu0 0
    %1521 = vmatprep.subr.bf16.mxu0 0
    %1522 = vmatpush1.bf16.msra.mxu0 0
    %1523 = vmatprep.subr.bf16.mxu0 0
    %1524 = vmatpush1.bf16.msra.mxu0 0
    %1525 = vmatprep.subr.bf16.mxu0 0
    %1526 = vmatpush1.bf16.msra.mxu0 0
    %1527 = vmatprep.subr.bf16.mxu0 0
    %1528 = vmatpush1.bf16.msra.mxu0 0
    %1529 = vmatprep.subr.bf16.mxu0 0
    %1530 = vmatpush1.bf16.msra.mxu0 0
    %1531 = vmatprep.subr.bf16.mxu0 0
    %1532 = vmatpush1.bf16.msra.mxu0 0
    %1533 = vmatprep.subr.bf16.mxu0 0
    %1534 = vmatpush1.bf16.msra.mxu0 0
    %1535 = vmatprep.subr.bf16.mxu0 0
    %1536 = vmatpush1.bf16.msra.mxu0 0
    %1537 = vmatprep.subr.bf16.mxu0 0
    %1538 = vmatpush1.bf16.msra.mxu0 0
    %1539 = vmatprep.subr.bf16.mxu0 0
    %1540 = vmatpush1.bf16.msra.mxu0 0
    %1541 = vmatprep.subr.bf16.mxu0 0
    %1542 = vmatpush1.bf16.msra.mxu0 0
    %1543 = vmatprep.subr.bf16.mxu0 0
    %1544 = vmatpush1.bf16.msra.mxu0 0
    %1545 = vmatprep.mubr.bf16.mxu0 0
    %1546 = vmatmul.mubr.bf16.gmra.mrb[0].mxu0 %v1263
    %v1547 = vpop.f32.mrb[0].mxu0
    %v1548 = vadd.f32 0.0, %v1547
    %v1549 = vpop.f32.mrb[0].mxu0
    %v1550 = vpop.f32.mrb[0].mxu0
    %v1551 = vadd.f32 0.0, %v1550
    %v1552 = vpop.f32.mrb[0].mxu0
    %1553 = vmatprep.mubr.bf16.mxu0 0
    %1554 = vmatmul.mubr.bf16.gmra.mrb[0].mxu0 %v1266
    %v1555 = vpop.f32.mrb[0].mxu0
    %v1556 = vadd.f32 0.0, %v1555
    %v1557 = vpop.f32.mrb[0].mxu0
    %v1558 = vpop.f32.mrb[0].mxu0
    %v1559 = vadd.f32 0.0, %v1558
    %v1560 = vpop.f32.mrb[0].mxu0
    %1561 = vdwg.mxu0
    %1562 = vmatprep.subr.bf16.mxu0 0
    %1563 = vmatpush1.bf16.msra.mxu0 %v1228
    %1564 = vmatprep.subr.bf16.mxu0 0
    %1565 = vmatpush1.bf16.msra.mxu0 %v1229
    %1566 = vmatprep.subr.bf16.mxu0 0
    %1567 = vmatpush1.bf16.msra.mxu0 0
    %1568 = vmatprep.subr.bf16.mxu0 0
    %1569 = vmatpush1.bf16.msra.mxu0 0
    %1570 = vmatprep.subr.bf16.mxu0 0
    %1571 = vmatpush1.bf16.msra.mxu0 0
    %1572 = vmatprep.subr.bf16.mxu0 0
    %1573 = vmatpush1.bf16.msra.mxu0 0
    %1574 = vmatprep.subr.bf16.mxu0 0
    %1575 = vmatpush1.bf16.msra.mxu0 0
    %1576 = vmatprep.subr.bf16.mxu0 0
    %1577 = vmatpush1.bf16.msra.mxu0 0
    %1578 = vmatprep.subr.bf16.mxu0 0
    %1579 = vmatpush1.bf16.msra.mxu0 0
    %1580 = vmatprep.subr.bf16.mxu0 0
    %1581 = vmatpush1.bf16.msra.mxu0 0
    %1582 = vmatprep.subr.bf16.mxu0 0
    %1583 = vmatpush1.bf16.msra.mxu0 0
    %1584 = vmatprep.subr.bf16.mxu0 0
    %1585 = vmatpush1.bf16.msra.mxu0 0
    %1586 = vmatprep.subr.bf16.mxu0 0
    %1587 = vmatpush1.bf16.msra.mxu0 0
    %1588 = vmatprep.subr.bf16.mxu0 0
    %1589 = vmatpush1.bf16.msra.mxu0 0
    %1590 = vmatprep.subr.bf16.mxu0 0
    %1591 = vmatpush1.bf16.msra.mxu0 0
    %1592 = vmatprep.subr.bf16.mxu0 0
    %1593 = vmatpush1.bf16.msra.mxu0 0
    %1594 = vmatprep.mubr.bf16.mxu0 0
    %1595 = vmatmul.mubr.bf16.gmra.mrb[0].mxu0 %v1263
    %v1596 = vpop.f32.mrb[0].mxu0
    %v1597 = vadd.f32 0.0, %v1596
    %v1598 = vpop.f32.mrb[0].mxu0
    %v1599 = vpop.f32.mrb[0].mxu0
    %v1600 = vadd.f32 0.0, %v1599
    %v1601 = vpop.f32.mrb[0].mxu0
    %1602 = vmatprep.mubr.bf16.mxu0 0
    %1603 = vmatmul.mubr.bf16.gmra.mrb[0].mxu0 %v1266
    %v1604 = vpop.f32.mrb[0].mxu0
    %v1605 = vadd.f32 0.0, %v1604
    %v1606 = vpop.f32.mrb[0].mxu0
    %v1607 = vpop.f32.mrb[0].mxu0
    %v1608 = vadd.f32 0.0, %v1607
    %v1609 = vpop.f32.mrb[0].mxu0
    %1610 = vdwg.mxu0
    %1611 = vmatprep.subr.bf16.mxu0 0
    %1612 = vmatpush1.bf16.msra.mxu0 %v1230
    %1613 = vmatprep.subr.bf16.mxu0 0
    %1614 = vmatpush1.bf16.msra.mxu0 %v1231
    %1615 = vmatprep.subr.bf16.mxu0 0
    %1616 = vmatpush1.bf16.msra.mxu0 0
    %1617 = vmatprep.subr.bf16.mxu0 0
    %1618 = vmatpush1.bf16.msra.mxu0 0
    %1619 = vmatprep.subr.bf16.mxu0 0
    %1620 = vmatpush1.bf16.msra.mxu0 0
    %1621 = vmatprep.subr.bf16.mxu0 0
    %1622 = vmatpush1.bf16.msra.mxu0 0
    %1623 = vmatprep.subr.bf16.mxu0 0
    %1624 = vmatpush1.bf16.msra.mxu0 0
    %1625 = vmatprep.subr.bf16.mxu0 0
    %1626 = vmatpush1.bf16.msra.mxu0 0
    %1627 = vmatprep.subr.bf16.mxu0 0
    %1628 = vmatpush1.bf16.msra.mxu0 0
    %1629 = vmatprep.subr.bf16.mxu0 0
    %1630 = vmatpush1.bf16.msra.mxu0 0
    %1631 = vmatprep.subr.bf16.mxu0 0
    %1632 = vmatpush1.bf16.msra.mxu0 0
    %1633 = vmatprep.subr.bf16.mxu0 0
    %1634 = vmatpush1.bf16.msra.mxu0 0
    %1635 = vmatprep.subr.bf16.mxu0 0
    %1636 = vmatpush1.bf16.msra.mxu0 0
    %1637 = vmatprep.subr.bf16.mxu0 0
    %1638 = vmatpush1.bf16.msra.mxu0 0
    %1639 = vmatprep.subr.bf16.mxu0 0
    %1640 = vmatpush1.bf16.msra.mxu0 0
    %1641 = vmatprep.subr.bf16.mxu0 0
    %1642 = vmatpush1.bf16.msra.mxu0 0
    %1643 = vmatprep.mubr.bf16.mxu0 0
    %1644 = vmatmul.mubr.bf16.gmra.mrb[0].mxu0 %v1263
    %v1645 = vpop.f32.mrb[0].mxu0
    %v1646 = vadd.f32 0.0, %v1645
    %v1647 = vpop.f32.mrb[0].mxu0
    %v1648 = vpop.f32.mrb[0].mxu0
    %v1649 = vadd.f32 0.0, %v1648
    %v1650 = vpop.f32.mrb[0].mxu0
    %1651 = vmatprep.mubr.bf16.mxu0 0
    %1652 = vmatmul.mubr.bf16.gmra.mrb[0].mxu0 %v1266
    %v1653 = vpop.f32.mrb[0].mxu0
    %v1654 = vadd.f32 0.0, %v1653
    %v1655 = vpop.f32.mrb[0].mxu0
    %v1656 = vpop.f32.mrb[0].mxu0
    %v1657 = vadd.f32 0.0, %v1656
    %v1658 = vpop.f32.mrb[0].mxu0
    %1659 = vdwg.mxu0
    %1660 = vmatprep.subr.bf16.mxu0 0
    %1661 = vmatpush1.bf16.msra.mxu0 %v1232
    %1662 = vmatprep.subr.bf16.mxu0 0
    %1663 = vmatpush1.bf16.msra.mxu0 %v1233
    %1664 = vmatprep.subr.bf16.mxu0 0
    %1665 = vmatpush1.bf16.msra.mxu0 0
    %1666 = vmatprep.subr.bf16.mxu0 0
    %1667 = vmatpush1.bf16.msra.mxu0 0
    %1668 = vmatprep.subr.bf16.mxu0 0
    %1669 = vmatpush1.bf16.msra.mxu0 0
    %1670 = vmatprep.subr.bf16.mxu0 0
    %1671 = vmatpush1.bf16.msra.mxu0 0
    %1672 = vmatprep.subr.bf16.mxu0 0
    %1673 = vmatpush1.bf16.msra.mxu0 0
    %1674 = vmatprep.subr.bf16.mxu0 0
    %1675 = vmatpush1.bf16.msra.mxu0 0
    %1676 = vmatprep.subr.bf16.mxu0 0
    %1677 = vmatpush1.bf16.msra.mxu0 0
    %1678 = vmatprep.subr.bf16.mxu0 0
    %1679 = vmatpush1.bf16.msra.mxu0 0
    %1680 = vmatprep.subr.bf16.mxu0 0
    %1681 = vmatpush1.bf16.msra.mxu0 0
    %1682 = vmatprep.subr.bf16.mxu0 0
    %1683 = vmatpush1.bf16.msra.mxu0 0
    %1684 = vmatprep.subr.bf16.mxu0 0
    %1685 = vmatpush1.bf16.msra.mxu0 0
    %1686 = vmatprep.subr.bf16.mxu0 0
    %1687 = vmatpush1.bf16.msra.mxu0 0
    %1688 = vmatprep.subr.bf16.mxu0 0
    %1689 = vmatpush1.bf16.msra.mxu0 0
    %1690 = vmatprep.subr.bf16.mxu0 0
    %1691 = vmatpush1.bf16.msra.mxu0 0
    %1692 = vmatprep.mubr.bf16.mxu0 0
    %1693 = vmatmul.mubr.bf16.gmra.mrb[0].mxu0 %v1263
    %v1694 = vpop.f32.mrb[0].mxu0
    %v1695 = vadd.f32 0.0, %v1694
    %v1696 = vpop.f32.mrb[0].mxu0
    %v1697 = vpop.f32.mrb[0].mxu0
    %v1698 = vadd.f32 0.0, %v1697
    %v1699 = vpop.f32.mrb[0].mxu0
    %1700 = vmatprep.mubr.bf16.mxu0 0
    %1701 = vmatmul.mubr.bf16.gmra.mrb[0].mxu0 %v1266
    %v1702 = vpop.f32.mrb[0].mxu0
    %v1703 = vadd.f32 0.0, %v1702
    %v1704 = vpop.f32.mrb[0].mxu0
    %v1705 = vpop.f32.mrb[0].mxu0
    %v1706 = vadd.f32 0.0, %v1705
    %v1707 = vpop.f32.mrb[0].mxu0
    %1708 = vdwg.mxu0
    %1709 = vmatprep.subr.bf16.mxu0 0
    %1710 = vmatpush1.bf16.msra.mxu0 %v1234
    %1711 = vmatprep.subr.bf16.mxu0 0
    %1712 = vmatpush1.bf16.msra.mxu0 %v1235
    %1713 = vmatprep.subr.bf16.mxu0 0
    %1714 = vmatpush1.bf16.msra.mxu0 0
    %1715 = vmatprep.subr.bf16.mxu0 0
    %1716 = vmatpush1.bf16.msra.mxu0 0
    %1717 = vmatprep.subr.bf16.mxu0 0
    %1718 = vmatpush1.bf16.msra.mxu0 0
    %1719 = vmatprep.subr.bf16.mxu0 0
    %1720 = vmatpush1.bf16.msra.mxu0 0
    %1721 = vmatprep.subr.bf16.mxu0 0
    %1722 = vmatpush1.bf16.msra.mxu0 0
    %1723 = vmatprep.subr.bf16.mxu0 0
    %1724 = vmatpush1.bf16.msra.mxu0 0
    %1725 = vmatprep.subr.bf16.mxu0 0
    %1726 = vmatpush1.bf16.msra.mxu0 0
    %1727 = vmatprep.subr.bf16.mxu0 0
    %1728 = vmatpush1.bf16.msra.mxu0 0
    %1729 = vmatprep.subr.bf16.mxu0 0
    %1730 = vmatpush1.bf16.msra.mxu0 0
    %1731 = vmatprep.subr.bf16.mxu0 0
    %1732 = vmatpush1.bf16.msra.mxu0 0
    %1733 = vmatprep.subr.bf16.mxu0 0
    %1734 = vmatpush1.bf16.msra.mxu0 0
    %1735 = vmatprep.subr.bf16.mxu0 0
    %1736 = vmatpush1.bf16.msra.mxu0 0
    %1737 = vmatprep.subr.bf16.mxu0 0
    %1738 = vmatpush1.bf16.msra.mxu0 0
    %1739 = vmatprep.subr.bf16.mxu0 0
    %1740 = vmatpush1.bf16.msra.mxu0 0
    %1741 = vmatprep.mubr.bf16.mxu0 0
    %1742 = vmatmul.mubr.bf16.gmra.mrb[0].mxu0 %v1263
    %v1743 = vpop.f32.mrb[0].mxu0
    %v1744 = vadd.f32 0.0, %v1743
    %v1745 = vpop.f32.mrb[0].mxu0
    %v1746 = vpop.f32.mrb[0].mxu0
    %v1747 = vadd.f32 0.0, %v1746
    %v1748 = vpop.f32.mrb[0].mxu0
    %1749 = vmatprep.mubr.bf16.mxu0 0
    %1750 = vmatmul.mubr.bf16.gmra.mrb[0].mxu0 %v1266
    %v1751 = vpop.f32.mrb[0].mxu0
    %v1752 = vadd.f32 0.0, %v1751
    %v1753 = vpop.f32.mrb[0].mxu0
    %v1754 = vpop.f32.mrb[0].mxu0
    %v1755 = vadd.f32 0.0, %v1754
    %v1756 = vpop.f32.mrb[0].mxu0
    %1757 = vdwg.mxu0
    %1758 = vmatprep.subr.bf16.mxu0 0
    %1759 = vmatpush1.bf16.msra.mxu0 %v1236
    %1760 = vmatprep.subr.bf16.mxu0 0
    %1761 = vmatpush1.bf16.msra.mxu0 %v1237
    %1762 = vmatprep.subr.bf16.mxu0 0
    %1763 = vmatpush1.bf16.msra.mxu0 0
    %1764 = vmatprep.subr.bf16.mxu0 0
    %1765 = vmatpush1.bf16.msra.mxu0 0
    %1766 = vmatprep.subr.bf16.mxu0 0
    %1767 = vmatpush1.bf16.msra.mxu0 0
    %1768 = vmatprep.subr.bf16.mxu0 0
    %1769 = vmatpush1.bf16.msra.mxu0 0
    %1770 = vmatprep.subr.bf16.mxu0 0
    %1771 = vmatpush1.bf16.msra.mxu0 0
    %1772 = vmatprep.subr.bf16.mxu0 0
    %1773 = vmatpush1.bf16.msra.mxu0 0
    %1774 = vmatprep.subr.bf16.mxu0 0
    %1775 = vmatpush1.bf16.msra.mxu0 0
    %1776 = vmatprep.subr.bf16.mxu0 0
    %1777 = vmatpush1.bf16.msra.mxu0 0
    %1778 = vmatprep.subr.bf16.mxu0 0
    %1779 = vmatpush1.bf16.msra.mxu0 0
    %1780 = vmatprep.subr.bf16.mxu0 0
    %1781 = vmatpush1.bf16.msra.mxu0 0
    %1782 = vmatprep.subr.bf16.mxu0 0
    %1783 = vmatpush1.bf16.msra.mxu0 0
    %1784 = vmatprep.subr.bf16.mxu0 0
    %1785 = vmatpush1.bf16.msra.mxu0 0
    %1786 = vmatprep.subr.bf16.mxu0 0
    %1787 = vmatpush1.bf16.msra.mxu0 0
    %1788 = vmatprep.subr.bf16.mxu0 0
    %1789 = vmatpush1.bf16.msra.mxu0 0
    %1790 = vmatprep.mubr.bf16.mxu0 0
    %1791 = vmatmul.mubr.bf16.gmra.mrb[0].mxu0 %v1263
    %v1792 = vpop.f32.mrb[0].mxu0
    %v1793 = vadd.f32 0.0, %v1792
    %v1794 = vpop.f32.mrb[0].mxu0
    %v1795 = vpop.f32.mrb[0].mxu0
    %v1796 = vadd.f32 0.0, %v1795
    %v1797 = vpop.f32.mrb[0].mxu0
    %1798 = vmatprep.mubr.bf16.mxu0 0
    %1799 = vmatmul.mubr.bf16.gmra.mrb[0].mxu0 %v1266
    %v1800 = vpop.f32.mrb[0].mxu0
    %v1801 = vadd.f32 0.0, %v1800
    %v1802 = vpop.f32.mrb[0].mxu0
    %v1803 = vpop.f32.mrb[0].mxu0
    %v1804 = vadd.f32 0.0, %v1803
    %v1805 = vpop.f32.mrb[0].mxu0
    %1806 = vdwg.mxu0
    %1807 = vmatprep.subr.bf16.mxu0 0
    %1808 = vmatpush1.bf16.msra.mxu0 %v1238
    %1809 = vmatprep.subr.bf16.mxu0 0
    %1810 = vmatpush1.bf16.msra.mxu0 %v1239
    %1811 = vmatprep.subr.bf16.mxu0 0
    %1812 = vmatpush1.bf16.msra.mxu0 0
    %1813 = vmatprep.subr.bf16.mxu0 0
    %1814 = vmatpush1.bf16.msra.mxu0 0
    %1815 = vmatprep.subr.bf16.mxu0 0
    %1816 = vmatpush1.bf16.msra.mxu0 0
    %1817 = vmatprep.subr.bf16.mxu0 0
    %1818 = vmatpush1.bf16.msra.mxu0 0
    %1819 = vmatprep.subr.bf16.mxu0 0
    %1820 = vmatpush1.bf16.msra.mxu0 0
    %1821 = vmatprep.subr.bf16.mxu0 0
    %1822 = vmatpush1.bf16.msra.mxu0 0
    %1823 = vmatprep.subr.bf16.mxu0 0
    %1824 = vmatpush1.bf16.msra.mxu0 0
    %1825 = vmatprep.subr.bf16.mxu0 0
    %1826 = vmatpush1.bf16.msra.mxu0 0
    %1827 = vmatprep.subr.bf16.mxu0 0
    %1828 = vmatpush1.bf16.msra.mxu0 0
    %1829 = vmatprep.subr.bf16.mxu0 0
    %1830 = vmatpush1.bf16.msra.mxu0 0
    %1831 = vmatprep.subr.bf16.mxu0 0
    %1832 = vmatpush1.bf16.msra.mxu0 0
    %1833 = vmatprep.subr.bf16.mxu0 0
    %1834 = vmatpush1.bf16.msra.mxu0 0
    %1835 = vmatprep.subr.bf16.mxu0 0
    %1836 = vmatpush1.bf16.msra.mxu0 0
    %1837 = vmatprep.subr.bf16.mxu0 0
    %1838 = vmatpush1.bf16.msra.mxu0 0
    %1839 = vmatprep.mubr.bf16.mxu0 0
    %1840 = vmatmul.mubr.bf16.gmra.mrb[0].mxu0 %v1263
    %v1841 = vpop.f32.mrb[0].mxu0
    %v1842 = vadd.f32 0.0, %v1841
    %v1843 = vpop.f32.mrb[0].mxu0
    %v1844 = vpop.f32.mrb[0].mxu0
    %v1845 = vadd.f32 0.0, %v1844
    %v1846 = vpop.f32.mrb[0].mxu0
    %1847 = vmatprep.mubr.bf16.mxu0 0
    %1848 = vmatmul.mubr.bf16.gmra.mrb[0].mxu0 %v1266
    %v1849 = vpop.f32.mrb[0].mxu0
    %v1850 = vadd.f32 0.0, %v1849
    %v1851 = vpop.f32.mrb[0].mxu0
    %v1852 = vpop.f32.mrb[0].mxu0
    %v1853 = vadd.f32 0.0, %v1852
    %v1854 = vpop.f32.mrb[0].mxu0
    %1855 = vdwg.mxu0
    %1856 = vmatprep.subr.bf16.mxu0 0
    %1857 = vmatpush1.bf16.msra.mxu0 %v1240
    %1858 = vmatprep.subr.bf16.mxu0 0
    %1859 = vmatpush1.bf16.msra.mxu0 %v1241
    %1860 = vmatprep.subr.bf16.mxu0 0
    %1861 = vmatpush1.bf16.msra.mxu0 0
    %1862 = vmatprep.subr.bf16.mxu0 0
    %1863 = vmatpush1.bf16.msra.mxu0 0
    %1864 = vmatprep.subr.bf16.mxu0 0
    %1865 = vmatpush1.bf16.msra.mxu0 0
    %1866 = vmatprep.subr.bf16.mxu0 0
    %1867 = vmatpush1.bf16.msra.mxu0 0
    %1868 = vmatprep.subr.bf16.mxu0 0
    %1869 = vmatpush1.bf16.msra.mxu0 0
    %1870 = vmatprep.subr.bf16.mxu0 0
    %1871 = vmatpush1.bf16.msra.mxu0 0
    %1872 = vmatprep.subr.bf16.mxu0 0
    %1873 = vmatpush1.bf16.msra.mxu0 0
    %1874 = vmatprep.subr.bf16.mxu0 0
    %1875 = vmatpush1.bf16.msra.mxu0 0
    %1876 = vmatprep.subr.bf16.mxu0 0
    %1877 = vmatpush1.bf16.msra.mxu0 0
    %1878 = vmatprep.subr.bf16.mxu0 0
    %1879 = vmatpush1.bf16.msra.mxu0 0
    %1880 = vmatprep.subr.bf16.mxu0 0
    %1881 = vmatpush1.bf16.msra.mxu0 0
    %1882 = vmatprep.subr.bf16.mxu0 0
    %1883 = vmatpush1.bf16.msra.mxu0 0
    %1884 = vmatprep.subr.bf16.mxu0 0
    %1885 = vmatpush1.bf16.msra.mxu0 0
    %1886 = vmatprep.subr.bf16.mxu0 0
    %1887 = vmatpush1.bf16.msra.mxu0 0
    %1888 = vmatprep.mubr.bf16.mxu0 0
    %1889 = vmatmul.mubr.bf16.gmra.mrb[0].mxu0 %v1263
    %v1890 = vpop.f32.mrb[0].mxu0
    %v1891 = vadd.f32 0.0, %v1890
    %v1892 = vpop.f32.mrb[0].mxu0
    %v1893 = vpop.f32.mrb[0].mxu0
    %v1894 = vadd.f32 0.0, %v1893
    %v1895 = vpop.f32.mrb[0].mxu0
    %1896 = vmatprep.mubr.bf16.mxu0 0
    %1897 = vmatmul.mubr.bf16.gmra.mrb[0].mxu0 %v1266
    %v1898 = vpop.f32.mrb[0].mxu0
    %v1899 = vadd.f32 0.0, %v1898
    %v1900 = vpop.f32.mrb[0].mxu0
    %v1901 = vpop.f32.mrb[0].mxu0
    %v1902 = vadd.f32 0.0, %v1901
    %v1903 = vpop.f32.mrb[0].mxu0
    %1904 = vdwg.mxu0
    %1905 = vmatprep.subr.bf16.mxu0 0
    %1906 = vmatpush1.bf16.msra.mxu0 %v1242
    %1907 = vmatprep.subr.bf16.mxu0 0
    %1908 = vmatpush1.bf16.msra.mxu0 %v1243
    %1909 = vmatprep.subr.bf16.mxu0 0
    %1910 = vmatpush1.bf16.msra.mxu0 0
    %1911 = vmatprep.subr.bf16.mxu0 0
    %1912 = vmatpush1.bf16.msra.mxu0 0
    %1913 = vmatprep.subr.bf16.mxu0 0
    %1914 = vmatpush1.bf16.msra.mxu0 0
    %1915 = vmatprep.subr.bf16.mxu0 0
    %1916 = vmatpush1.bf16.msra.mxu0 0
    %1917 = vmatprep.subr.bf16.mxu0 0
    %1918 = vmatpush1.bf16.msra.mxu0 0
    %1919 = vmatprep.subr.bf16.mxu0 0
    %1920 = vmatpush1.bf16.msra.mxu0 0
    %1921 = vmatprep.subr.bf16.mxu0 0
    %1922 = vmatpush1.bf16.msra.mxu0 0
    %1923 = vmatprep.subr.bf16.mxu0 0
    %1924 = vmatpush1.bf16.msra.mxu0 0
    %1925 = vmatprep.subr.bf16.mxu0 0
    %1926 = vmatpush1.bf16.msra.mxu0 0
    %1927 = vmatprep.subr.bf16.mxu0 0
    %1928 = vmatpush1.bf16.msra.mxu0 0
    %1929 = vmatprep.subr.bf16.mxu0 0
    %1930 = vmatpush1.bf16.msra.mxu0 0
    %1931 = vmatprep.subr.bf16.mxu0 0
    %1932 = vmatpush1.bf16.msra.mxu0 0
    %1933 = vmatprep.subr.bf16.mxu0 0
    %1934 = vmatpush1.bf16.msra.mxu0 0
    %1935 = vmatprep.subr.bf16.mxu0 0
    %1936 = vmatpush1.bf16.msra.mxu0 0
    %1937 = vmatprep.mubr.bf16.mxu0 0
    %1938 = vmatmul.mubr.bf16.gmra.mrb[0].mxu0 %v1263
    %v1939 = vpop.f32.mrb[0].mxu0
    %v1940 = vadd.f32 0.0, %v1939
    %v1941 = vpop.f32.mrb[0].mxu0
    %v1942 = vpop.f32.mrb[0].mxu0
    %v1943 = vadd.f32 0.0, %v1942
    %v1944 = vpop.f32.mrb[0].mxu0
    %1945 = vmatprep.mubr.bf16.mxu0 0
    %1946 = vmatmul.mubr.bf16.gmra.mrb[0].mxu0 %v1266
    %v1947 = vpop.f32.mrb[0].mxu0
    %v1948 = vadd.f32 0.0, %v1947
    %v1949 = vpop.f32.mrb[0].mxu0
    %v1950 = vpop.f32.mrb[0].mxu0
    %v1951 = vadd.f32 0.0, %v1950
    %v1952 = vpop.f32.mrb[0].mxu0
    %1953 = vdwg.mxu0
    %1954 = vmatprep.subr.bf16.mxu0 0
    %1955 = vmatpush1.bf16.msra.mxu0 %v1244
    %1956 = vmatprep.subr.bf16.mxu0 0
    %1957 = vmatpush1.bf16.msra.mxu0 %v1245
    %1958 = vmatprep.subr.bf16.mxu0 0
    %1959 = vmatpush1.bf16.msra.mxu0 0
    %1960 = vmatprep.subr.bf16.mxu0 0
    %1961 = vmatpush1.bf16.msra.mxu0 0
    %1962 = vmatprep.subr.bf16.mxu0 0
    %1963 = vmatpush1.bf16.msra.mxu0 0
    %1964 = vmatprep.subr.bf16.mxu0 0
    %1965 = vmatpush1.bf16.msra.mxu0 0
    %1966 = vmatprep.subr.bf16.mxu0 0
    %1967 = vmatpush1.bf16.msra.mxu0 0
    %1968 = vmatprep.subr.bf16.mxu0 0
    %1969 = vmatpush1.bf16.msra.mxu0 0
    %1970 = vmatprep.subr.bf16.mxu0 0
    %1971 = vmatpush1.bf16.msra.mxu0 0
    %1972 = vmatprep.subr.bf16.mxu0 0
    %1973 = vmatpush1.bf16.msra.mxu0 0
    %1974 = vmatprep.subr.bf16.mxu0 0
    %1975 = vmatpush1.bf16.msra.mxu0 0
    %1976 = vmatprep.subr.bf16.mxu0 0
    %1977 = vmatpush1.bf16.msra.mxu0 0
    %1978 = vmatprep.subr.bf16.mxu0 0
    %1979 = vmatpush1.bf16.msra.mxu0 0
    %1980 = vmatprep.subr.bf16.mxu0 0
    %1981 = vmatpush1.bf16.msra.mxu0 0
    %1982 = vmatprep.subr.bf16.mxu0 0
    %1983 = vmatpush1.bf16.msra.mxu0 0
    %1984 = vmatprep.subr.bf16.mxu0 0
    %1985 = vmatpush1.bf16.msra.mxu0 0
    %1986 = vmatprep.mubr.bf16.mxu0 0
    %1987 = vmatmul.mubr.bf16.gmra.mrb[0].mxu0 %v1263
    %v1988 = vpop.f32.mrb[0].mxu0
    %v1989 = vadd.f32 0.0, %v1988
    %v1990 = vpop.f32.mrb[0].mxu0
    %v1991 = vpop.f32.mrb[0].mxu0
    %v1992 = vadd.f32 0.0, %v1991
    %v1993 = vpop.f32.mrb[0].mxu0
    %1994 = vmatprep.mubr.bf16.mxu0 0
    %1995 = vmatmul.mubr.bf16.gmra.mrb[0].mxu0 %v1266
    %v1996 = vpop.f32.mrb[0].mxu0
    %v1997 = vadd.f32 0.0, %v1996
    %v1998 = vpop.f32.mrb[0].mxu0
    %v1999 = vpop.f32.mrb[0].mxu0
    %v2000 = vadd.f32 0.0, %v1999
    %v2001 = vpop.f32.mrb[0].mxu0
    %2002 = vdwg.mxu0
    %2003 = vmatprep.subr.bf16.mxu0 0
    %2004 = vmatpush1.bf16.msra.mxu0 %v1246
    %2005 = vmatprep.subr.bf16.mxu0 0
    %2006 = vmatpush1.bf16.msra.mxu0 %v1247
    %2007 = vmatprep.subr.bf16.mxu0 0
    %2008 = vmatpush1.bf16.msra.mxu0 0
    %2009 = vmatprep.subr.bf16.mxu0 0
    %2010 = vmatpush1.bf16.msra.mxu0 0
    %2011 = vmatprep.subr.bf16.mxu0 0
    %2012 = vmatpush1.bf16.msra.mxu0 0
    %2013 = vmatprep.subr.bf16.mxu0 0
    %2014 = vmatpush1.bf16.msra.mxu0 0
    %2015 = vmatprep.subr.bf16.mxu0 0
    %2016 = vmatpush1.bf16.msra.mxu0 0
    %2017 = vmatprep.subr.bf16.mxu0 0
    %2018 = vmatpush1.bf16.msra.mxu0 0
    %2019 = vmatprep.subr.bf16.mxu0 0
    %2020 = vmatpush1.bf16.msra.mxu0 0
    %2021 = vmatprep.subr.bf16.mxu0 0
    %2022 = vmatpush1.bf16.msra.mxu0 0
    %2023 = vmatprep.subr.bf16.mxu0 0
    %2024 = vmatpush1.bf16.msra.mxu0 0
    %2025 = vmatprep.subr.bf16.mxu0 0
    %2026 = vmatpush1.bf16.msra.mxu0 0
    %2027 = vmatprep.subr.bf16.mxu0 0
    %2028 = vmatpush1.bf16.msra.mxu0 0
    %2029 = vmatprep.subr.bf16.mxu0 0
    %2030 = vmatpush1.bf16.msra.mxu0 0
    %2031 = vmatprep.subr.bf16.mxu0 0
    %2032 = vmatpush1.bf16.msra.mxu0 0
    %2033 = vmatprep.subr.bf16.mxu0 0
    %2034 = vmatpush1.bf16.msra.mxu0 0
    %2035 = vmatprep.mubr.bf16.mxu0 0
    %2036 = vmatmul.mubr.bf16.gmra.mrb[0].mxu0 %v1263
    %v2037 = vpop.f32.mrb[0].mxu0
    %v2038 = vadd.f32 0.0, %v2037
    %v2039 = vpop.f32.mrb[0].mxu0
    %v2040 = vpop.f32.mrb[0].mxu0
    %v2041 = vadd.f32 0.0, %v2040
    %v2042 = vpop.f32.mrb[0].mxu0
    %2043 = vmatprep.mubr.bf16.mxu0 0
    %2044 = vmatmul.mubr.bf16.gmra.mrb[0].mxu0 %v1266
    %v2045 = vpop.f32.mrb[0].mxu0
    %v2046 = vadd.f32 0.0, %v2045
    %v2047 = vpop.f32.mrb[0].mxu0
    %v2048 = vpop.f32.mrb[0].mxu0
    %v2049 = vadd.f32 0.0, %v2048
    %v2050 = vpop.f32.mrb[0].mxu0
    %2051 = vdwg.mxu0
    %v2052 = vld [vmem:[%s4] sm:$0xff]
    %v2053 = vld [vmem:[%s4 + $0x8] sm:$0xff]
    %v2054 = vld [vmem:[%s4 + $0x10] sm:$0xff]
    %v2055 = vld [vmem:[%s4 + $0x18] sm:$0xff]
    %2057 = vset.pattern.permute.xlu0 0
    %2058 = vperm.xlu0 %2057, %v2052
    %v2059 = vpop.permute.xlu0 %2058
    %2062 = vset.pattern.permute.xlu0 0
    %2063 = vperm.xlu0 %2062, %v2053
    %v2064 = vpop.permute.xlu0 %2063
    %2067 = vset.pattern.permute.xlu0 0
    %2068 = vperm.xlu0 %2067, %v2054
    %v2069 = vpop.permute.xlu0 %2068
    %2072 = vset.pattern.permute.xlu0 0
    %2073 = vperm.xlu0 %2072, %v2055
    %v2074 = vpop.permute.xlu0 %2073
    %v2076 = vadd.f32 %v1303, %v2059
    %v2077 = vadd.f32 %v1306, %v2064
    %v2078 = vadd.f32 %v1311, %v2069
    %v2079 = vadd.f32 %v1314, %v2074
    %v2080 = vadd.f32 %v1352, %v2059
    %v2081 = vadd.f32 %v1355, %v2064
    %v2082 = vadd.f32 %v1360, %v2069
    %v2083 = vadd.f32 %v1363, %v2074
    %v2084 = vadd.f32 %v1401, %v2059
    %v2085 = vadd.f32 %v1404, %v2064
    %v2086 = vadd.f32 %v1409, %v2069
    %v2087 = vadd.f32 %v1412, %v2074
    %v2088 = vadd.f32 %v1450, %v2059
    %v2089 = vadd.f32 %v1453, %v2064
    %v2090 = vadd.f32 %v1458, %v2069
    %v2091 = vadd.f32 %v1461, %v2074
    %v2092 = vadd.f32 %v1499, %v2059
    %v2093 = vadd.f32 %v1502, %v2064
    %v2094 = vadd.f32 %v1507, %v2069
    %v2095 = vadd.f32 %v1510, %v2074
    %v2096 = vadd.f32 %v1548, %v2059
    %v2097 = vadd.f32 %v1551, %v2064
    %v2098 = vadd.f32 %v1556, %v2069
    %v2099 = vadd.f32 %v1559, %v2074
    %v2100 = vadd.f32 %v1597, %v2059
    %v2101 = vadd.f32 %v1600, %v2064
    %v2102 = vadd.f32 %v1605, %v2069
    %v2103 = vadd.f32 %v1608, %v2074
    %v2104 = vadd.f32 %v1646, %v2059
    %v2105 = vadd.f32 %v1649, %v2064
    %v2106 = vadd.f32 %v1654, %v2069
    %v2107 = vadd.f32 %v1657, %v2074
    %v2108 = vadd.f32 %v1695, %v2059
    %v2109 = vadd.f32 %v1698, %v2064
    %v2110 = vadd.f32 %v1703, %v2069
    %v2111 = vadd.f32 %v1706, %v2074
    %v2112 = vadd.f32 %v1744, %v2059
    %v2113 = vadd.f32 %v1747, %v2064
    %v2114 = vadd.f32 %v1752, %v2069
    %v2115 = vadd.f32 %v1755, %v2074
    %v2116 = vadd.f32 %v1793, %v2059
    %v2117 = vadd.f32 %v1796, %v2064
    %v2118 = vadd.f32 %v1801, %v2069
    %v2119 = vadd.f32 %v1804, %v2074
    %v2120 = vadd.f32 %v1842, %v2059
    %v2121 = vadd.f32 %v1845, %v2064
    %v2122 = vadd.f32 %v1850, %v2069
    %v2123 = vadd.f32 %v1853, %v2074
    %v2124 = vadd.f32 %v1891, %v2059
    %v2125 = vadd.f32 %v1894, %v2064
    %v2126 = vadd.f32 %v1899, %v2069
    %v2127 = vadd.f32 %v1902, %v2074
    %v2128 = vadd.f32 %v1940, %v2059
    %v2129 = vadd.f32 %v1943, %v2064
    %v2130 = vadd.f32 %v1948, %v2069
    %v2131 = vadd.f32 %v1951, %v2074
    %v2132 = vadd.f32 %v1989, %v2059
    %v2133 = vadd.f32 %v1992, %v2064
    %v2134 = vadd.f32 %v1997, %v2069
    %v2135 = vadd.f32 %v2000, %v2074
    %v2136 = vadd.f32 %v2038, %v2059
    %v2137 = vadd.f32 %v2041, %v2064
    %v2138 = vadd.f32 %v2046, %v2069
    %v2139 = vadd.f32 %v2049, %v2074
    %v2140 = vmax.f32 %v2076, 0.0
    %v2141 = vmax.f32 %v2077, 0.0
    %v2142 = vmax.f32 %v2078, 0.0
    %v2143 = vmax.f32 %v2079, 0.0
    %v2144 = vmax.f32 %v2080, 0.0
    %v2145 = vmax.f32 %v2081, 0.0
    %v2146 = vmax.f32 %v2082, 0.0
    %v2147 = vmax.f32 %v2083, 0.0
    %v2148 = vmax.f32 %v2084, 0.0
    %v2149 = vmax.f32 %v2085, 0.0
    %v2150 = vmax.f32 %v2086, 0.0
    %v2151 = vmax.f32 %v2087, 0.0
    %v2152 = vmax.f32 %v2088, 0.0
    %v2153 = vmax.f32 %v2089, 0.0
    %v2154 = vmax.f32 %v2090, 0.0
    %v2155 = vmax.f32 %v2091, 0.0
    %v2156 = vmax.f32 %v2092, 0.0
    %v2157 = vmax.f32 %v2093, 0.0
    %v2158 = vmax.f32 %v2094, 0.0
    %v2159 = vmax.f32 %v2095, 0.0
    %v2160 = vmax.f32 %v2096, 0.0
    %v2161 = vmax.f32 %v2097, 0.0
    %v2162 = vmax.f32 %v2098, 0.0
    %v2163 = vmax.f32 %v2099, 0.0
    %v2164 = vmax.f32 %v2100, 0.0
    %v2165 = vmax.f32 %v2101, 0.0
    %v2166 = vmax.f32 %v2102, 0.0
    %v2167 = vmax.f32 %v2103, 0.0
    %v2168 = vmax.f32 %v2104, 0.0
    %v2169 = vmax.f32 %v2105, 0.0
    %v2170 = vmax.f32 %v2106, 0.0
    %v2171 = vmax.f32 %v2107, 0.0
    %v2172 = vmax.f32 %v2108, 0.0
    %v2173 = vmax.f32 %v2109, 0.0
    %v2174 = vmax.f32 %v2110, 0.0
    %v2175 = vmax.f32 %v2111, 0.0
    %v2176 = vmax.f32 %v2112, 0.0
    %v2177 = vmax.f32 %v2113, 0.0
    %v2178 = vmax.f32 %v2114, 0.0
    %v2179 = vmax.f32 %v2115, 0.0
    %v2180 = vmax.f32 %v2116, 0.0
    %v2181 = vmax.f32 %v2117, 0.0
    %v2182 = vmax.f32 %v2118, 0.0
    %v2183 = vmax.f32 %v2119, 0.0
    %v2184 = vmax.f32 %v2120, 0.0
    %v2185 = vmax.f32 %v2121, 0.0
    %v2186 = vmax.f32 %v2122, 0.0
    %v2187 = vmax.f32 %v2123, 0.0
    %v2188 = vmax.f32 %v2124, 0.0
    %v2189 = vmax.f32 %v2125, 0.0
    %v2190 = vmax.f32 %v2126, 0.0
    %v2191 = vmax.f32 %v2127, 0.0
    %v2192 = vmax.f32 %v2128, 0.0
    %v2193 = vmax.f32 %v2129, 0.0
    %v2194 = vmax.f32 %v2130, 0.0
    %v2195 = vmax.f32 %v2131, 0.0
    %v2196 = vmax.f32 %v2132, 0.0
    %v2197 = vmax.f32 %v2133, 0.0
    %v2198 = vmax.f32 %v2134, 0.0
    %v2199 = vmax.f32 %v2135, 0.0
    %v2200 = vmax.f32 %v2136, 0.0
    %v2201 = vmax.f32 %v2137, 0.0
    %v2202 = vmax.f32 %v2138, 0.0
    %v2203 = vmax.f32 %v2139, 0.0
    %v2204 = vadd.f32 %v2140, %v48
    %v2205 = vadd.f32 %v2141, %v49
    %v2206 = vadd.f32 %v2142, %v50
    %v2207 = vadd.f32 %v2143, %v51
    %v2208 = vadd.f32 %v2144, %v52
    %v2209 = vadd.f32 %v2145, %v53
    %v2210 = vadd.f32 %v2146, %v54
    %v2211 = vadd.f32 %v2147, %v55
    %v2212 = vadd.f32 %v2148, %v56
    %v2213 = vadd.f32 %v2149, %v57
    %v2214 = vadd.f32 %v2150, %v58
    %v2215 = vadd.f32 %v2151, %v59
    %v2216 = vadd.f32 %v2152, %v60
    %v2217 = vadd.f32 %v2153, %v61
    %v2218 = vadd.f32 %v2154, %v62
    %v2219 = vadd.f32 %v2155, %v63
    %v2220 = vadd.f32 %v2156, %v64
    %v2221 = vadd.f32 %v2157, %v65
    %v2222 = vadd.f32 %v2158, %v66
    %v2223 = vadd.f32 %v2159, %v67
    %v2224 = vadd.f32 %v2160, %v68
    %v2225 = vadd.f32 %v2161, %v69
    %v2226 = vadd.f32 %v2162, %v70
    %v2227 = vadd.f32 %v2163, %v71
    %v2228 = vadd.f32 %v2164, %v72
    %v2229 = vadd.f32 %v2165, %v73
    %v2230 = vadd.f32 %v2166, %v74
    %v2231 = vadd.f32 %v2167, %v75
    %v2232 = vadd.f32 %v2168, %v76
    %v2233 = vadd.f32 %v2169, %v77
    %v2234 = vadd.f32 %v2170, %v78
    %v2235 = vadd.f32 %v2171, %v79
    %v2236 = vadd.f32 %v2172, %v80
    %v2237 = vadd.f32 %v2173, %v81
    %v2238 = vadd.f32 %v2174, %v82
    %v2239 = vadd.f32 %v2175, %v83
    %v2240 = vadd.f32 %v2176, %v84
    %v2241 = vadd.f32 %v2177, %v85
    %v2242 = vadd.f32 %v2178, %v86
    %v2243 = vadd.f32 %v2179, %v87
    %v2244 = vadd.f32 %v2180, %v88
    %v2245 = vadd.f32 %v2181, %v89
    %v2246 = vadd.f32 %v2182, %v90
    %v2247 = vadd.f32 %v2183, %v91
    %v2248 = vadd.f32 %v2184, %v92
    %v2249 = vadd.f32 %v2185, %v93
    %v2250 = vadd.f32 %v2186, %v94
    %v2251 = vadd.f32 %v2187, %v95
    %v2252 = vadd.f32 %v2188, %v96
    %v2253 = vadd.f32 %v2189, %v97
    %v2254 = vadd.f32 %v2190, %v98
    %v2255 = vadd.f32 %v2191, %v99
    %v2256 = vadd.f32 %v2192, %v100
    %v2257 = vadd.f32 %v2193, %v101
    %v2258 = vadd.f32 %v2194, %v102
    %v2259 = vadd.f32 %v2195, %v103
    %v2260 = vadd.f32 %v2196, %v104
    %v2261 = vadd.f32 %v2197, %v105
    %v2262 = vadd.f32 %v2198, %v106
    %v2263 = vadd.f32 %v2199, %v107
    %v2264 = vadd.f32 %v2200, %v108
    %v2265 = vadd.f32 %v2201, %v109
    %v2266 = vadd.f32 %v2202, %v110
    %v2267 = vadd.f32 %v2203, %v111
    %v2268 = vsel %vm114, %v2204, 0.0
    %2269 = vadd.xlane.f32.xlu0 %v2268
    %v2270 = vpop.xlane.xlu0 %2269
    %v2271 = vsel %vm114, %v2205, 0.0
    %2272 = vadd.xlane.f32.xlu0 %v2271
    %v2273 = vpop.xlane.xlu0 %2272
    %v2274 = vsel %vm114, %v2206, 0.0
    %2275 = vadd.xlane.f32.xlu0 %v2274
    %v2276 = vpop.xlane.xlu0 %2275
    %v2277 = vsel %vm114, %v2207, 0.0
    %2278 = vadd.xlane.f32.xlu0 %v2277
    %v2279 = vpop.xlane.xlu0 %2278
    %v2280 = vsel %vm114, %v2208, 0.0
    %2281 = vadd.xlane.f32.xlu0 %v2280
    %v2282 = vpop.xlane.xlu0 %2281
    %v2283 = vsel %vm114, %v2209, 0.0
    %2284 = vadd.xlane.f32.xlu0 %v2283
    %v2285 = vpop.xlane.xlu0 %2284
    %v2286 = vsel %vm114, %v2210, 0.0
    %2287 = vadd.xlane.f32.xlu0 %v2286
    %v2288 = vpop.xlane.xlu0 %2287
    %v2289 = vsel %vm114, %v2211, 0.0
    %2290 = vadd.xlane.f32.xlu0 %v2289
    %v2291 = vpop.xlane.xlu0 %2290
    %v2292 = vsel %vm114, %v2212, 0.0
    %2293 = vadd.xlane.f32.xlu0 %v2292
    %v2294 = vpop.xlane.xlu0 %2293
    %v2295 = vsel %vm114, %v2213, 0.0
    %2296 = vadd.xlane.f32.xlu0 %v2295
    %v2297 = vpop.xlane.xlu0 %2296
    %v2298 = vsel %vm114, %v2214, 0.0
    %2299 = vadd.xlane.f32.xlu0 %v2298
    %v2300 = vpop.xlane.xlu0 %2299
    %v2301 = vsel %vm114, %v2215, 0.0
    %2302 = vadd.xlane.f32.xlu0 %v2301
    %v2303 = vpop.xlane.xlu0 %2302
    %v2304 = vsel %vm114, %v2216, 0.0
    %2305 = vadd.xlane.f32.xlu0 %v2304
    %v2306 = vpop.xlane.xlu0 %2305
    %v2307 = vsel %vm114, %v2217, 0.0
    %2308 = vadd.xlane.f32.xlu0 %v2307
    %v2309 = vpop.xlane.xlu0 %2308
    %v2310 = vsel %vm114, %v2218, 0.0
    %2311 = vadd.xlane.f32.xlu0 %v2310
    %v2312 = vpop.xlane.xlu0 %2311
    %v2313 = vsel %vm114, %v2219, 0.0
    %2314 = vadd.xlane.f32.xlu0 %v2313
    %v2315 = vpop.xlane.xlu0 %2314
    %v2316 = vsel %vm114, %v2220, 0.0
    %2317 = vadd.xlane.f32.xlu0 %v2316
    %v2318 = vpop.xlane.xlu0 %2317
    %v2319 = vsel %vm114, %v2221, 0.0
    %2320 = vadd.xlane.f32.xlu0 %v2319
    %v2321 = vpop.xlane.xlu0 %2320
    %v2322 = vsel %vm114, %v2222, 0.0
    %2323 = vadd.xlane.f32.xlu0 %v2322
    %v2324 = vpop.xlane.xlu0 %2323
    %v2325 = vsel %vm114, %v2223, 0.0
    %2326 = vadd.xlane.f32.xlu0 %v2325
    %v2327 = vpop.xlane.xlu0 %2326
    %v2328 = vsel %vm114, %v2224, 0.0
    %2329 = vadd.xlane.f32.xlu0 %v2328
    %v2330 = vpop.xlane.xlu0 %2329
    %v2331 = vsel %vm114, %v2225, 0.0
    %2332 = vadd.xlane.f32.xlu0 %v2331
    %v2333 = vpop.xlane.xlu0 %2332
    %v2334 = vsel %vm114, %v2226, 0.0
    %2335 = vadd.xlane.f32.xlu0 %v2334
    %v2336 = vpop.xlane.xlu0 %2335
    %v2337 = vsel %vm114, %v2227, 0.0
    %2338 = vadd.xlane.f32.xlu0 %v2337
    %v2339 = vpop.xlane.xlu0 %2338
    %v2340 = vsel %vm114, %v2228, 0.0
    %2341 = vadd.xlane.f32.xlu0 %v2340
    %v2342 = vpop.xlane.xlu0 %2341
    %v2343 = vsel %vm114, %v2229, 0.0
    %2344 = vadd.xlane.f32.xlu0 %v2343
    %v2345 = vpop.xlane.xlu0 %2344
    %v2346 = vsel %vm114, %v2230, 0.0
    %2347 = vadd.xlane.f32.xlu0 %v2346
    %v2348 = vpop.xlane.xlu0 %2347
    %v2349 = vsel %vm114, %v2231, 0.0
    %2350 = vadd.xlane.f32.xlu0 %v2349
    %v2351 = vpop.xlane.xlu0 %2350
    %v2352 = vsel %vm114, %v2232, 0.0
    %2353 = vadd.xlane.f32.xlu0 %v2352
    %v2354 = vpop.xlane.xlu0 %2353
    %v2355 = vsel %vm114, %v2233, 0.0
    %2356 = vadd.xlane.f32.xlu0 %v2355
    %v2357 = vpop.xlane.xlu0 %2356
    %v2358 = vsel %vm114, %v2234, 0.0
    %2359 = vadd.xlane.f32.xlu0 %v2358
    %v2360 = vpop.xlane.xlu0 %2359
    %v2361 = vsel %vm114, %v2235, 0.0
    %2362 = vadd.xlane.f32.xlu0 %v2361
    %v2363 = vpop.xlane.xlu0 %2362
    %v2364 = vsel %vm114, %v2236, 0.0
    %2365 = vadd.xlane.f32.xlu0 %v2364
    %v2366 = vpop.xlane.xlu0 %2365
    %v2367 = vsel %vm114, %v2237, 0.0
    %2368 = vadd.xlane.f32.xlu0 %v2367
    %v2369 = vpop.xlane.xlu0 %2368
    %v2370 = vsel %vm114, %v2238, 0.0
    %2371 = vadd.xlane.f32.xlu0 %v2370
    %v2372 = vpop.xlane.xlu0 %2371
    %v2373 = vsel %vm114, %v2239, 0.0
    %2374 = vadd.xlane.f32.xlu0 %v2373
    %v2375 = vpop.xlane.xlu0 %2374
    %v2376 = vsel %vm114, %v2240, 0.0
    %2377 = vadd.xlane.f32.xlu0 %v2376
    %v2378 = vpop.xlane.xlu0 %2377
    %v2379 = vsel %vm114, %v2241, 0.0
    %2380 = vadd.xlane.f32.xlu0 %v2379
    %v2381 = vpop.xlane.xlu0 %2380
    %v2382 = vsel %vm114, %v2242, 0.0
    %2383 = vadd.xlane.f32.xlu0 %v2382
    %v2384 = vpop.xlane.xlu0 %2383
    %v2385 = vsel %vm114, %v2243, 0.0
    %2386 = vadd.xlane.f32.xlu0 %v2385
    %v2387 = vpop.xlane.xlu0 %2386
    %v2388 = vsel %vm114, %v2244, 0.0
    %2389 = vadd.xlane.f32.xlu0 %v2388
    %v2390 = vpop.xlane.xlu0 %2389
    %v2391 = vsel %vm114, %v2245, 0.0
    %2392 = vadd.xlane.f32.xlu0 %v2391
    %v2393 = vpop.xlane.xlu0 %2392
    %v2394 = vsel %vm114, %v2246, 0.0
    %2395 = vadd.xlane.f32.xlu0 %v2394
    %v2396 = vpop.xlane.xlu0 %2395
    %v2397 = vsel %vm114, %v2247, 0.0
    %2398 = vadd.xlane.f32.xlu0 %v2397
    %v2399 = vpop.xlane.xlu0 %2398
    %v2400 = vsel %vm114, %v2248, 0.0
    %2401 = vadd.xlane.f32.xlu0 %v2400
    %v2402 = vpop.xlane.xlu0 %2401
    %v2403 = vsel %vm114, %v2249, 0.0
    %2404 = vadd.xlane.f32.xlu0 %v2403
    %v2405 = vpop.xlane.xlu0 %2404
    %v2406 = vsel %vm114, %v2250, 0.0
    %2407 = vadd.xlane.f32.xlu0 %v2406
    %v2408 = vpop.xlane.xlu0 %2407
    %v2409 = vsel %vm114, %v2251, 0.0
    %2410 = vadd.xlane.f32.xlu0 %v2409
    %v2411 = vpop.xlane.xlu0 %2410
    %v2412 = vsel %vm114, %v2252, 0.0
    %2413 = vadd.xlane.f32.xlu0 %v2412
    %v2414 = vpop.xlane.xlu0 %2413
    %v2415 = vsel %vm114, %v2253, 0.0
    %2416 = vadd.xlane.f32.xlu0 %v2415
    %v2417 = vpop.xlane.xlu0 %2416
    %v2418 = vsel %vm114, %v2254, 0.0
    %2419 = vadd.xlane.f32.xlu0 %v2418
    %v2420 = vpop.xlane.xlu0 %2419
    %v2421 = vsel %vm114, %v2255, 0.0
    %2422 = vadd.xlane.f32.xlu0 %v2421
    %v2423 = vpop.xlane.xlu0 %2422
    %v2424 = vsel %vm114, %v2256, 0.0
    %2425 = vadd.xlane.f32.xlu0 %v2424
    %v2426 = vpop.xlane.xlu0 %2425
    %v2427 = vsel %vm114, %v2257, 0.0
    %2428 = vadd.xlane.f32.xlu0 %v2427
    %v2429 = vpop.xlane.xlu0 %2428
    %v2430 = vsel %vm114, %v2258, 0.0
    %2431 = vadd.xlane.f32.xlu0 %v2430
    %v2432 = vpop.xlane.xlu0 %2431
    %v2433 = vsel %vm114, %v2259, 0.0
    %2434 = vadd.xlane.f32.xlu0 %v2433
    %v2435 = vpop.xlane.xlu0 %2434
    %v2436 = vsel %vm114, %v2260, 0.0
    %2437 = vadd.xlane.f32.xlu0 %v2436
    %v2438 = vpop.xlane.xlu0 %2437
    %v2439 = vsel %vm114, %v2261, 0.0
    %2440 = vadd.xlane.f32.xlu0 %v2439
    %v2441 = vpop.xlane.xlu0 %2440
    %v2442 = vsel %vm114, %v2262, 0.0
    %2443 = vadd.xlane.f32.xlu0 %v2442
    %v2444 = vpop.xlane.xlu0 %2443
    %v2445 = vsel %vm114, %v2263, 0.0
    %2446 = vadd.xlane.f32.xlu0 %v2445
    %v2447 = vpop.xlane.xlu0 %2446
    %v2448 = vsel %vm114, %v2264, 0.0
    %2449 = vadd.xlane.f32.xlu0 %v2448
    %v2450 = vpop.xlane.xlu0 %2449
    %v2451 = vsel %vm114, %v2265, 0.0
    %2452 = vadd.xlane.f32.xlu0 %v2451
    %v2453 = vpop.xlane.xlu0 %2452
    %v2454 = vsel %vm114, %v2266, 0.0
    %2455 = vadd.xlane.f32.xlu0 %v2454
    %v2456 = vpop.xlane.xlu0 %2455
    %v2457 = vsel %vm114, %v2267, 0.0
    %2458 = vadd.xlane.f32.xlu0 %v2457
    %v2459 = vpop.xlane.xlu0 %2458
    %v2460 = vmul.f32 %v2270, %v307
    %v2461 = vmul.f32 %v2273, %v307
    %v2462 = vmul.f32 %v2276, %v307
    %v2463 = vmul.f32 %v2279, %v307
    %v2464 = vmul.f32 %v2282, %v307
    %v2465 = vmul.f32 %v2285, %v307
    %v2466 = vmul.f32 %v2288, %v307
    %v2467 = vmul.f32 %v2291, %v307
    %v2468 = vmul.f32 %v2294, %v307
    %v2469 = vmul.f32 %v2297, %v307
    %v2470 = vmul.f32 %v2300, %v307
    %v2471 = vmul.f32 %v2303, %v307
    %v2472 = vmul.f32 %v2306, %v307
    %v2473 = vmul.f32 %v2309, %v307
    %v2474 = vmul.f32 %v2312, %v307
    %v2475 = vmul.f32 %v2315, %v307
    %v2476 = vmul.f32 %v2318, %v307
    %v2477 = vmul.f32 %v2321, %v307
    %v2478 = vmul.f32 %v2324, %v307
    %v2479 = vmul.f32 %v2327, %v307
    %v2480 = vmul.f32 %v2330, %v307
    %v2481 = vmul.f32 %v2333, %v307
    %v2482 = vmul.f32 %v2336, %v307
    %v2483 = vmul.f32 %v2339, %v307
    %v2484 = vmul.f32 %v2342, %v307
    %v2485 = vmul.f32 %v2345, %v307
    %v2486 = vmul.f32 %v2348, %v307
    %v2487 = vmul.f32 %v2351, %v307
    %v2488 = vmul.f32 %v2354, %v307
    %v2489 = vmul.f32 %v2357, %v307
    %v2490 = vmul.f32 %v2360, %v307
    %v2491 = vmul.f32 %v2363, %v307
    %v2492 = vmul.f32 %v2366, %v307
    %v2493 = vmul.f32 %v2369, %v307
    %v2494 = vmul.f32 %v2372, %v307
    %v2495 = vmul.f32 %v2375, %v307
    %v2496 = vmul.f32 %v2378, %v307
    %v2497 = vmul.f32 %v2381, %v307
    %v2498 = vmul.f32 %v2384, %v307
    %v2499 = vmul.f32 %v2387, %v307
    %v2500 = vmul.f32 %v2390, %v307
    %v2501 = vmul.f32 %v2393, %v307
    %v2502 = vmul.f32 %v2396, %v307
    %v2503 = vmul.f32 %v2399, %v307
    %v2504 = vmul.f32 %v2402, %v307
    %v2505 = vmul.f32 %v2405, %v307
    %v2506 = vmul.f32 %v2408, %v307
    %v2507 = vmul.f32 %v2411, %v307
    %v2508 = vmul.f32 %v2414, %v307
    %v2509 = vmul.f32 %v2417, %v307
    %v2510 = vmul.f32 %v2420, %v307
    %v2511 = vmul.f32 %v2423, %v307
    %v2512 = vmul.f32 %v2426, %v307
    %v2513 = vmul.f32 %v2429, %v307
    %v2514 = vmul.f32 %v2432, %v307
    %v2515 = vmul.f32 %v2435, %v307
    %v2516 = vmul.f32 %v2438, %v307
    %v2517 = vmul.f32 %v2441, %v307
    %v2518 = vmul.f32 %v2444, %v307
    %v2519 = vmul.f32 %v2447, %v307
    %v2520 = vmul.f32 %v2450, %v307
    %v2521 = vmul.f32 %v2453, %v307
    %v2522 = vmul.f32 %v2456, %v307
    %v2523 = vmul.f32 %v2459, %v307
    %v2524 = vmul.f32 %v2204, %v2204
    %v2525 = vmul.f32 %v2205, %v2205
    %v2526 = vmul.f32 %v2206, %v2206
    %v2527 = vmul.f32 %v2207, %v2207
    %v2528 = vmul.f32 %v2208, %v2208
    %v2529 = vmul.f32 %v2209, %v2209
    %v2530 = vmul.f32 %v2210, %v2210
    %v2531 = vmul.f32 %v2211, %v2211
    %v2532 = vmul.f32 %v2212, %v2212
    %v2533 = vmul.f32 %v2213, %v2213
    %v2534 = vmul.f32 %v2214, %v2214
    %v2535 = vmul.f32 %v2215, %v2215
    %v2536 = vmul.f32 %v2216, %v2216
    %v2537 = vmul.f32 %v2217, %v2217
    %v2538 = vmul.f32 %v2218, %v2218
    %v2539 = vmul.f32 %v2219, %v2219
    %v2540 = vmul.f32 %v2220, %v2220
    %v2541 = vmul.f32 %v2221, %v2221
    %v2542 = vmul.f32 %v2222, %v2222
    %v2543 = vmul.f32 %v2223, %v2223
    %v2544 = vmul.f32 %v2224, %v2224
    %v2545 = vmul.f32 %v2225, %v2225
    %v2546 = vmul.f32 %v2226, %v2226
    %v2547 = vmul.f32 %v2227, %v2227
    %v2548 = vmul.f32 %v2228, %v2228
    %v2549 = vmul.f32 %v2229, %v2229
    %v2550 = vmul.f32 %v2230, %v2230
    %v2551 = vmul.f32 %v2231, %v2231
    %v2552 = vmul.f32 %v2232, %v2232
    %v2553 = vmul.f32 %v2233, %v2233
    %v2554 = vmul.f32 %v2234, %v2234
    %v2555 = vmul.f32 %v2235, %v2235
    %v2556 = vmul.f32 %v2236, %v2236
    %v2557 = vmul.f32 %v2237, %v2237
    %v2558 = vmul.f32 %v2238, %v2238
    %v2559 = vmul.f32 %v2239, %v2239
    %v2560 = vmul.f32 %v2240, %v2240
    %v2561 = vmul.f32 %v2241, %v2241
    %v2562 = vmul.f32 %v2242, %v2242
    %v2563 = vmul.f32 %v2243, %v2243
    %v2564 = vmul.f32 %v2244, %v2244
    %v2565 = vmul.f32 %v2245, %v2245
    %v2566 = vmul.f32 %v2246, %v2246
    %v2567 = vmul.f32 %v2247, %v2247
    %v2568 = vmul.f32 %v2248, %v2248
    %v2569 = vmul.f32 %v2249, %v2249
    %v2570 = vmul.f32 %v2250, %v2250
    %v2571 = vmul.f32 %v2251, %v2251
    %v2572 = vmul.f32 %v2252, %v2252
    %v2573 = vmul.f32 %v2253, %v2253
    %v2574 = vmul.f32 %v2254, %v2254
    %v2575 = vmul.f32 %v2255, %v2255
    %v2576 = vmul.f32 %v2256, %v2256
    %v2577 = vmul.f32 %v2257, %v2257
    %v2578 = vmul.f32 %v2258, %v2258
    %v2579 = vmul.f32 %v2259, %v2259
    %v2580 = vmul.f32 %v2260, %v2260
    %v2581 = vmul.f32 %v2261, %v2261
    %v2582 = vmul.f32 %v2262, %v2262
    %v2583 = vmul.f32 %v2263, %v2263
    %v2584 = vmul.f32 %v2264, %v2264
    %v2585 = vmul.f32 %v2265, %v2265
    %v2586 = vmul.f32 %v2266, %v2266
    %v2587 = vmul.f32 %v2267, %v2267
    %v2588 = vsel %vm114, %v2524, 0.0
    %2589 = vadd.xlane.f32.xlu0 %v2588
    %v2590 = vpop.xlane.xlu0 %2589
    %v2591 = vsel %vm114, %v2525, 0.0
    %2592 = vadd.xlane.f32.xlu0 %v2591
    %v2593 = vpop.xlane.xlu0 %2592
    %v2594 = vsel %vm114, %v2526, 0.0
    %2595 = vadd.xlane.f32.xlu0 %v2594
    %v2596 = vpop.xlane.xlu0 %2595
    %v2597 = vsel %vm114, %v2527, 0.0
    %2598 = vadd.xlane.f32.xlu0 %v2597
    %v2599 = vpop.xlane.xlu0 %2598
    %v2600 = vsel %vm114, %v2528, 0.0
    %2601 = vadd.xlane.f32.xlu0 %v2600
    %v2602 = vpop.xlane.xlu0 %2601
    %v2603 = vsel %vm114, %v2529, 0.0
    %2604 = vadd.xlane.f32.xlu0 %v2603
    %v2605 = vpop.xlane.xlu0 %2604
    %v2606 = vsel %vm114, %v2530, 0.0
    %2607 = vadd.xlane.f32.xlu0 %v2606
    %v2608 = vpop.xlane.xlu0 %2607
    %v2609 = vsel %vm114, %v2531, 0.0
    %2610 = vadd.xlane.f32.xlu0 %v2609
    %v2611 = vpop.xlane.xlu0 %2610
    %v2612 = vsel %vm114, %v2532, 0.0
    %2613 = vadd.xlane.f32.xlu0 %v2612
    %v2614 = vpop.xlane.xlu0 %2613
    %v2615 = vsel %vm114, %v2533, 0.0
    %2616 = vadd.xlane.f32.xlu0 %v2615
    %v2617 = vpop.xlane.xlu0 %2616
    %v2618 = vsel %vm114, %v2534, 0.0
    %2619 = vadd.xlane.f32.xlu0 %v2618
    %v2620 = vpop.xlane.xlu0 %2619
    %v2621 = vsel %vm114, %v2535, 0.0
    %2622 = vadd.xlane.f32.xlu0 %v2621
    %v2623 = vpop.xlane.xlu0 %2622
    %v2624 = vsel %vm114, %v2536, 0.0
    %2625 = vadd.xlane.f32.xlu0 %v2624
    %v2626 = vpop.xlane.xlu0 %2625
    %v2627 = vsel %vm114, %v2537, 0.0
    %2628 = vadd.xlane.f32.xlu0 %v2627
    %v2629 = vpop.xlane.xlu0 %2628
    %v2630 = vsel %vm114, %v2538, 0.0
    %2631 = vadd.xlane.f32.xlu0 %v2630
    %v2632 = vpop.xlane.xlu0 %2631
    %v2633 = vsel %vm114, %v2539, 0.0
    %2634 = vadd.xlane.f32.xlu0 %v2633
    %v2635 = vpop.xlane.xlu0 %2634
    %v2636 = vsel %vm114, %v2540, 0.0
    %2637 = vadd.xlane.f32.xlu0 %v2636
    %v2638 = vpop.xlane.xlu0 %2637
    %v2639 = vsel %vm114, %v2541, 0.0
    %2640 = vadd.xlane.f32.xlu0 %v2639
    %v2641 = vpop.xlane.xlu0 %2640
    %v2642 = vsel %vm114, %v2542, 0.0
    %2643 = vadd.xlane.f32.xlu0 %v2642
    %v2644 = vpop.xlane.xlu0 %2643
    %v2645 = vsel %vm114, %v2543, 0.0
    %2646 = vadd.xlane.f32.xlu0 %v2645
    %v2647 = vpop.xlane.xlu0 %2646
    %v2648 = vsel %vm114, %v2544, 0.0
    %2649 = vadd.xlane.f32.xlu0 %v2648
    %v2650 = vpop.xlane.xlu0 %2649
    %v2651 = vsel %vm114, %v2545, 0.0
    %2652 = vadd.xlane.f32.xlu0 %v2651
    %v2653 = vpop.xlane.xlu0 %2652
    %v2654 = vsel %vm114, %v2546, 0.0
    %2655 = vadd.xlane.f32.xlu0 %v2654
    %v2656 = vpop.xlane.xlu0 %2655
    %v2657 = vsel %vm114, %v2547, 0.0
    %2658 = vadd.xlane.f32.xlu0 %v2657
    %v2659 = vpop.xlane.xlu0 %2658
    %v2660 = vsel %vm114, %v2548, 0.0
    %2661 = vadd.xlane.f32.xlu0 %v2660
    %v2662 = vpop.xlane.xlu0 %2661
    %v2663 = vsel %vm114, %v2549, 0.0
    %2664 = vadd.xlane.f32.xlu0 %v2663
    %v2665 = vpop.xlane.xlu0 %2664
    %v2666 = vsel %vm114, %v2550, 0.0
    %2667 = vadd.xlane.f32.xlu0 %v2666
    %v2668 = vpop.xlane.xlu0 %2667
    %v2669 = vsel %vm114, %v2551, 0.0
    %2670 = vadd.xlane.f32.xlu0 %v2669
    %v2671 = vpop.xlane.xlu0 %2670
    %v2672 = vsel %vm114, %v2552, 0.0
    %2673 = vadd.xlane.f32.xlu0 %v2672
    %v2674 = vpop.xlane.xlu0 %2673
    %v2675 = vsel %vm114, %v2553, 0.0
    %2676 = vadd.xlane.f32.xlu0 %v2675
    %v2677 = vpop.xlane.xlu0 %2676
    %v2678 = vsel %vm114, %v2554, 0.0
    %2679 = vadd.xlane.f32.xlu0 %v2678
    %v2680 = vpop.xlane.xlu0 %2679
    %v2681 = vsel %vm114, %v2555, 0.0
    %2682 = vadd.xlane.f32.xlu0 %v2681
    %v2683 = vpop.xlane.xlu0 %2682
    %v2684 = vsel %vm114, %v2556, 0.0
    %2685 = vadd.xlane.f32.xlu0 %v2684
    %v2686 = vpop.xlane.xlu0 %2685
    %v2687 = vsel %vm114, %v2557, 0.0
    %2688 = vadd.xlane.f32.xlu0 %v2687
    %v2689 = vpop.xlane.xlu0 %2688
    %v2690 = vsel %vm114, %v2558, 0.0
    %2691 = vadd.xlane.f32.xlu0 %v2690
    %v2692 = vpop.xlane.xlu0 %2691
    %v2693 = vsel %vm114, %v2559, 0.0
    %2694 = vadd.xlane.f32.xlu0 %v2693
    %v2695 = vpop.xlane.xlu0 %2694
    %v2696 = vsel %vm114, %v2560, 0.0
    %2697 = vadd.xlane.f32.xlu0 %v2696
    %v2698 = vpop.xlane.xlu0 %2697
    %v2699 = vsel %vm114, %v2561, 0.0
    %2700 = vadd.xlane.f32.xlu0 %v2699
    %v2701 = vpop.xlane.xlu0 %2700
    %v2702 = vsel %vm114, %v2562, 0.0
    %2703 = vadd.xlane.f32.xlu0 %v2702
    %v2704 = vpop.xlane.xlu0 %2703
    %v2705 = vsel %vm114, %v2563, 0.0
    %2706 = vadd.xlane.f32.xlu0 %v2705
    %v2707 = vpop.xlane.xlu0 %2706
    %v2708 = vsel %vm114, %v2564, 0.0
    %2709 = vadd.xlane.f32.xlu0 %v2708
    %v2710 = vpop.xlane.xlu0 %2709
    %v2711 = vsel %vm114, %v2565, 0.0
    %2712 = vadd.xlane.f32.xlu0 %v2711
    %v2713 = vpop.xlane.xlu0 %2712
    %v2714 = vsel %vm114, %v2566, 0.0
    %2715 = vadd.xlane.f32.xlu0 %v2714
    %v2716 = vpop.xlane.xlu0 %2715
    %v2717 = vsel %vm114, %v2567, 0.0
    %2718 = vadd.xlane.f32.xlu0 %v2717
    %v2719 = vpop.xlane.xlu0 %2718
    %v2720 = vsel %vm114, %v2568, 0.0
    %2721 = vadd.xlane.f32.xlu0 %v2720
    %v2722 = vpop.xlane.xlu0 %2721
    %v2723 = vsel %vm114, %v2569, 0.0
    %2724 = vadd.xlane.f32.xlu0 %v2723
    %v2725 = vpop.xlane.xlu0 %2724
    %v2726 = vsel %vm114, %v2570, 0.0
    %2727 = vadd.xlane.f32.xlu0 %v2726
    %v2728 = vpop.xlane.xlu0 %2727
    %v2729 = vsel %vm114, %v2571, 0.0
    %2730 = vadd.xlane.f32.xlu0 %v2729
    %v2731 = vpop.xlane.xlu0 %2730
    %v2732 = vsel %vm114, %v2572, 0.0
    %2733 = vadd.xlane.f32.xlu0 %v2732
    %v2734 = vpop.xlane.xlu0 %2733
    %v2735 = vsel %vm114, %v2573, 0.0
    %2736 = vadd.xlane.f32.xlu0 %v2735
    %v2737 = vpop.xlane.xlu0 %2736
    %v2738 = vsel %vm114, %v2574, 0.0
    %2739 = vadd.xlane.f32.xlu0 %v2738
    %v2740 = vpop.xlane.xlu0 %2739
    %v2741 = vsel %vm114, %v2575, 0.0
    %2742 = vadd.xlane.f32.xlu0 %v2741
    %v2743 = vpop.xlane.xlu0 %2742
    %v2744 = vsel %vm114, %v2576, 0.0
    %2745 = vadd.xlane.f32.xlu0 %v2744
    %v2746 = vpop.xlane.xlu0 %2745
    %v2747 = vsel %vm114, %v2577, 0.0
    %2748 = vadd.xlane.f32.xlu0 %v2747
    %v2749 = vpop.xlane.xlu0 %2748
    %v2750 = vsel %vm114, %v2578, 0.0
    %2751 = vadd.xlane.f32.xlu0 %v2750
    %v2752 = vpop.xlane.xlu0 %2751
    %v2753 = vsel %vm114, %v2579, 0.0
    %2754 = vadd.xlane.f32.xlu0 %v2753
    %v2755 = vpop.xlane.xlu0 %2754
    %v2756 = vsel %vm114, %v2580, 0.0
    %2757 = vadd.xlane.f32.xlu0 %v2756
    %v2758 = vpop.xlane.xlu0 %2757
    %v2759 = vsel %vm114, %v2581, 0.0
    %2760 = vadd.xlane.f32.xlu0 %v2759
    %v2761 = vpop.xlane.xlu0 %2760
    %v2762 = vsel %vm114, %v2582, 0.0
    %2763 = vadd.xlane.f32.xlu0 %v2762
    %v2764 = vpop.xlane.xlu0 %2763
    %v2765 = vsel %vm114, %v2583, 0.0
    %2766 = vadd.xlane.f32.xlu0 %v2765
    %v2767 = vpop.xlane.xlu0 %2766
    %v2768 = vsel %vm114, %v2584, 0.0
    %2769 = vadd.xlane.f32.xlu0 %v2768
    %v2770 = vpop.xlane.xlu0 %2769
    %v2771 = vsel %vm114, %v2585, 0.0
    %2772 = vadd.xlane.f32.xlu0 %v2771
    %v2773 = vpop.xlane.xlu0 %2772
    %v2774 = vsel %vm114, %v2586, 0.0
    %2775 = vadd.xlane.f32.xlu0 %v2774
    %v2776 = vpop.xlane.xlu0 %2775
    %v2777 = vsel %vm114, %v2587, 0.0
    %2778 = vadd.xlane.f32.xlu0 %v2777
    %v2779 = vpop.xlane.xlu0 %2778
    %v2780 = vmul.f32 %v2590, %v307
    %v2781 = vmul.f32 %v2593, %v307
    %v2782 = vmul.f32 %v2596, %v307
    %v2783 = vmul.f32 %v2599, %v307
    %v2784 = vmul.f32 %v2602, %v307
    %v2785 = vmul.f32 %v2605, %v307
    %v2786 = vmul.f32 %v2608, %v307
    %v2787 = vmul.f32 %v2611, %v307
    %v2788 = vmul.f32 %v2614, %v307
    %v2789 = vmul.f32 %v2617, %v307
    %v2790 = vmul.f32 %v2620, %v307
    %v2791 = vmul.f32 %v2623, %v307
    %v2792 = vmul.f32 %v2626, %v307
    %v2793 = vmul.f32 %v2629, %v307
    %v2794 = vmul.f32 %v2632, %v307
    %v2795 = vmul.f32 %v2635, %v307
    %v2796 = vmul.f32 %v2638, %v307
    %v2797 = vmul.f32 %v2641, %v307
    %v2798 = vmul.f32 %v2644, %v307
    %v2799 = vmul.f32 %v2647, %v307
    %v2800 = vmul.f32 %v2650, %v307
    %v2801 = vmul.f32 %v2653, %v307
    %v2802 = vmul.f32 %v2656, %v307
    %v2803 = vmul.f32 %v2659, %v307
    %v2804 = vmul.f32 %v2662, %v307
    %v2805 = vmul.f32 %v2665, %v307
    %v2806 = vmul.f32 %v2668, %v307
    %v2807 = vmul.f32 %v2671, %v307
    %v2808 = vmul.f32 %v2674, %v307
    %v2809 = vmul.f32 %v2677, %v307
    %v2810 = vmul.f32 %v2680, %v307
    %v2811 = vmul.f32 %v2683, %v307
    %v2812 = vmul.f32 %v2686, %v307
    %v2813 = vmul.f32 %v2689, %v307
    %v2814 = vmul.f32 %v2692, %v307
    %v2815 = vmul.f32 %v2695, %v307
    %v2816 = vmul.f32 %v2698, %v307
    %v2817 = vmul.f32 %v2701, %v307
    %v2818 = vmul.f32 %v2704, %v307
    %v2819 = vmul.f32 %v2707, %v307
    %v2820 = vmul.f32 %v2710, %v307
    %v2821 = vmul.f32 %v2713, %v307
    %v2822 = vmul.f32 %v2716, %v307
    %v2823 = vmul.f32 %v2719, %v307
    %v2824 = vmul.f32 %v2722, %v307
    %v2825 = vmul.f32 %v2725, %v307
    %v2826 = vmul.f32 %v2728, %v307
    %v2827 = vmul.f32 %v2731, %v307
    %v2828 = vmul.f32 %v2734, %v307
    %v2829 = vmul.f32 %v2737, %v307
    %v2830 = vmul.f32 %v2740, %v307
    %v2831 = vmul.f32 %v2743, %v307
    %v2832 = vmul.f32 %v2746, %v307
    %v2833 = vmul.f32 %v2749, %v307
    %v2834 = vmul.f32 %v2752, %v307
    %v2835 = vmul.f32 %v2755, %v307
    %v2836 = vmul.f32 %v2758, %v307
    %v2837 = vmul.f32 %v2761, %v307
    %v2838 = vmul.f32 %v2764, %v307
    %v2839 = vmul.f32 %v2767, %v307
    %v2840 = vmul.f32 %v2770, %v307
    %v2841 = vmul.f32 %v2773, %v307
    %v2842 = vmul.f32 %v2776, %v307
    %v2843 = vmul.f32 %v2779, %v307
    %v2844 = vmul.f32 %v2460, %v2460
    %v2845 = vmul.f32 %v2461, %v2461
    %v2846 = vmul.f32 %v2462, %v2462
    %v2847 = vmul.f32 %v2463, %v2463
    %v2848 = vmul.f32 %v2464, %v2464
    %v2849 = vmul.f32 %v2465, %v2465
    %v2850 = vmul.f32 %v2466, %v2466
    %v2851 = vmul.f32 %v2467, %v2467
    %v2852 = vmul.f32 %v2468, %v2468
    %v2853 = vmul.f32 %v2469, %v2469
    %v2854 = vmul.f32 %v2470, %v2470
    %v2855 = vmul.f32 %v2471, %v2471
    %v2856 = vmul.f32 %v2472, %v2472
    %v2857 = vmul.f32 %v2473, %v2473
    %v2858 = vmul.f32 %v2474, %v2474
    %v2859 = vmul.f32 %v2475, %v2475
    %v2860 = vmul.f32 %v2476, %v2476
    %v2861 = vmul.f32 %v2477, %v2477
    %v2862 = vmul.f32 %v2478, %v2478
    %v2863 = vmul.f32 %v2479, %v2479
    %v2864 = vmul.f32 %v2480, %v2480
    %v2865 = vmul.f32 %v2481, %v2481
    %v2866 = vmul.f32 %v2482, %v2482
    %v2867 = vmul.f32 %v2483, %v2483
    %v2868 = vmul.f32 %v2484, %v2484
    %v2869 = vmul.f32 %v2485, %v2485
    %v2870 = vmul.f32 %v2486, %v2486
    %v2871 = vmul.f32 %v2487, %v2487
    %v2872 = vmul.f32 %v2488, %v2488
    %v2873 = vmul.f32 %v2489, %v2489
    %v2874 = vmul.f32 %v2490, %v2490
    %v2875 = vmul.f32 %v2491, %v2491
    %v2876 = vmul.f32 %v2492, %v2492
    %v2877 = vmul.f32 %v2493, %v2493
    %v2878 = vmul.f32 %v2494, %v2494
    %v2879 = vmul.f32 %v2495, %v2495
    %v2880 = vmul.f32 %v2496, %v2496
    %v2881 = vmul.f32 %v2497, %v2497
    %v2882 = vmul.f32 %v2498, %v2498
    %v2883 = vmul.f32 %v2499, %v2499
    %v2884 = vmul.f32 %v2500, %v2500
    %v2885 = vmul.f32 %v2501, %v2501
    %v2886 = vmul.f32 %v2502, %v2502
    %v2887 = vmul.f32 %v2503, %v2503
    %v2888 = vmul.f32 %v2504, %v2504
    %v2889 = vmul.f32 %v2505, %v2505
    %v2890 = vmul.f32 %v2506, %v2506
    %v2891 = vmul.f32 %v2507, %v2507
    %v2892 = vmul.f32 %v2508, %v2508
    %v2893 = vmul.f32 %v2509, %v2509
    %v2894 = vmul.f32 %v2510, %v2510
    %v2895 = vmul.f32 %v2511, %v2511
    %v2896 = vmul.f32 %v2512, %v2512
    %v2897 = vmul.f32 %v2513, %v2513
    %v2898 = vmul.f32 %v2514, %v2514
    %v2899 = vmul.f32 %v2515, %v2515
    %v2900 = vmul.f32 %v2516, %v2516
    %v2901 = vmul.f32 %v2517, %v2517
    %v2902 = vmul.f32 %v2518, %v2518
    %v2903 = vmul.f32 %v2519, %v2519
    %v2904 = vmul.f32 %v2520, %v2520
    %v2905 = vmul.f32 %v2521, %v2521
    %v2906 = vmul.f32 %v2522, %v2522
    %v2907 = vmul.f32 %v2523, %v2523
    %v2908 = vsub.f32 %v2780, %v2844
    %v2909 = vsub.f32 %v2781, %v2845
    %v2910 = vsub.f32 %v2782, %v2846
    %v2911 = vsub.f32 %v2783, %v2847
    %v2912 = vsub.f32 %v2784, %v2848
    %v2913 = vsub.f32 %v2785, %v2849
    %v2914 = vsub.f32 %v2786, %v2850
    %v2915 = vsub.f32 %v2787, %v2851
    %v2916 = vsub.f32 %v2788, %v2852
    %v2917 = vsub.f32 %v2789, %v2853
    %v2918 = vsub.f32 %v2790, %v2854
    %v2919 = vsub.f32 %v2791, %v2855
    %v2920 = vsub.f32 %v2792, %v2856
    %v2921 = vsub.f32 %v2793, %v2857
    %v2922 = vsub.f32 %v2794, %v2858
    %v2923 = vsub.f32 %v2795, %v2859
    %v2924 = vsub.f32 %v2796, %v2860
    %v2925 = vsub.f32 %v2797, %v2861
    %v2926 = vsub.f32 %v2798, %v2862
    %v2927 = vsub.f32 %v2799, %v2863
    %v2928 = vsub.f32 %v2800, %v2864
    %v2929 = vsub.f32 %v2801, %v2865
    %v2930 = vsub.f32 %v2802, %v2866
    %v2931 = vsub.f32 %v2803, %v2867
    %v2932 = vsub.f32 %v2804, %v2868
    %v2933 = vsub.f32 %v2805, %v2869
    %v2934 = vsub.f32 %v2806, %v2870
    %v2935 = vsub.f32 %v2807, %v2871
    %v2936 = vsub.f32 %v2808, %v2872
    %v2937 = vsub.f32 %v2809, %v2873
    %v2938 = vsub.f32 %v2810, %v2874
    %v2939 = vsub.f32 %v2811, %v2875
    %v2940 = vsub.f32 %v2812, %v2876
    %v2941 = vsub.f32 %v2813, %v2877
    %v2942 = vsub.f32 %v2814, %v2878
    %v2943 = vsub.f32 %v2815, %v2879
    %v2944 = vsub.f32 %v2816, %v2880
    %v2945 = vsub.f32 %v2817, %v2881
    %v2946 = vsub.f32 %v2818, %v2882
    %v2947 = vsub.f32 %v2819, %v2883
    %v2948 = vsub.f32 %v2820, %v2884
    %v2949 = vsub.f32 %v2821, %v2885
    %v2950 = vsub.f32 %v2822, %v2886
    %v2951 = vsub.f32 %v2823, %v2887
    %v2952 = vsub.f32 %v2824, %v2888
    %v2953 = vsub.f32 %v2825, %v2889
    %v2954 = vsub.f32 %v2826, %v2890
    %v2955 = vsub.f32 %v2827, %v2891
    %v2956 = vsub.f32 %v2828, %v2892
    %v2957 = vsub.f32 %v2829, %v2893
    %v2958 = vsub.f32 %v2830, %v2894
    %v2959 = vsub.f32 %v2831, %v2895
    %v2960 = vsub.f32 %v2832, %v2896
    %v2961 = vsub.f32 %v2833, %v2897
    %v2962 = vsub.f32 %v2834, %v2898
    %v2963 = vsub.f32 %v2835, %v2899
    %v2964 = vsub.f32 %v2836, %v2900
    %v2965 = vsub.f32 %v2837, %v2901
    %v2966 = vsub.f32 %v2838, %v2902
    %v2967 = vsub.f32 %v2839, %v2903
    %v2968 = vsub.f32 %v2840, %v2904
    %v2969 = vsub.f32 %v2841, %v2905
    %v2970 = vsub.f32 %v2842, %v2906
    %v2971 = vsub.f32 %v2843, %v2907
    %v2972 = vsub.f32 %v2204, %v2460
    %v2973 = vsub.f32 %v2205, %v2461
    %v2974 = vsub.f32 %v2206, %v2462
    %v2975 = vsub.f32 %v2207, %v2463
    %v2976 = vsub.f32 %v2208, %v2464
    %v2977 = vsub.f32 %v2209, %v2465
    %v2978 = vsub.f32 %v2210, %v2466
    %v2979 = vsub.f32 %v2211, %v2467
    %v2980 = vsub.f32 %v2212, %v2468
    %v2981 = vsub.f32 %v2213, %v2469
    %v2982 = vsub.f32 %v2214, %v2470
    %v2983 = vsub.f32 %v2215, %v2471
    %v2984 = vsub.f32 %v2216, %v2472
    %v2985 = vsub.f32 %v2217, %v2473
    %v2986 = vsub.f32 %v2218, %v2474
    %v2987 = vsub.f32 %v2219, %v2475
    %v2988 = vsub.f32 %v2220, %v2476
    %v2989 = vsub.f32 %v2221, %v2477
    %v2990 = vsub.f32 %v2222, %v2478
    %v2991 = vsub.f32 %v2223, %v2479
    %v2992 = vsub.f32 %v2224, %v2480
    %v2993 = vsub.f32 %v2225, %v2481
    %v2994 = vsub.f32 %v2226, %v2482
    %v2995 = vsub.f32 %v2227, %v2483
    %v2996 = vsub.f32 %v2228, %v2484
    %v2997 = vsub.f32 %v2229, %v2485
    %v2998 = vsub.f32 %v2230, %v2486
    %v2999 = vsub.f32 %v2231, %v2487
    %v3000 = vsub.f32 %v2232, %v2488
    %v3001 = vsub.f32 %v2233, %v2489
    %v3002 = vsub.f32 %v2234, %v2490
    %v3003 = vsub.f32 %v2235, %v2491
    %v3004 = vsub.f32 %v2236, %v2492
    %v3005 = vsub.f32 %v2237, %v2493
    %v3006 = vsub.f32 %v2238, %v2494
    %v3007 = vsub.f32 %v2239, %v2495
    %v3008 = vsub.f32 %v2240, %v2496
    %v3009 = vsub.f32 %v2241, %v2497
    %v3010 = vsub.f32 %v2242, %v2498
    %v3011 = vsub.f32 %v2243, %v2499
    %v3012 = vsub.f32 %v2244, %v2500
    %v3013 = vsub.f32 %v2245, %v2501
    %v3014 = vsub.f32 %v2246, %v2502
    %v3015 = vsub.f32 %v2247, %v2503
    %v3016 = vsub.f32 %v2248, %v2504
    %v3017 = vsub.f32 %v2249, %v2505
    %v3018 = vsub.f32 %v2250, %v2506
    %v3019 = vsub.f32 %v2251, %v2507
    %v3020 = vsub.f32 %v2252, %v2508
    %v3021 = vsub.f32 %v2253, %v2509
    %v3022 = vsub.f32 %v2254, %v2510
    %v3023 = vsub.f32 %v2255, %v2511
    %v3024 = vsub.f32 %v2256, %v2512
    %v3025 = vsub.f32 %v2257, %v2513
    %v3026 = vsub.f32 %v2258, %v2514
    %v3027 = vsub.f32 %v2259, %v2515
    %v3028 = vsub.f32 %v2260, %v2516
    %v3029 = vsub.f32 %v2261, %v2517
    %v3030 = vsub.f32 %v2262, %v2518
    %v3031 = vsub.f32 %v2263, %v2519
    %v3032 = vsub.f32 %v2264, %v2520
    %v3033 = vsub.f32 %v2265, %v2521
    %v3034 = vsub.f32 %v2266, %v2522
    %v3035 = vsub.f32 %v2267, %v2523
    %v3036 = vadd.f32 %v2908, 1e-05
    %v3037 = vadd.f32 %v2909, 1e-05
    %v3038 = vadd.f32 %v2910, 1e-05
    %v3039 = vadd.f32 %v2911, 1e-05
    %v3040 = vadd.f32 %v2912, 1e-05
    %v3041 = vadd.f32 %v2913, 1e-05
    %v3042 = vadd.f32 %v2914, 1e-05
    %v3043 = vadd.f32 %v2915, 1e-05
    %v3044 = vadd.f32 %v2916, 1e-05
    %v3045 = vadd.f32 %v2917, 1e-05
    %v3046 = vadd.f32 %v2918, 1e-05
    %v3047 = vadd.f32 %v2919, 1e-05
    %v3048 = vadd.f32 %v2920, 1e-05
    %v3049 = vadd.f32 %v2921, 1e-05
    %v3050 = vadd.f32 %v2922, 1e-05
    %v3051 = vadd.f32 %v2923, 1e-05
    %v3052 = vadd.f32 %v2924, 1e-05
    %v3053 = vadd.f32 %v2925, 1e-05
    %v3054 = vadd.f32 %v2926, 1e-05
    %v3055 = vadd.f32 %v2927, 1e-05
    %v3056 = vadd.f32 %v2928, 1e-05
    %v3057 = vadd.f32 %v2929, 1e-05
    %v3058 = vadd.f32 %v2930, 1e-05
    %v3059 = vadd.f32 %v2931, 1e-05
    %v3060 = vadd.f32 %v2932, 1e-05
    %v3061 = vadd.f32 %v2933, 1e-05
    %v3062 = vadd.f32 %v2934, 1e-05
    %v3063 = vadd.f32 %v2935, 1e-05
    %v3064 = vadd.f32 %v2936, 1e-05
    %v3065 = vadd.f32 %v2937, 1e-05
    %v3066 = vadd.f32 %v2938, 1e-05
    %v3067 = vadd.f32 %v2939, 1e-05
    %v3068 = vadd.f32 %v2940, 1e-05
    %v3069 = vadd.f32 %v2941, 1e-05
    %v3070 = vadd.f32 %v2942, 1e-05
    %v3071 = vadd.f32 %v2943, 1e-05
    %v3072 = vadd.f32 %v2944, 1e-05
    %v3073 = vadd.f32 %v2945, 1e-05
    %v3074 = vadd.f32 %v2946, 1e-05
    %v3075 = vadd.f32 %v2947, 1e-05
    %v3076 = vadd.f32 %v2948, 1e-05
    %v3077 = vadd.f32 %v2949, 1e-05
    %v3078 = vadd.f32 %v2950, 1e-05
    %v3079 = vadd.f32 %v2951, 1e-05
    %v3080 = vadd.f32 %v2952, 1e-05
    %v3081 = vadd.f32 %v2953, 1e-05
    %v3082 = vadd.f32 %v2954, 1e-05
    %v3083 = vadd.f32 %v2955, 1e-05
    %v3084 = vadd.f32 %v2956, 1e-05
    %v3085 = vadd.f32 %v2957, 1e-05
    %v3086 = vadd.f32 %v2958, 1e-05
    %v3087 = vadd.f32 %v2959, 1e-05
    %v3088 = vadd.f32 %v2960, 1e-05
    %v3089 = vadd.f32 %v2961, 1e-05
    %v3090 = vadd.f32 %v2962, 1e-05
    %v3091 = vadd.f32 %v2963, 1e-05
    %v3092 = vadd.f32 %v2964, 1e-05
    %v3093 = vadd.f32 %v2965, 1e-05
    %v3094 = vadd.f32 %v2966, 1e-05
    %v3095 = vadd.f32 %v2967, 1e-05
    %v3096 = vadd.f32 %v2968, 1e-05
    %v3097 = vadd.f32 %v2969, 1e-05
    %v3098 = vadd.f32 %v2970, 1e-05
    %v3099 = vadd.f32 %v2971, 1e-05
    %v3100 = vrsqrt.pop %v3036
    %v3101 = vrsqrt.pop %v3037
    %v3102 = vrsqrt.pop %v3038
    %v3103 = vrsqrt.pop %v3039
    %v3104 = vrsqrt.pop %v3040
    %v3105 = vrsqrt.pop %v3041
    %v3106 = vrsqrt.pop %v3042
    %v3107 = vrsqrt.pop %v3043
    %v3108 = vrsqrt.pop %v3044
    %v3109 = vrsqrt.pop %v3045
    %v3110 = vrsqrt.pop %v3046
    %v3111 = vrsqrt.pop %v3047
    %v3112 = vrsqrt.pop %v3048
    %v3113 = vrsqrt.pop %v3049
    %v3114 = vrsqrt.pop %v3050
    %v3115 = vrsqrt.pop %v3051
    %v3116 = vrsqrt.pop %v3052
    %v3117 = vrsqrt.pop %v3053
    %v3118 = vrsqrt.pop %v3054
    %v3119 = vrsqrt.pop %v3055
    %v3120 = vrsqrt.pop %v3056
    %v3121 = vrsqrt.pop %v3057
    %v3122 = vrsqrt.pop %v3058
    %v3123 = vrsqrt.pop %v3059
    %v3124 = vrsqrt.pop %v3060
    %v3125 = vrsqrt.pop %v3061
    %v3126 = vrsqrt.pop %v3062
    %v3127 = vrsqrt.pop %v3063
    %v3128 = vrsqrt.pop %v3064
    %v3129 = vrsqrt.pop %v3065
    %v3130 = vrsqrt.pop %v3066
    %v3131 = vrsqrt.pop %v3067
    %v3132 = vrsqrt.pop %v3068
    %v3133 = vrsqrt.pop %v3069
    %v3134 = vrsqrt.pop %v3070
    %v3135 = vrsqrt.pop %v3071
    %v3136 = vrsqrt.pop %v3072
    %v3137 = vrsqrt.pop %v3073
    %v3138 = vrsqrt.pop %v3074
    %v3139 = vrsqrt.pop %v3075
    %v3140 = vrsqrt.pop %v3076
    %v3141 = vrsqrt.pop %v3077
    %v3142 = vrsqrt.pop %v3078
    %v3143 = vrsqrt.pop %v3079
    %v3144 = vrsqrt.pop %v3080
    %v3145 = vrsqrt.pop %v3081
    %v3146 = vrsqrt.pop %v3082
    %v3147 = vrsqrt.pop %v3083
    %v3148 = vrsqrt.pop %v3084
    %v3149 = vrsqrt.pop %v3085
    %v3150 = vrsqrt.pop %v3086
    %v3151 = vrsqrt.pop %v3087
    %v3152 = vrsqrt.pop %v3088
    %v3153 = vrsqrt.pop %v3089
    %v3154 = vrsqrt.pop %v3090
    %v3155 = vrsqrt.pop %v3091
    %v3156 = vrsqrt.pop %v3092
    %v3157 = vrsqrt.pop %v3093
    %v3158 = vrsqrt.pop %v3094
    %v3159 = vrsqrt.pop %v3095
    %v3160 = vrsqrt.pop %v3096
    %v3161 = vrsqrt.pop %v3097
    %v3162 = vrsqrt.pop %v3098
    %v3163 = vrsqrt.pop %v3099
    %v3164 = vmul.f32 %v2972, %v3100
    %v3165 = vmul.f32 %v2973, %v3101
    %v3166 = vmul.f32 %v2974, %v3102
    %v3167 = vmul.f32 %v2975, %v3103
    %v3168 = vmul.f32 %v2976, %v3104
    %v3169 = vmul.f32 %v2977, %v3105
    %v3170 = vmul.f32 %v2978, %v3106
    %v3171 = vmul.f32 %v2979, %v3107
    %v3172 = vmul.f32 %v2980, %v3108
    %v3173 = vmul.f32 %v2981, %v3109
    %v3174 = vmul.f32 %v2982, %v3110
    %v3175 = vmul.f32 %v2983, %v3111
    %v3176 = vmul.f32 %v2984, %v3112
    %v3177 = vmul.f32 %v2985, %v3113
    %v3178 = vmul.f32 %v2986, %v3114
    %v3179 = vmul.f32 %v2987, %v3115
    %v3180 = vmul.f32 %v2988, %v3116
    %v3181 = vmul.f32 %v2989, %v3117
    %v3182 = vmul.f32 %v2990, %v3118
    %v3183 = vmul.f32 %v2991, %v3119
    %v3184 = vmul.f32 %v2992, %v3120
    %v3185 = vmul.f32 %v2993, %v3121
    %v3186 = vmul.f32 %v2994, %v3122
    %v3187 = vmul.f32 %v2995, %v3123
    %v3188 = vmul.f32 %v2996, %v3124
    %v3189 = vmul.f32 %v2997, %v3125
    %v3190 = vmul.f32 %v2998, %v3126
    %v3191 = vmul.f32 %v2999, %v3127
    %v3192 = vmul.f32 %v3000, %v3128
    %v3193 = vmul.f32 %v3001, %v3129
    %v3194 = vmul.f32 %v3002, %v3130
    %v3195 = vmul.f32 %v3003, %v3131
    %v3196 = vmul.f32 %v3004, %v3132
    %v3197 = vmul.f32 %v3005, %v3133
    %v3198 = vmul.f32 %v3006, %v3134
    %v3199 = vmul.f32 %v3007, %v3135
    %v3200 = vmul.f32 %v3008, %v3136
    %v3201 = vmul.f32 %v3009, %v3137
    %v3202 = vmul.f32 %v3010, %v3138
    %v3203 = vmul.f32 %v3011, %v3139
    %v3204 = vmul.f32 %v3012, %v3140
    %v3205 = vmul.f32 %v3013, %v3141
    %v3206 = vmul.f32 %v3014, %v3142
    %v3207 = vmul.f32 %v3015, %v3143
    %v3208 = vmul.f32 %v3016, %v3144
    %v3209 = vmul.f32 %v3017, %v3145
    %v3210 = vmul.f32 %v3018, %v3146
    %v3211 = vmul.f32 %v3019, %v3147
    %v3212 = vmul.f32 %v3020, %v3148
    %v3213 = vmul.f32 %v3021, %v3149
    %v3214 = vmul.f32 %v3022, %v3150
    %v3215 = vmul.f32 %v3023, %v3151
    %v3216 = vmul.f32 %v3024, %v3152
    %v3217 = vmul.f32 %v3025, %v3153
    %v3218 = vmul.f32 %v3026, %v3154
    %v3219 = vmul.f32 %v3027, %v3155
    %v3220 = vmul.f32 %v3028, %v3156
    %v3221 = vmul.f32 %v3029, %v3157
    %v3222 = vmul.f32 %v3030, %v3158
    %v3223 = vmul.f32 %v3031, %v3159
    %v3224 = vmul.f32 %v3032, %v3160
    %v3225 = vmul.f32 %v3033, %v3161
    %v3226 = vmul.f32 %v3034, %v3162
    %v3227 = vmul.f32 %v3035, %v3163
    %v3228 = vmul.f32 %v3164, %v1080
    %v3229 = vmul.f32 %v3165, %v1080
    %v3230 = vmul.f32 %v3166, %v1080
    %v3231 = vmul.f32 %v3167, %v1080
    %v3232 = vmul.f32 %v3168, %v1080
    %v3233 = vmul.f32 %v3169, %v1080
    %v3234 = vmul.f32 %v3170, %v1080
    %v3235 = vmul.f32 %v3171, %v1080
    %v3236 = vmul.f32 %v3172, %v1080
    %v3237 = vmul.f32 %v3173, %v1080
    %v3238 = vmul.f32 %v3174, %v1080
    %v3239 = vmul.f32 %v3175, %v1080
    %v3240 = vmul.f32 %v3176, %v1080
    %v3241 = vmul.f32 %v3177, %v1080
    %v3242 = vmul.f32 %v3178, %v1080
    %v3243 = vmul.f32 %v3179, %v1080
    %v3244 = vmul.f32 %v3180, %v1080
    %v3245 = vmul.f32 %v3181, %v1080
    %v3246 = vmul.f32 %v3182, %v1080
    %v3247 = vmul.f32 %v3183, %v1080
    %v3248 = vmul.f32 %v3184, %v1080
    %v3249 = vmul.f32 %v3185, %v1080
    %v3250 = vmul.f32 %v3186, %v1080
    %v3251 = vmul.f32 %v3187, %v1080
    %v3252 = vmul.f32 %v3188, %v1080
    %v3253 = vmul.f32 %v3189, %v1080
    %v3254 = vmul.f32 %v3190, %v1080
    %v3255 = vmul.f32 %v3191, %v1080
    %v3256 = vmul.f32 %v3192, %v1080
    %v3257 = vmul.f32 %v3193, %v1080
    %v3258 = vmul.f32 %v3194, %v1080
    %v3259 = vmul.f32 %v3195, %v1080
    %v3260 = vmul.f32 %v3196, %v1080
    %v3261 = vmul.f32 %v3197, %v1080
    %v3262 = vmul.f32 %v3198, %v1080
    %v3263 = vmul.f32 %v3199, %v1080
    %v3264 = vmul.f32 %v3200, %v1080
    %v3265 = vmul.f32 %v3201, %v1080
    %v3266 = vmul.f32 %v3202, %v1080
    %v3267 = vmul.f32 %v3203, %v1080
    %v3268 = vmul.f32 %v3204, %v1080
    %v3269 = vmul.f32 %v3205, %v1080
    %v3270 = vmul.f32 %v3206, %v1080
    %v3271 = vmul.f32 %v3207, %v1080
    %v3272 = vmul.f32 %v3208, %v1080
    %v3273 = vmul.f32 %v3209, %v1080
    %v3274 = vmul.f32 %v3210, %v1080
    %v3275 = vmul.f32 %v3211, %v1080
    %v3276 = vmul.f32 %v3212, %v1080
    %v3277 = vmul.f32 %v3213, %v1080
    %v3278 = vmul.f32 %v3214, %v1080
    %v3279 = vmul.f32 %v3215, %v1080
    %v3280 = vmul.f32 %v3216, %v1080
    %v3281 = vmul.f32 %v3217, %v1080
    %v3282 = vmul.f32 %v3218, %v1080
    %v3283 = vmul.f32 %v3219, %v1080
    %v3284 = vmul.f32 %v3220, %v1080
    %v3285 = vmul.f32 %v3221, %v1080
    %v3286 = vmul.f32 %v3222, %v1080
    %v3287 = vmul.f32 %v3223, %v1080
    %v3288 = vmul.f32 %v3224, %v1080
    %v3289 = vmul.f32 %v3225, %v1080
    %v3290 = vmul.f32 %v3226, %v1080
    %v3291 = vmul.f32 %v3227, %v1080
    %v3292 = vadd.f32 %v3228, %v1150
    %v3293 = vadd.f32 %v3229, %v1150
    %v3294 = vadd.f32 %v3230, %v1150
    %v3295 = vadd.f32 %v3231, %v1150
    %v3296 = vadd.f32 %v3232, %v1150
    %v3297 = vadd.f32 %v3233, %v1150
    %v3298 = vadd.f32 %v3234, %v1150
    %v3299 = vadd.f32 %v3235, %v1150
    %v3300 = vadd.f32 %v3236, %v1150
    %v3301 = vadd.f32 %v3237, %v1150
    %v3302 = vadd.f32 %v3238, %v1150
    %v3303 = vadd.f32 %v3239, %v1150
    %v3304 = vadd.f32 %v3240, %v1150
    %v3305 = vadd.f32 %v3241, %v1150
    %v3306 = vadd.f32 %v3242, %v1150
    %v3307 = vadd.f32 %v3243, %v1150
    %v3308 = vadd.f32 %v3244, %v1150
    %v3309 = vadd.f32 %v3245, %v1150
    %v3310 = vadd.f32 %v3246, %v1150
    %v3311 = vadd.f32 %v3247, %v1150
    %v3312 = vadd.f32 %v3248, %v1150
    %v3313 = vadd.f32 %v3249, %v1150
    %v3314 = vadd.f32 %v3250, %v1150
    %v3315 = vadd.f32 %v3251, %v1150
    %v3316 = vadd.f32 %v3252, %v1150
    %v3317 = vadd.f32 %v3253, %v1150
    %v3318 = vadd.f32 %v3254, %v1150
    %v3319 = vadd.f32 %v3255, %v1150
    %v3320 = vadd.f32 %v3256, %v1150
    %v3321 = vadd.f32 %v3257, %v1150
    %v3322 = vadd.f32 %v3258, %v1150
    %v3323 = vadd.f32 %v3259, %v1150
    %v3324 = vadd.f32 %v3260, %v1150
    %v3325 = vadd.f32 %v3261, %v1150
    %v3326 = vadd.f32 %v3262, %v1150
    %v3327 = vadd.f32 %v3263, %v1150
    %v3328 = vadd.f32 %v3264, %v1150
    %v3329 = vadd.f32 %v3265, %v1150
    %v3330 = vadd.f32 %v3266, %v1150
    %v3331 = vadd.f32 %v3267, %v1150
    %v3332 = vadd.f32 %v3268, %v1150
    %v3333 = vadd.f32 %v3269, %v1150
    %v3334 = vadd.f32 %v3270, %v1150
    %v3335 = vadd.f32 %v3271, %v1150
    %v3336 = vadd.f32 %v3272, %v1150
    %v3337 = vadd.f32 %v3273, %v1150
    %v3338 = vadd.f32 %v3274, %v1150
    %v3339 = vadd.f32 %v3275, %v1150
    %v3340 = vadd.f32 %v3276, %v1150
    %v3341 = vadd.f32 %v3277, %v1150
    %v3342 = vadd.f32 %v3278, %v1150
    %v3343 = vadd.f32 %v3279, %v1150
    %v3344 = vadd.f32 %v3280, %v1150
    %v3345 = vadd.f32 %v3281, %v1150
    %v3346 = vadd.f32 %v3282, %v1150
    %v3347 = vadd.f32 %v3283, %v1150
    %v3348 = vadd.f32 %v3284, %v1150
    %v3349 = vadd.f32 %v3285, %v1150
    %v3350 = vadd.f32 %v3286, %v1150
    %v3351 = vadd.f32 %v3287, %v1150
    %v3352 = vadd.f32 %v3288, %v1150
    %v3353 = vadd.f32 %v3289, %v1150
    %v3354 = vadd.f32 %v3290, %v1150
    %v3355 = vadd.f32 %v3291, %v1150
    %v3356 = vpack.c.bf16 %v3293, %v3292
    %v3357 = vpack.c.bf16 %v3295, %v3294
    %v3358 = vpack.c.bf16 %v3297, %v3296
    %v3359 = vpack.c.bf16 %v3299, %v3298
    %v3360 = vpack.c.bf16 %v3301, %v3300
    %v3361 = vpack.c.bf16 %v3303, %v3302
    %v3362 = vpack.c.bf16 %v3305, %v3304
    %v3363 = vpack.c.bf16 %v3307, %v3306
    %v3364 = vpack.c.bf16 %v3309, %v3308
    %v3365 = vpack.c.bf16 %v3311, %v3310
    %v3366 = vpack.c.bf16 %v3313, %v3312
    %v3367 = vpack.c.bf16 %v3315, %v3314
    %v3368 = vpack.c.bf16 %v3317, %v3316
    %v3369 = vpack.c.bf16 %v3319, %v3318
    %v3370 = vpack.c.bf16 %v3321, %v3320
    %v3371 = vpack.c.bf16 %v3323, %v3322
    %v3372 = vpack.c.bf16 %v3325, %v3324
    %v3373 = vpack.c.bf16 %v3327, %v3326
    %v3374 = vpack.c.bf16 %v3329, %v3328
    %v3375 = vpack.c.bf16 %v3331, %v3330
    %v3376 = vpack.c.bf16 %v3333, %v3332
    %v3377 = vpack.c.bf16 %v3335, %v3334
    %v3378 = vpack.c.bf16 %v3337, %v3336
    %v3379 = vpack.c.bf16 %v3339, %v3338
    %v3380 = vpack.c.bf16 %v3341, %v3340
    %v3381 = vpack.c.bf16 %v3343, %v3342
    %v3382 = vpack.c.bf16 %v3345, %v3344
    %v3383 = vpack.c.bf16 %v3347, %v3346
    %v3384 = vpack.c.bf16 %v3349, %v3348
    %v3385 = vpack.c.bf16 %v3351, %v3350
    %v3386 = vpack.c.bf16 %v3353, %v3352
    %v3387 = vpack.c.bf16 %v3355, %v3354
    %v3388 = vld [vmem:[%s5] sm:$0xf]
    %v3389 = vld [vmem:[%s5 + $0x4] sm:$0xf]
    %v3390 = vld [vmem:[%s5 + $0x8] sm:$0xf]
    %v3391 = vld [vmem:[%s5 + $0xc] sm:$0xf]
    %v3392 = vld [vmem:[%s6] sm:$0x1]
    %v3394 = vlaneseq
    %v3395 = vshrl.u32 %v3394, 7
    %v3396 = vsub.s32 0, %v3395
    %v3397 = vrot.slane %v3392, %v3396
    %v3403 = vunpack.c.l.b16 %v3388
    %v3404 = vunpack.c.l.b16 %v3389
    %v3405 = vunpack.c.l.b16 %v3390
    %v3406 = vunpack.c.l.b16 %v3391
    %v3407 = vpack.c.b16 %v3404, %v3403
    %v3408 = vpack.c.b16 %v3406, %v3405
    %v3412 = vsel %vm114, %v3356, 0
    %v3415 = vsel %vm114, %v3357, 0
    %v3418 = vsel %vm114, %v3358, 0
    %v3421 = vsel %vm114, %v3359, 0
    %v3424 = vsel %vm114, %v3360, 0
    %v3427 = vsel %vm114, %v3361, 0
    %v3430 = vsel %vm114, %v3362, 0
    %v3433 = vsel %vm114, %v3363, 0
    %v3436 = vsel %vm114, %v3364, 0
    %v3439 = vsel %vm114, %v3365, 0
    %v3442 = vsel %vm114, %v3366, 0
    %v3445 = vsel %vm114, %v3367, 0
    %v3448 = vsel %vm114, %v3368, 0
    %v3451 = vsel %vm114, %v3369, 0
    %v3454 = vsel %vm114, %v3370, 0
    %v3457 = vsel %vm114, %v3371, 0
    %v3460 = vsel %vm114, %v3372, 0
    %v3463 = vsel %vm114, %v3373, 0
    %v3466 = vsel %vm114, %v3374, 0
    %v3469 = vsel %vm114, %v3375, 0
    %v3472 = vsel %vm114, %v3376, 0
    %v3475 = vsel %vm114, %v3377, 0
    %v3478 = vsel %vm114, %v3378, 0
    %v3481 = vsel %vm114, %v3379, 0
    %v3484 = vsel %vm114, %v3380, 0
    %v3487 = vsel %vm114, %v3381, 0
    %v3490 = vsel %vm114, %v3382, 0
    %v3493 = vsel %vm114, %v3383, 0
    %v3496 = vsel %vm114, %v3384, 0
    %v3499 = vsel %vm114, %v3385, 0
    %v3502 = vsel %vm114, %v3386, 0
    %v3505 = vsel %vm114, %v3387, 0
    %3507 = vmatprep.subr.bf16.mxu0 0
    %3508 = vmatpush1.bf16.msra.mxu0 %v3407
    %3509 = vmatprep.subr.bf16.mxu0 0
    %3510 = vmatpush1.bf16.msra.mxu0 %v3408
    %3511 = vmatprep.subr.bf16.mxu0 0
    %3512 = vmatpush1.bf16.msra.mxu0 0
    %3513 = vmatprep.subr.bf16.mxu0 0
    %3514 = vmatpush1.bf16.msra.mxu0 0
    %3515 = vmatprep.subr.bf16.mxu0 0
    %3516 = vmatpush1.bf16.msra.mxu0 0
    %3517 = vmatprep.subr.bf16.mxu0 0
    %3518 = vmatpush1.bf16.msra.mxu0 0
    %3519 = vmatprep.subr.bf16.mxu0 0
    %3520 = vmatpush1.bf16.msra.mxu0 0
    %3521 = vmatprep.subr.bf16.mxu0 0
    %3522 = vmatpush1.bf16.msra.mxu0 0
    %3523 = vmatprep.subr.bf16.mxu0 0
    %3524 = vmatpush1.bf16.msra.mxu0 0
    %3525 = vmatprep.subr.bf16.mxu0 0
    %3526 = vmatpush1.bf16.msra.mxu0 0
    %3527 = vmatprep.subr.bf16.mxu0 0
    %3528 = vmatpush1.bf16.msra.mxu0 0
    %3529 = vmatprep.subr.bf16.mxu0 0
    %3530 = vmatpush1.bf16.msra.mxu0 0
    %3531 = vmatprep.subr.bf16.mxu0 0
    %3532 = vmatpush1.bf16.msra.mxu0 0
    %3533 = vmatprep.subr.bf16.mxu0 0
    %3534 = vmatpush1.bf16.msra.mxu0 0
    %3535 = vmatprep.subr.bf16.mxu0 0
    %3536 = vmatpush1.bf16.msra.mxu0 0
    %3537 = vmatprep.subr.bf16.mxu0 0
    %3538 = vmatpush1.bf16.msra.mxu0 0
    %3539 = vmatprep.mubr.bf16.mxu0 0
    %3540 = vmatmul.mubr.bf16.gmra.mrb[0].mxu0 %v3412
    %v3541 = vpop.f32.mrb[0].mxu0
    %v3542 = vadd.f32 %v3397, %v3541
    %v3543 = vpop.f32.mrb[0].mxu0
    %v3544 = vpop.f32.mrb[0].mxu0
    %v3545 = vadd.f32 %v3397, %v3544
    %v3546 = vpop.f32.mrb[0].mxu0
    %3547 = vmatprep.mubr.bf16.mxu0 0
    %3548 = vmatmul.mubr.bf16.gmra.mrb[0].mxu0 %v3415
    %v3549 = vpop.f32.mrb[0].mxu0
    %v3550 = vadd.f32 %v3397, %v3549
    %v3551 = vpop.f32.mrb[0].mxu0
    %v3552 = vpop.f32.mrb[0].mxu0
    %v3553 = vadd.f32 %v3397, %v3552
    %v3554 = vpop.f32.mrb[0].mxu0
    %3555 = vmatprep.mubr.bf16.mxu0 0
    %3556 = vmatmul.mubr.bf16.gmra.mrb[0].mxu0 %v3418
    %v3557 = vpop.f32.mrb[0].mxu0
    %v3558 = vadd.f32 %v3397, %v3557
    %v3559 = vpop.f32.mrb[0].mxu0
    %v3560 = vpop.f32.mrb[0].mxu0
    %v3561 = vadd.f32 %v3397, %v3560
    %v3562 = vpop.f32.mrb[0].mxu0
    %3563 = vmatprep.mubr.bf16.mxu0 0
    %3564 = vmatmul.mubr.bf16.gmra.mrb[0].mxu0 %v3421
    %v3565 = vpop.f32.mrb[0].mxu0
    %v3566 = vadd.f32 %v3397, %v3565
    %v3567 = vpop.f32.mrb[0].mxu0
    %v3568 = vpop.f32.mrb[0].mxu0
    %v3569 = vadd.f32 %v3397, %v3568
    %v3570 = vpop.f32.mrb[0].mxu0
    %3571 = vmatprep.mubr.bf16.mxu0 0
    %3572 = vmatmul.mubr.bf16.gmra.mrb[0].mxu0 %v3424
    %v3573 = vpop.f32.mrb[0].mxu0
    %v3574 = vadd.f32 %v3397, %v3573
    %v3575 = vpop.f32.mrb[0].mxu0
    %v3576 = vpop.f32.mrb[0].mxu0
    %v3577 = vadd.f32 %v3397, %v3576
    %v3578 = vpop.f32.mrb[0].mxu0
    %3579 = vmatprep.mubr.bf16.mxu0 0
    %3580 = vmatmul.mubr.bf16.gmra.mrb[0].mxu0 %v3427
    %v3581 = vpop.f32.mrb[0].mxu0
    %v3582 = vadd.f32 %v3397, %v3581
    %v3583 = vpop.f32.mrb[0].mxu0
    %v3584 = vpop.f32.mrb[0].mxu0
    %v3585 = vadd.f32 %v3397, %v3584
    %v3586 = vpop.f32.mrb[0].mxu0
    %3587 = vmatprep.mubr.bf16.mxu0 0
    %3588 = vmatmul.mubr.bf16.gmra.mrb[0].mxu0 %v3430
    %v3589 = vpop.f32.mrb[0].mxu0
    %v3590 = vadd.f32 %v3397, %v3589
    %v3591 = vpop.f32.mrb[0].mxu0
    %v3592 = vpop.f32.mrb[0].mxu0
    %v3593 = vadd.f32 %v3397, %v3592
    %v3594 = vpop.f32.mrb[0].mxu0
    %3595 = vmatprep.mubr.bf16.mxu0 0
    %3596 = vmatmul.mubr.bf16.gmra.mrb[0].mxu0 %v3433
    %v3597 = vpop.f32.mrb[0].mxu0
    %v3598 = vadd.f32 %v3397, %v3597
    %v3599 = vpop.f32.mrb[0].mxu0
    %v3600 = vpop.f32.mrb[0].mxu0
    %v3601 = vadd.f32 %v3397, %v3600
    %v3602 = vpop.f32.mrb[0].mxu0
    %3603 = vmatprep.mubr.bf16.mxu0 0
    %3604 = vmatmul.mubr.bf16.gmra.mrb[0].mxu0 %v3436
    %v3605 = vpop.f32.mrb[0].mxu0
    %v3606 = vadd.f32 %v3397, %v3605
    %v3607 = vpop.f32.mrb[0].mxu0
    %v3608 = vpop.f32.mrb[0].mxu0
    %v3609 = vadd.f32 %v3397, %v3608
    %v3610 = vpop.f32.mrb[0].mxu0
    %3611 = vmatprep.mubr.bf16.mxu0 0
    %3612 = vmatmul.mubr.bf16.gmra.mrb[0].mxu0 %v3439
    %v3613 = vpop.f32.mrb[0].mxu0
    %v3614 = vadd.f32 %v3397, %v3613
    %v3615 = vpop.f32.mrb[0].mxu0
    %v3616 = vpop.f32.mrb[0].mxu0
    %v3617 = vadd.f32 %v3397, %v3616
    %v3618 = vpop.f32.mrb[0].mxu0
    %3619 = vmatprep.mubr.bf16.mxu0 0
    %3620 = vmatmul.mubr.bf16.gmra.mrb[0].mxu0 %v3442
    %v3621 = vpop.f32.mrb[0].mxu0
    %v3622 = vadd.f32 %v3397, %v3621
    %v3623 = vpop.f32.mrb[0].mxu0
    %v3624 = vpop.f32.mrb[0].mxu0
    %v3625 = vadd.f32 %v3397, %v3624
    %v3626 = vpop.f32.mrb[0].mxu0
    %3627 = vmatprep.mubr.bf16.mxu0 0
    %3628 = vmatmul.mubr.bf16.gmra.mrb[0].mxu0 %v3445
    %v3629 = vpop.f32.mrb[0].mxu0
    %v3630 = vadd.f32 %v3397, %v3629
    %v3631 = vpop.f32.mrb[0].mxu0
    %v3632 = vpop.f32.mrb[0].mxu0
    %v3633 = vadd.f32 %v3397, %v3632
    %v3634 = vpop.f32.mrb[0].mxu0
    %3635 = vmatprep.mubr.bf16.mxu0 0
    %3636 = vmatmul.mubr.bf16.gmra.mrb[0].mxu0 %v3448
    %v3637 = vpop.f32.mrb[0].mxu0
    %v3638 = vadd.f32 %v3397, %v3637
    %v3639 = vpop.f32.mrb[0].mxu0
    %v3640 = vpop.f32.mrb[0].mxu0
    %v3641 = vadd.f32 %v3397, %v3640
    %v3642 = vpop.f32.mrb[0].mxu0
    %3643 = vmatprep.mubr.bf16.mxu0 0
    %3644 = vmatmul.mubr.bf16.gmra.mrb[0].mxu0 %v3451
    %v3645 = vpop.f32.mrb[0].mxu0
    %v3646 = vadd.f32 %v3397, %v3645
    %v3647 = vpop.f32.mrb[0].mxu0
    %v3648 = vpop.f32.mrb[0].mxu0
    %v3649 = vadd.f32 %v3397, %v3648
    %v3650 = vpop.f32.mrb[0].mxu0
    %3651 = vmatprep.mubr.bf16.mxu0 0
    %3652 = vmatmul.mubr.bf16.gmra.mrb[0].mxu0 %v3454
    %v3653 = vpop.f32.mrb[0].mxu0
    %v3654 = vadd.f32 %v3397, %v3653
    %v3655 = vpop.f32.mrb[0].mxu0
    %v3656 = vpop.f32.mrb[0].mxu0
    %v3657 = vadd.f32 %v3397, %v3656
    %v3658 = vpop.f32.mrb[0].mxu0
    %3659 = vmatprep.mubr.bf16.mxu0 0
    %3660 = vmatmul.mubr.bf16.gmra.mrb[0].mxu0 %v3457
    %v3661 = vpop.f32.mrb[0].mxu0
    %v3662 = vadd.f32 %v3397, %v3661
    %v3663 = vpop.f32.mrb[0].mxu0
    %v3664 = vpop.f32.mrb[0].mxu0
    %v3665 = vadd.f32 %v3397, %v3664
    %v3666 = vpop.f32.mrb[0].mxu0
    %3667 = vmatprep.mubr.bf16.mxu0 0
    %3668 = vmatmul.mubr.bf16.gmra.mrb[0].mxu0 %v3460
    %v3669 = vpop.f32.mrb[0].mxu0
    %v3670 = vadd.f32 %v3397, %v3669
    %v3671 = vpop.f32.mrb[0].mxu0
    %v3672 = vpop.f32.mrb[0].mxu0
    %v3673 = vadd.f32 %v3397, %v3672
    %v3674 = vpop.f32.mrb[0].mxu0
    %3675 = vmatprep.mubr.bf16.mxu0 0
    %3676 = vmatmul.mubr.bf16.gmra.mrb[0].mxu0 %v3463
    %v3677 = vpop.f32.mrb[0].mxu0
    %v3678 = vadd.f32 %v3397, %v3677
    %v3679 = vpop.f32.mrb[0].mxu0
    %v3680 = vpop.f32.mrb[0].mxu0
    %v3681 = vadd.f32 %v3397, %v3680
    %v3682 = vpop.f32.mrb[0].mxu0
    %3683 = vmatprep.mubr.bf16.mxu0 0
    %3684 = vmatmul.mubr.bf16.gmra.mrb[0].mxu0 %v3466
    %v3685 = vpop.f32.mrb[0].mxu0
    %v3686 = vadd.f32 %v3397, %v3685
    %v3687 = vpop.f32.mrb[0].mxu0
    %v3688 = vpop.f32.mrb[0].mxu0
    %v3689 = vadd.f32 %v3397, %v3688
    %v3690 = vpop.f32.mrb[0].mxu0
    %3691 = vmatprep.mubr.bf16.mxu0 0
    %3692 = vmatmul.mubr.bf16.gmra.mrb[0].mxu0 %v3469
    %v3693 = vpop.f32.mrb[0].mxu0
    %v3694 = vadd.f32 %v3397, %v3693
    %v3695 = vpop.f32.mrb[0].mxu0
    %v3696 = vpop.f32.mrb[0].mxu0
    %v3697 = vadd.f32 %v3397, %v3696
    %v3698 = vpop.f32.mrb[0].mxu0
    %3699 = vmatprep.mubr.bf16.mxu0 0
    %3700 = vmatmul.mubr.bf16.gmra.mrb[0].mxu0 %v3472
    %v3701 = vpop.f32.mrb[0].mxu0
    %v3702 = vadd.f32 %v3397, %v3701
    %v3703 = vpop.f32.mrb[0].mxu0
    %v3704 = vpop.f32.mrb[0].mxu0
    %v3705 = vadd.f32 %v3397, %v3704
    %v3706 = vpop.f32.mrb[0].mxu0
    %3707 = vmatprep.mubr.bf16.mxu0 0
    %3708 = vmatmul.mubr.bf16.gmra.mrb[0].mxu0 %v3475
    %v3709 = vpop.f32.mrb[0].mxu0
    %v3710 = vadd.f32 %v3397, %v3709
    %v3711 = vpop.f32.mrb[0].mxu0
    %v3712 = vpop.f32.mrb[0].mxu0
    %v3713 = vadd.f32 %v3397, %v3712
    %v3714 = vpop.f32.mrb[0].mxu0
    %3715 = vmatprep.mubr.bf16.mxu0 0
    %3716 = vmatmul.mubr.bf16.gmra.mrb[0].mxu0 %v3478
    %v3717 = vpop.f32.mrb[0].mxu0
    %v3718 = vadd.f32 %v3397, %v3717
    %v3719 = vpop.f32.mrb[0].mxu0
    %v3720 = vpop.f32.mrb[0].mxu0
    %v3721 = vadd.f32 %v3397, %v3720
    %v3722 = vpop.f32.mrb[0].mxu0
    %3723 = vmatprep.mubr.bf16.mxu0 0
    %3724 = vmatmul.mubr.bf16.gmra.mrb[0].mxu0 %v3481
    %v3725 = vpop.f32.mrb[0].mxu0
    %v3726 = vadd.f32 %v3397, %v3725
    %v3727 = vpop.f32.mrb[0].mxu0
    %v3728 = vpop.f32.mrb[0].mxu0
    %v3729 = vadd.f32 %v3397, %v3728
    %v3730 = vpop.f32.mrb[0].mxu0
    %3731 = vmatprep.mubr.bf16.mxu0 0
    %3732 = vmatmul.mubr.bf16.gmra.mrb[0].mxu0 %v3484
    %v3733 = vpop.f32.mrb[0].mxu0
    %v3734 = vadd.f32 %v3397, %v3733
    %v3735 = vpop.f32.mrb[0].mxu0
    %v3736 = vpop.f32.mrb[0].mxu0
    %v3737 = vadd.f32 %v3397, %v3736
    %v3738 = vpop.f32.mrb[0].mxu0
    %3739 = vmatprep.mubr.bf16.mxu0 0
    %3740 = vmatmul.mubr.bf16.gmra.mrb[0].mxu0 %v3487
    %v3741 = vpop.f32.mrb[0].mxu0
    %v3742 = vadd.f32 %v3397, %v3741
    %v3743 = vpop.f32.mrb[0].mxu0
    %v3744 = vpop.f32.mrb[0].mxu0
    %v3745 = vadd.f32 %v3397, %v3744
    %v3746 = vpop.f32.mrb[0].mxu0
    %3747 = vmatprep.mubr.bf16.mxu0 0
    %3748 = vmatmul.mubr.bf16.gmra.mrb[0].mxu0 %v3490
    %v3749 = vpop.f32.mrb[0].mxu0
    %v3750 = vadd.f32 %v3397, %v3749
    %v3751 = vpop.f32.mrb[0].mxu0
    %v3752 = vpop.f32.mrb[0].mxu0
    %v3753 = vadd.f32 %v3397, %v3752
    %v3754 = vpop.f32.mrb[0].mxu0
    %3755 = vmatprep.mubr.bf16.mxu0 0
    %3756 = vmatmul.mubr.bf16.gmra.mrb[0].mxu0 %v3493
    %v3757 = vpop.f32.mrb[0].mxu0
    %v3758 = vadd.f32 %v3397, %v3757
    %v3759 = vpop.f32.mrb[0].mxu0
    %v3760 = vpop.f32.mrb[0].mxu0
    %v3761 = vadd.f32 %v3397, %v3760
    %v3762 = vpop.f32.mrb[0].mxu0
    %3763 = vmatprep.mubr.bf16.mxu0 0
    %3764 = vmatmul.mubr.bf16.gmra.mrb[0].mxu0 %v3496
    %v3765 = vpop.f32.mrb[0].mxu0
    %v3766 = vadd.f32 %v3397, %v3765
    %v3767 = vpop.f32.mrb[0].mxu0
    %v3768 = vpop.f32.mrb[0].mxu0
    %v3769 = vadd.f32 %v3397, %v3768
    %v3770 = vpop.f32.mrb[0].mxu0
    %3771 = vmatprep.mubr.bf16.mxu0 0
    %3772 = vmatmul.mubr.bf16.gmra.mrb[0].mxu0 %v3499
    %v3773 = vpop.f32.mrb[0].mxu0
    %v3774 = vadd.f32 %v3397, %v3773
    %v3775 = vpop.f32.mrb[0].mxu0
    %v3776 = vpop.f32.mrb[0].mxu0
    %v3777 = vadd.f32 %v3397, %v3776
    %v3778 = vpop.f32.mrb[0].mxu0
    %3779 = vmatprep.mubr.bf16.mxu0 0
    %3780 = vmatmul.mubr.bf16.gmra.mrb[0].mxu0 %v3502
    %v3781 = vpop.f32.mrb[0].mxu0
    %v3782 = vadd.f32 %v3397, %v3781
    %v3783 = vpop.f32.mrb[0].mxu0
    %v3784 = vpop.f32.mrb[0].mxu0
    %v3785 = vadd.f32 %v3397, %v3784
    %v3786 = vpop.f32.mrb[0].mxu0
    %3787 = vmatprep.mubr.bf16.mxu0 0
    %3788 = vmatmul.mubr.bf16.gmra.mrb[0].mxu0 %v3505
    %v3789 = vpop.f32.mrb[0].mxu0
    %v3790 = vadd.f32 %v3397, %v3789
    %v3791 = vpop.f32.mrb[0].mxu0
    %v3792 = vpop.f32.mrb[0].mxu0
    %v3793 = vadd.f32 %v3397, %v3792
    %v3794 = vpop.f32.mrb[0].mxu0
    %3795 = vdwg.mxu0
    %v3796 = vmax.f32 %v3542, 0.0
    %v3797 = vmax.f32 %v3545, 0.0
    %v3798 = vmax.f32 %v3550, 0.0
    %v3799 = vmax.f32 %v3553, 0.0
    %v3800 = vmax.f32 %v3558, 0.0
    %v3801 = vmax.f32 %v3561, 0.0
    %v3802 = vmax.f32 %v3566, 0.0
    %v3803 = vmax.f32 %v3569, 0.0
    %v3804 = vmax.f32 %v3574, 0.0
    %v3805 = vmax.f32 %v3577, 0.0
    %v3806 = vmax.f32 %v3582, 0.0
    %v3807 = vmax.f32 %v3585, 0.0
    %v3808 = vmax.f32 %v3590, 0.0
    %v3809 = vmax.f32 %v3593, 0.0
    %v3810 = vmax.f32 %v3598, 0.0
    %v3811 = vmax.f32 %v3601, 0.0
    %v3812 = vmax.f32 %v3606, 0.0
    %v3813 = vmax.f32 %v3609, 0.0
    %v3814 = vmax.f32 %v3614, 0.0
    %v3815 = vmax.f32 %v3617, 0.0
    %v3816 = vmax.f32 %v3622, 0.0
    %v3817 = vmax.f32 %v3625, 0.0
    %v3818 = vmax.f32 %v3630, 0.0
    %v3819 = vmax.f32 %v3633, 0.0
    %v3820 = vmax.f32 %v3638, 0.0
    %v3821 = vmax.f32 %v3641, 0.0
    %v3822 = vmax.f32 %v3646, 0.0
    %v3823 = vmax.f32 %v3649, 0.0
    %v3824 = vmax.f32 %v3654, 0.0
    %v3825 = vmax.f32 %v3657, 0.0
    %v3826 = vmax.f32 %v3662, 0.0
    %v3827 = vmax.f32 %v3665, 0.0
    %v3828 = vmax.f32 %v3670, 0.0
    %v3829 = vmax.f32 %v3673, 0.0
    %v3830 = vmax.f32 %v3678, 0.0
    %v3831 = vmax.f32 %v3681, 0.0
    %v3832 = vmax.f32 %v3686, 0.0
    %v3833 = vmax.f32 %v3689, 0.0
    %v3834 = vmax.f32 %v3694, 0.0
    %v3835 = vmax.f32 %v3697, 0.0
    %v3836 = vmax.f32 %v3702, 0.0
    %v3837 = vmax.f32 %v3705, 0.0
    %v3838 = vmax.f32 %v3710, 0.0
    %v3839 = vmax.f32 %v3713, 0.0
    %v3840 = vmax.f32 %v3718, 0.0
    %v3841 = vmax.f32 %v3721, 0.0
    %v3842 = vmax.f32 %v3726, 0.0
    %v3843 = vmax.f32 %v3729, 0.0
    %v3844 = vmax.f32 %v3734, 0.0
    %v3845 = vmax.f32 %v3737, 0.0
    %v3846 = vmax.f32 %v3742, 0.0
    %v3847 = vmax.f32 %v3745, 0.0
    %v3848 = vmax.f32 %v3750, 0.0
    %v3849 = vmax.f32 %v3753, 0.0
    %v3850 = vmax.f32 %v3758, 0.0
    %v3851 = vmax.f32 %v3761, 0.0
    %v3852 = vmax.f32 %v3766, 0.0
    %v3853 = vmax.f32 %v3769, 0.0
    %v3854 = vmax.f32 %v3774, 0.0
    %v3855 = vmax.f32 %v3777, 0.0
    %v3856 = vmax.f32 %v3782, 0.0
    %v3857 = vmax.f32 %v3785, 0.0
    %v3858 = vmax.f32 %v3790, 0.0
    %v3859 = vmax.f32 %v3793, 0.0
    %v3860 = vpack.c.bf16 %v3797, %v3796
    %v3861 = vpack.c.bf16 %v3799, %v3798
    %v3862 = vpack.c.bf16 %v3801, %v3800
    %v3863 = vpack.c.bf16 %v3803, %v3802
    %v3864 = vpack.c.bf16 %v3805, %v3804
    %v3865 = vpack.c.bf16 %v3807, %v3806
    %v3866 = vpack.c.bf16 %v3809, %v3808
    %v3867 = vpack.c.bf16 %v3811, %v3810
    %v3868 = vpack.c.bf16 %v3813, %v3812
    %v3869 = vpack.c.bf16 %v3815, %v3814
    %v3870 = vpack.c.bf16 %v3817, %v3816
    %v3871 = vpack.c.bf16 %v3819, %v3818
    %v3872 = vpack.c.bf16 %v3821, %v3820
    %v3873 = vpack.c.bf16 %v3823, %v3822
    %v3874 = vpack.c.bf16 %v3825, %v3824
    %v3875 = vpack.c.bf16 %v3827, %v3826
    %v3876 = vpack.c.bf16 %v3829, %v3828
    %v3877 = vpack.c.bf16 %v3831, %v3830
    %v3878 = vpack.c.bf16 %v3833, %v3832
    %v3879 = vpack.c.bf16 %v3835, %v3834
    %v3880 = vpack.c.bf16 %v3837, %v3836
    %v3881 = vpack.c.bf16 %v3839, %v3838
    %v3882 = vpack.c.bf16 %v3841, %v3840
    %v3883 = vpack.c.bf16 %v3843, %v3842
    %v3884 = vpack.c.bf16 %v3845, %v3844
    %v3885 = vpack.c.bf16 %v3847, %v3846
    %v3886 = vpack.c.bf16 %v3849, %v3848
    %v3887 = vpack.c.bf16 %v3851, %v3850
    %v3888 = vpack.c.bf16 %v3853, %v3852
    %v3889 = vpack.c.bf16 %v3855, %v3854
    %v3890 = vpack.c.bf16 %v3857, %v3856
    %v3891 = vpack.c.bf16 %v3859, %v3858
    %v3892 = vld [vmem:[%s7] sm:$0xf]
    %v3893 = vld [vmem:[%s7 + $0x4] sm:$0xf]
    %v3894 = vld [vmem:[%s7 + $0x8] sm:$0xf]
    %v3895 = vld [vmem:[%s7 + $0xc] sm:$0xf]
    %v3896 = vld [vmem:[%s7 + $0x10] sm:$0xf]
    %v3897 = vld [vmem:[%s7 + $0x14] sm:$0xf]
    %v3898 = vld [vmem:[%s7 + $0x18] sm:$0xf]
    %v3899 = vld [vmem:[%s7 + $0x1c] sm:$0xf]
    %v3900 = vld [vmem:[%s8] sm:$0x1]
    %v3902 = vlaneseq
    %v3903 = vshrl.u32 %v3902, 7
    %v3904 = vsub.s32 0, %v3903
    %v3905 = vrot.slane %v3900, %v3904
    %v3915 = vunpack.c.l.b16 %v3892
    %v3916 = vunpack.c.l.b16 %v3893
    %v3917 = vunpack.c.l.b16 %v3894
    %v3918 = vunpack.c.l.b16 %v3895
    %v3919 = vunpack.c.l.b16 %v3896
    %v3920 = vunpack.c.l.b16 %v3897
    %v3921 = vunpack.c.l.b16 %v3898
    %v3922 = vunpack.c.l.b16 %v3899
    %v3923 = vpack.c.b16 %v3916, %v3915
    %v3924 = vpack.c.b16 %v3918, %v3917
    %v3925 = vpack.c.b16 %v3920, %v3919
    %v3926 = vpack.c.b16 %v3922, %v3921
    %vm3931 = vcmask 523264
    %v3933 = vsel %vm3931, %v3860, 0
    %v3936 = vsel %vm3931, %v3861, 0
    %v3939 = vsel %vm3931, %v3862, 0
    %v3942 = vsel %vm3931, %v3863, 0
    %v3945 = vsel %vm3931, %v3864, 0
    %v3948 = vsel %vm3931, %v3865, 0
    %v3951 = vsel %vm3931, %v3866, 0
    %v3954 = vsel %vm3931, %v3867, 0
    %v3957 = vsel %vm3931, %v3868, 0
    %v3960 = vsel %vm3931, %v3869, 0
    %v3963 = vsel %vm3931, %v3870, 0
    %v3966 = vsel %vm3931, %v3871, 0
    %v3969 = vsel %vm3931, %v3872, 0
    %v3972 = vsel %vm3931, %v3873, 0
    %v3975 = vsel %vm3931, %v3874, 0
    %v3978 = vsel %vm3931, %v3875, 0
    %v3981 = vsel %vm3931, %v3876, 0
    %v3984 = vsel %vm3931, %v3877, 0
    %v3987 = vsel %vm3931, %v3878, 0
    %v3990 = vsel %vm3931, %v3879, 0
    %v3993 = vsel %vm3931, %v3880, 0
    %v3996 = vsel %vm3931, %v3881, 0
    %v3999 = vsel %vm3931, %v3882, 0
    %v4002 = vsel %vm3931, %v3883, 0
    %v4005 = vsel %vm3931, %v3884, 0
    %v4008 = vsel %vm3931, %v3885, 0
    %v4011 = vsel %vm3931, %v3886, 0
    %v4014 = vsel %vm3931, %v3887, 0
    %v4017 = vsel %vm3931, %v3888, 0
    %v4020 = vsel %vm3931, %v3889, 0
    %v4023 = vsel %vm3931, %v3890, 0
    %v4026 = vsel %vm3931, %v3891, 0
    %4028 = vmatprep.subr.bf16.mxu0 0
    %4029 = vmatpush1.bf16.msra.mxu0 %v3923
    %4030 = vmatprep.subr.bf16.mxu0 0
    %4031 = vmatpush1.bf16.msra.mxu0 %v3924
    %4032 = vmatprep.subr.bf16.mxu0 0
    %4033 = vmatpush1.bf16.msra.mxu0 %v3925
    %4034 = vmatprep.subr.bf16.mxu0 0
    %4035 = vmatpush1.bf16.msra.mxu0 %v3926
    %4036 = vmatprep.subr.bf16.mxu0 0
    %4037 = vmatpush1.bf16.msra.mxu0 0
    %4038 = vmatprep.subr.bf16.mxu0 0
    %4039 = vmatpush1.bf16.msra.mxu0 0
    %4040 = vmatprep.subr.bf16.mxu0 0
    %4041 = vmatpush1.bf16.msra.mxu0 0
    %4042 = vmatprep.subr.bf16.mxu0 0
    %4043 = vmatpush1.bf16.msra.mxu0 0
    %4044 = vmatprep.subr.bf16.mxu0 0
    %4045 = vmatpush1.bf16.msra.mxu0 0
    %4046 = vmatprep.subr.bf16.mxu0 0
    %4047 = vmatpush1.bf16.msra.mxu0 0
    %4048 = vmatprep.subr.bf16.mxu0 0
    %4049 = vmatpush1.bf16.msra.mxu0 0
    %4050 = vmatprep.subr.bf16.mxu0 0
    %4051 = vmatpush1.bf16.msra.mxu0 0
    %4052 = vmatprep.subr.bf16.mxu0 0
    %4053 = vmatpush1.bf16.msra.mxu0 0
    %4054 = vmatprep.subr.bf16.mxu0 0
    %4055 = vmatpush1.bf16.msra.mxu0 0
    %4056 = vmatprep.subr.bf16.mxu0 0
    %4057 = vmatpush1.bf16.msra.mxu0 0
    %4058 = vmatprep.subr.bf16.mxu0 0
    %4059 = vmatpush1.bf16.msra.mxu0 0
    %4060 = vmatprep.mubr.bf16.mxu0 0
    %4061 = vmatmul.mubr.bf16.gmra.mrb[0].mxu0 %v3933
    %v4062 = vpop.f32.mrb[0].mxu0
    %v4063 = vadd.f32 %v3905, %v4062
    %v4064 = vpop.f32.mrb[0].mxu0
    %v4065 = vpop.f32.mrb[0].mxu0
    %v4066 = vadd.f32 %v3905, %v4065
    %v4067 = vpop.f32.mrb[0].mxu0
    %4068 = vmatprep.mubr.bf16.mxu0 0
    %4069 = vmatmul.mubr.bf16.gmra.mrb[0].mxu0 %v3936
    %v4070 = vpop.f32.mrb[0].mxu0
    %v4071 = vadd.f32 %v3905, %v4070
    %v4072 = vpop.f32.mrb[0].mxu0
    %v4073 = vpop.f32.mrb[0].mxu0
    %v4074 = vadd.f32 %v3905, %v4073
    %v4075 = vpop.f32.mrb[0].mxu0
    %4076 = vmatprep.mubr.bf16.mxu0 0
    %4077 = vmatmul.mubr.bf16.gmra.mrb[0].mxu0 %v3939
    %v4078 = vpop.f32.mrb[0].mxu0
    %v4079 = vadd.f32 %v3905, %v4078
    %v4080 = vpop.f32.mrb[0].mxu0
    %v4081 = vpop.f32.mrb[0].mxu0
    %v4082 = vadd.f32 %v3905, %v4081
    %v4083 = vpop.f32.mrb[0].mxu0
    %4084 = vmatprep.mubr.bf16.mxu0 0
    %4085 = vmatmul.mubr.bf16.gmra.mrb[0].mxu0 %v3942
    %v4086 = vpop.f32.mrb[0].mxu0
    %v4087 = vadd.f32 %v3905, %v4086
    %v4088 = vpop.f32.mrb[0].mxu0
    %v4089 = vpop.f32.mrb[0].mxu0
    %v4090 = vadd.f32 %v3905, %v4089
    %v4091 = vpop.f32.mrb[0].mxu0
    %4092 = vmatprep.mubr.bf16.mxu0 0
    %4093 = vmatmul.mubr.bf16.gmra.mrb[0].mxu0 %v3945
    %v4094 = vpop.f32.mrb[0].mxu0
    %v4095 = vadd.f32 %v3905, %v4094
    %v4096 = vpop.f32.mrb[0].mxu0
    %v4097 = vpop.f32.mrb[0].mxu0
    %v4098 = vadd.f32 %v3905, %v4097
    %v4099 = vpop.f32.mrb[0].mxu0
    %4100 = vmatprep.mubr.bf16.mxu0 0
    %4101 = vmatmul.mubr.bf16.gmra.mrb[0].mxu0 %v3948
    %v4102 = vpop.f32.mrb[0].mxu0
    %v4103 = vadd.f32 %v3905, %v4102
    %v4104 = vpop.f32.mrb[0].mxu0
    %v4105 = vpop.f32.mrb[0].mxu0
    %v4106 = vadd.f32 %v3905, %v4105
    %v4107 = vpop.f32.mrb[0].mxu0
    %4108 = vmatprep.mubr.bf16.mxu0 0
    %4109 = vmatmul.mubr.bf16.gmra.mrb[0].mxu0 %v3951
    %v4110 = vpop.f32.mrb[0].mxu0
    %v4111 = vadd.f32 %v3905, %v4110
    %v4112 = vpop.f32.mrb[0].mxu0
    %v4113 = vpop.f32.mrb[0].mxu0
    %v4114 = vadd.f32 %v3905, %v4113
    %v4115 = vpop.f32.mrb[0].mxu0
    %4116 = vmatprep.mubr.bf16.mxu0 0
    %4117 = vmatmul.mubr.bf16.gmra.mrb[0].mxu0 %v3954
    %v4118 = vpop.f32.mrb[0].mxu0
    %v4119 = vadd.f32 %v3905, %v4118
    %v4120 = vpop.f32.mrb[0].mxu0
    %v4121 = vpop.f32.mrb[0].mxu0
    %v4122 = vadd.f32 %v3905, %v4121
    %v4123 = vpop.f32.mrb[0].mxu0
    %4124 = vmatprep.mubr.bf16.mxu0 0
    %4125 = vmatmul.mubr.bf16.gmra.mrb[0].mxu0 %v3957
    %v4126 = vpop.f32.mrb[0].mxu0
    %v4127 = vadd.f32 %v3905, %v4126
    %v4128 = vpop.f32.mrb[0].mxu0
    %v4129 = vpop.f32.mrb[0].mxu0
    %v4130 = vadd.f32 %v3905, %v4129
    %v4131 = vpop.f32.mrb[0].mxu0
    %4132 = vmatprep.mubr.bf16.mxu0 0
    %4133 = vmatmul.mubr.bf16.gmra.mrb[0].mxu0 %v3960
    %v4134 = vpop.f32.mrb[0].mxu0
    %v4135 = vadd.f32 %v3905, %v4134
    %v4136 = vpop.f32.mrb[0].mxu0
    %v4137 = vpop.f32.mrb[0].mxu0
    %v4138 = vadd.f32 %v3905, %v4137
    %v4139 = vpop.f32.mrb[0].mxu0
    %4140 = vmatprep.mubr.bf16.mxu0 0
    %4141 = vmatmul.mubr.bf16.gmra.mrb[0].mxu0 %v3963
    %v4142 = vpop.f32.mrb[0].mxu0
    %v4143 = vadd.f32 %v3905, %v4142
    %v4144 = vpop.f32.mrb[0].mxu0
    %v4145 = vpop.f32.mrb[0].mxu0
    %v4146 = vadd.f32 %v3905, %v4145
    %v4147 = vpop.f32.mrb[0].mxu0
    %4148 = vmatprep.mubr.bf16.mxu0 0
    %4149 = vmatmul.mubr.bf16.gmra.mrb[0].mxu0 %v3966
    %v4150 = vpop.f32.mrb[0].mxu0
    %v4151 = vadd.f32 %v3905, %v4150
    %v4152 = vpop.f32.mrb[0].mxu0
    %v4153 = vpop.f32.mrb[0].mxu0
    %v4154 = vadd.f32 %v3905, %v4153
    %v4155 = vpop.f32.mrb[0].mxu0
    %4156 = vmatprep.mubr.bf16.mxu0 0
    %4157 = vmatmul.mubr.bf16.gmra.mrb[0].mxu0 %v3969
    %v4158 = vpop.f32.mrb[0].mxu0
    %v4159 = vadd.f32 %v3905, %v4158
    %v4160 = vpop.f32.mrb[0].mxu0
    %v4161 = vpop.f32.mrb[0].mxu0
    %v4162 = vadd.f32 %v3905, %v4161
    %v4163 = vpop.f32.mrb[0].mxu0
    %4164 = vmatprep.mubr.bf16.mxu0 0
    %4165 = vmatmul.mubr.bf16.gmra.mrb[0].mxu0 %v3972
    %v4166 = vpop.f32.mrb[0].mxu0
    %v4167 = vadd.f32 %v3905, %v4166
    %v4168 = vpop.f32.mrb[0].mxu0
    %v4169 = vpop.f32.mrb[0].mxu0
    %v4170 = vadd.f32 %v3905, %v4169
    %v4171 = vpop.f32.mrb[0].mxu0
    %4172 = vmatprep.mubr.bf16.mxu0 0
    %4173 = vmatmul.mubr.bf16.gmra.mrb[0].mxu0 %v3975
    %v4174 = vpop.f32.mrb[0].mxu0
    %v4175 = vadd.f32 %v3905, %v4174
    %v4176 = vpop.f32.mrb[0].mxu0
    %v4177 = vpop.f32.mrb[0].mxu0
    %v4178 = vadd.f32 %v3905, %v4177
    %v4179 = vpop.f32.mrb[0].mxu0
    %4180 = vmatprep.mubr.bf16.mxu0 0
    %4181 = vmatmul.mubr.bf16.gmra.mrb[0].mxu0 %v3978
    %v4182 = vpop.f32.mrb[0].mxu0
    %v4183 = vadd.f32 %v3905, %v4182
    %v4184 = vpop.f32.mrb[0].mxu0
    %v4185 = vpop.f32.mrb[0].mxu0
    %v4186 = vadd.f32 %v3905, %v4185
    %v4187 = vpop.f32.mrb[0].mxu0
    %4188 = vmatprep.mubr.bf16.mxu0 0
    %4189 = vmatmul.mubr.bf16.gmra.mrb[0].mxu0 %v3981
    %v4190 = vpop.f32.mrb[0].mxu0
    %v4191 = vadd.f32 %v3905, %v4190
    %v4192 = vpop.f32.mrb[0].mxu0
    %v4193 = vpop.f32.mrb[0].mxu0
    %v4194 = vadd.f32 %v3905, %v4193
    %v4195 = vpop.f32.mrb[0].mxu0
    %4196 = vmatprep.mubr.bf16.mxu0 0
    %4197 = vmatmul.mubr.bf16.gmra.mrb[0].mxu0 %v3984
    %v4198 = vpop.f32.mrb[0].mxu0
    %v4199 = vadd.f32 %v3905, %v4198
    %v4200 = vpop.f32.mrb[0].mxu0
    %v4201 = vpop.f32.mrb[0].mxu0
    %v4202 = vadd.f32 %v3905, %v4201
    %v4203 = vpop.f32.mrb[0].mxu0
    %4204 = vmatprep.mubr.bf16.mxu0 0
    %4205 = vmatmul.mubr.bf16.gmra.mrb[0].mxu0 %v3987
    %v4206 = vpop.f32.mrb[0].mxu0
    %v4207 = vadd.f32 %v3905, %v4206
    %v4208 = vpop.f32.mrb[0].mxu0
    %v4209 = vpop.f32.mrb[0].mxu0
    %v4210 = vadd.f32 %v3905, %v4209
    %v4211 = vpop.f32.mrb[0].mxu0
    %4212 = vmatprep.mubr.bf16.mxu0 0
    %4213 = vmatmul.mubr.bf16.gmra.mrb[0].mxu0 %v3990
    %v4214 = vpop.f32.mrb[0].mxu0
    %v4215 = vadd.f32 %v3905, %v4214
    %v4216 = vpop.f32.mrb[0].mxu0
    %v4217 = vpop.f32.mrb[0].mxu0
    %v4218 = vadd.f32 %v3905, %v4217
    %v4219 = vpop.f32.mrb[0].mxu0
    %4220 = vmatprep.mubr.bf16.mxu0 0
    %4221 = vmatmul.mubr.bf16.gmra.mrb[0].mxu0 %v3993
    %v4222 = vpop.f32.mrb[0].mxu0
    %v4223 = vadd.f32 %v3905, %v4222
    %v4224 = vpop.f32.mrb[0].mxu0
    %v4225 = vpop.f32.mrb[0].mxu0
    %v4226 = vadd.f32 %v3905, %v4225
    %v4227 = vpop.f32.mrb[0].mxu0
    %4228 = vmatprep.mubr.bf16.mxu0 0
    %4229 = vmatmul.mubr.bf16.gmra.mrb[0].mxu0 %v3996
    %v4230 = vpop.f32.mrb[0].mxu0
    %v4231 = vadd.f32 %v3905, %v4230
    %v4232 = vpop.f32.mrb[0].mxu0
    %v4233 = vpop.f32.mrb[0].mxu0
    %v4234 = vadd.f32 %v3905, %v4233
    %v4235 = vpop.f32.mrb[0].mxu0
    %4236 = vmatprep.mubr.bf16.mxu0 0
    %4237 = vmatmul.mubr.bf16.gmra.mrb[0].mxu0 %v3999
    %v4238 = vpop.f32.mrb[0].mxu0
    %v4239 = vadd.f32 %v3905, %v4238
    %v4240 = vpop.f32.mrb[0].mxu0
    %v4241 = vpop.f32.mrb[0].mxu0
    %v4242 = vadd.f32 %v3905, %v4241
    %v4243 = vpop.f32.mrb[0].mxu0
    %4244 = vmatprep.mubr.bf16.mxu0 0
    %4245 = vmatmul.mubr.bf16.gmra.mrb[0].mxu0 %v4002
    %v4246 = vpop.f32.mrb[0].mxu0
    %v4247 = vadd.f32 %v3905, %v4246
    %v4248 = vpop.f32.mrb[0].mxu0
    %v4249 = vpop.f32.mrb[0].mxu0
    %v4250 = vadd.f32 %v3905, %v4249
    %v4251 = vpop.f32.mrb[0].mxu0
    %4252 = vmatprep.mubr.bf16.mxu0 0
    %4253 = vmatmul.mubr.bf16.gmra.mrb[0].mxu0 %v4005
    %v4254 = vpop.f32.mrb[0].mxu0
    %v4255 = vadd.f32 %v3905, %v4254
    %v4256 = vpop.f32.mrb[0].mxu0
    %v4257 = vpop.f32.mrb[0].mxu0
    %v4258 = vadd.f32 %v3905, %v4257
    %v4259 = vpop.f32.mrb[0].mxu0
    %4260 = vmatprep.mubr.bf16.mxu0 0
    %4261 = vmatmul.mubr.bf16.gmra.mrb[0].mxu0 %v4008
    %v4262 = vpop.f32.mrb[0].mxu0
    %v4263 = vadd.f32 %v3905, %v4262
    %v4264 = vpop.f32.mrb[0].mxu0
    %v4265 = vpop.f32.mrb[0].mxu0
    %v4266 = vadd.f32 %v3905, %v4265
    %v4267 = vpop.f32.mrb[0].mxu0
    %4268 = vmatprep.mubr.bf16.mxu0 0
    %4269 = vmatmul.mubr.bf16.gmra.mrb[0].mxu0 %v4011
    %v4270 = vpop.f32.mrb[0].mxu0
    %v4271 = vadd.f32 %v3905, %v4270
    %v4272 = vpop.f32.mrb[0].mxu0
    %v4273 = vpop.f32.mrb[0].mxu0
    %v4274 = vadd.f32 %v3905, %v4273
    %v4275 = vpop.f32.mrb[0].mxu0
    %4276 = vmatprep.mubr.bf16.mxu0 0
    %4277 = vmatmul.mubr.bf16.gmra.mrb[0].mxu0 %v4014
    %v4278 = vpop.f32.mrb[0].mxu0
    %v4279 = vadd.f32 %v3905, %v4278
    %v4280 = vpop.f32.mrb[0].mxu0
    %v4281 = vpop.f32.mrb[0].mxu0
    %v4282 = vadd.f32 %v3905, %v4281
    %v4283 = vpop.f32.mrb[0].mxu0
    %4284 = vmatprep.mubr.bf16.mxu0 0
    %4285 = vmatmul.mubr.bf16.gmra.mrb[0].mxu0 %v4017
    %v4286 = vpop.f32.mrb[0].mxu0
    %v4287 = vadd.f32 %v3905, %v4286
    %v4288 = vpop.f32.mrb[0].mxu0
    %v4289 = vpop.f32.mrb[0].mxu0
    %v4290 = vadd.f32 %v3905, %v4289
    %v4291 = vpop.f32.mrb[0].mxu0
    %4292 = vmatprep.mubr.bf16.mxu0 0
    %4293 = vmatmul.mubr.bf16.gmra.mrb[0].mxu0 %v4020
    %v4294 = vpop.f32.mrb[0].mxu0
    %v4295 = vadd.f32 %v3905, %v4294
    %v4296 = vpop.f32.mrb[0].mxu0
    %v4297 = vpop.f32.mrb[0].mxu0
    %v4298 = vadd.f32 %v3905, %v4297
    %v4299 = vpop.f32.mrb[0].mxu0
    %4300 = vmatprep.mubr.bf16.mxu0 0
    %4301 = vmatmul.mubr.bf16.gmra.mrb[0].mxu0 %v4023
    %v4302 = vpop.f32.mrb[0].mxu0
    %v4303 = vadd.f32 %v3905, %v4302
    %v4304 = vpop.f32.mrb[0].mxu0
    %v4305 = vpop.f32.mrb[0].mxu0
    %v4306 = vadd.f32 %v3905, %v4305
    %v4307 = vpop.f32.mrb[0].mxu0
    %4308 = vmatprep.mubr.bf16.mxu0 0
    %4309 = vmatmul.mubr.bf16.gmra.mrb[0].mxu0 %v4026
    %v4310 = vpop.f32.mrb[0].mxu0
    %v4311 = vadd.f32 %v3905, %v4310
    %v4312 = vpop.f32.mrb[0].mxu0
    %v4313 = vpop.f32.mrb[0].mxu0
    %v4314 = vadd.f32 %v3905, %v4313
    %v4315 = vpop.f32.mrb[0].mxu0
    %4316 = vdwg.mxu0
    %v4317 = vadd.f32 %v4063, %v48
    %v4318 = vadd.f32 %v4066, %v49
    %v4319 = vadd.f32 %v4071, %v50
    %v4320 = vadd.f32 %v4074, %v51
    %v4321 = vadd.f32 %v4079, %v52
    %v4322 = vadd.f32 %v4082, %v53
    %v4323 = vadd.f32 %v4087, %v54
    %v4324 = vadd.f32 %v4090, %v55
    %v4325 = vadd.f32 %v4095, %v56
    %v4326 = vadd.f32 %v4098, %v57
    %v4327 = vadd.f32 %v4103, %v58
    %v4328 = vadd.f32 %v4106, %v59
    %v4329 = vadd.f32 %v4111, %v60
    %v4330 = vadd.f32 %v4114, %v61
    %v4331 = vadd.f32 %v4119, %v62
    %v4332 = vadd.f32 %v4122, %v63
    %v4333 = vadd.f32 %v4127, %v64
    %v4334 = vadd.f32 %v4130, %v65
    %v4335 = vadd.f32 %v4135, %v66
    %v4336 = vadd.f32 %v4138, %v67
    %v4337 = vadd.f32 %v4143, %v68
    %v4338 = vadd.f32 %v4146, %v69
    %v4339 = vadd.f32 %v4151, %v70
    %v4340 = vadd.f32 %v4154, %v71
    %v4341 = vadd.f32 %v4159, %v72
    %v4342 = vadd.f32 %v4162, %v73
    %v4343 = vadd.f32 %v4167, %v74
    %v4344 = vadd.f32 %v4170, %v75
    %v4345 = vadd.f32 %v4175, %v76
    %v4346 = vadd.f32 %v4178, %v77
    %v4347 = vadd.f32 %v4183, %v78
    %v4348 = vadd.f32 %v4186, %v79
    %v4349 = vadd.f32 %v4191, %v80
    %v4350 = vadd.f32 %v4194, %v81
    %v4351 = vadd.f32 %v4199, %v82
    %v4352 = vadd.f32 %v4202, %v83
    %v4353 = vadd.f32 %v4207, %v84
    %v4354 = vadd.f32 %v4210, %v85
    %v4355 = vadd.f32 %v4215, %v86
    %v4356 = vadd.f32 %v4218, %v87
    %v4357 = vadd.f32 %v4223, %v88
    %v4358 = vadd.f32 %v4226, %v89
    %v4359 = vadd.f32 %v4231, %v90
    %v4360 = vadd.f32 %v4234, %v91
    %v4361 = vadd.f32 %v4239, %v92
    %v4362 = vadd.f32 %v4242, %v93
    %v4363 = vadd.f32 %v4247, %v94
    %v4364 = vadd.f32 %v4250, %v95
    %v4365 = vadd.f32 %v4255, %v96
    %v4366 = vadd.f32 %v4258, %v97
    %v4367 = vadd.f32 %v4263, %v98
    %v4368 = vadd.f32 %v4266, %v99
    %v4369 = vadd.f32 %v4271, %v100
    %v4370 = vadd.f32 %v4274, %v101
    %v4371 = vadd.f32 %v4279, %v102
    %v4372 = vadd.f32 %v4282, %v103
    %v4373 = vadd.f32 %v4287, %v104
    %v4374 = vadd.f32 %v4290, %v105
    %v4375 = vadd.f32 %v4295, %v106
    %v4376 = vadd.f32 %v4298, %v107
    %v4377 = vadd.f32 %v4303, %v108
    %v4378 = vadd.f32 %v4306, %v109
    %v4379 = vadd.f32 %v4311, %v110
    %v4380 = vadd.f32 %v4314, %v111
    %4381 = vst.msk [vmem:[#allocation5] sm:$0xff] %vm114, %v4317
    %4382 = vst.msk [vmem:[#allocation5 + $0x8] sm:$0xff] %vm114, %v4318
    %4383 = vst.msk [vmem:[#allocation5 + $0x10] sm:$0xff] %vm114, %v4319
    %4384 = vst.msk [vmem:[#allocation5 + $0x18] sm:$0xff] %vm114, %v4320
    %4385 = vst.msk [vmem:[#allocation5 + $0x20] sm:$0xff] %vm114, %v4321
    %4386 = vst.msk [vmem:[#allocation5 + $0x28] sm:$0xff] %vm114, %v4322
    %4387 = vst.msk [vmem:[#allocation5 + $0x30] sm:$0xff] %vm114, %v4323
    %4388 = vst.msk [vmem:[#allocation5 + $0x38] sm:$0xff] %vm114, %v4324
    %4389 = vst.msk [vmem:[#allocation5 + $0x40] sm:$0xff] %vm114, %v4325
    %4390 = vst.msk [vmem:[#allocation5 + $0x48] sm:$0xff] %vm114, %v4326
    %4391 = vst.msk [vmem:[#allocation5 + $0x50] sm:$0xff] %vm114, %v4327
    %4392 = vst.msk [vmem:[#allocation5 + $0x58] sm:$0xff] %vm114, %v4328
    %4393 = vst.msk [vmem:[#allocation5 + $0x60] sm:$0xff] %vm114, %v4329
    %4394 = vst.msk [vmem:[#allocation5 + $0x68] sm:$0xff] %vm114, %v4330
    %4395 = vst.msk [vmem:[#allocation5 + $0x70] sm:$0xff] %vm114, %v4331
    %4396 = vst.msk [vmem:[#allocation5 + $0x78] sm:$0xff] %vm114, %v4332
    %4397 = vst.msk [vmem:[#allocation5 + $0x80] sm:$0xff] %vm114, %v4333
    %4398 = vst.msk [vmem:[#allocation5 + $0x88] sm:$0xff] %vm114, %v4334
    %4399 = vst.msk [vmem:[#allocation5 + $0x90] sm:$0xff] %vm114, %v4335
    %4400 = vst.msk [vmem:[#allocation5 + $0x98] sm:$0xff] %vm114, %v4336
    %4401 = vst.msk [vmem:[#allocation5 + $0xa0] sm:$0xff] %vm114, %v4337
    %4402 = vst.msk [vmem:[#allocation5 + $0xa8] sm:$0xff] %vm114, %v4338
    %4403 = vst.msk [vmem:[#allocation5 + $0xb0] sm:$0xff] %vm114, %v4339
    %4404 = vst.msk [vmem:[#allocation5 + $0xb8] sm:$0xff] %vm114, %v4340
    %4405 = vst.msk [vmem:[#allocation5 + $0xc0] sm:$0xff] %vm114, %v4341
    %4406 = vst.msk [vmem:[#allocation5 + $0xc8] sm:$0xff] %vm114, %v4342
    %4407 = vst.msk [vmem:[#allocation5 + $0xd0] sm:$0xff] %vm114, %v4343
    %4408 = vst.msk [vmem:[#allocation5 + $0xd8] sm:$0xff] %vm114, %v4344
    %4409 = vst.msk [vmem:[#allocation5 + $0xe0] sm:$0xff] %vm114, %v4345
    %4410 = vst.msk [vmem:[#allocation5 + $0xe8] sm:$0xff] %vm114, %v4346
    %4411 = vst.msk [vmem:[#allocation5 + $0xf0] sm:$0xff] %vm114, %v4347
    %4412 = vst.msk [vmem:[#allocation5 + $0xf8] sm:$0xff] %vm114, %v4348
    %4413 = vst.msk [vmem:[#allocation5 + $0x100] sm:$0xff] %vm114, %v4349
    %4414 = vst.msk [vmem:[#allocation5 + $0x108] sm:$0xff] %vm114, %v4350
    %4415 = vst.msk [vmem:[#allocation5 + $0x110] sm:$0xff] %vm114, %v4351
    %4416 = vst.msk [vmem:[#allocation5 + $0x118] sm:$0xff] %vm114, %v4352
    %4417 = vst.msk [vmem:[#allocation5 + $0x120] sm:$0xff] %vm114, %v4353
    %4418 = vst.msk [vmem:[#allocation5 + $0x128] sm:$0xff] %vm114, %v4354
    %4419 = vst.msk [vmem:[#allocation5 + $0x130] sm:$0xff] %vm114, %v4355
    %4420 = vst.msk [vmem:[#allocation5 + $0x138] sm:$0xff] %vm114, %v4356
    %4421 = vst.msk [vmem:[#allocation5 + $0x140] sm:$0xff] %vm114, %v4357
    %4422 = vst.msk [vmem:[#allocation5 + $0x148] sm:$0xff] %vm114, %v4358
    %4423 = vst.msk [vmem:[#allocation5 + $0x150] sm:$0xff] %vm114, %v4359
    %4424 = vst.msk [vmem:[#allocation5 + $0x158] sm:$0xff] %vm114, %v4360
    %4425 = vst.msk [vmem:[#allocation5 + $0x160] sm:$0xff] %vm114, %v4361
    %4426 = vst.msk [vmem:[#allocation5 + $0x168] sm:$0xff] %vm114, %v4362
    %4427 = vst.msk [vmem:[#allocation5 + $0x170] sm:$0xff] %vm114, %v4363
    %4428 = vst.msk [vmem:[#allocation5 + $0x178] sm:$0xff] %vm114, %v4364
    %4429 = vst.msk [vmem:[#allocation5 + $0x180] sm:$0xff] %vm114, %v4365
    %4430 = vst.msk [vmem:[#allocation5 + $0x188] sm:$0xff] %vm114, %v4366
    %4431 = vst.msk [vmem:[#allocation5 + $0x190] sm:$0xff] %vm114, %v4367
    %4432 = vst.msk [vmem:[#allocation5 + $0x198] sm:$0xff] %vm114, %v4368
    %4433 = vst.msk [vmem:[#allocation5 + $0x1a0] sm:$0xff] %vm114, %v4369
    %4434 = vst.msk [vmem:[#allocation5 + $0x1a8] sm:$0xff] %vm114, %v4370
    %4435 = vst.msk [vmem:[#allocation5 + $0x1b0] sm:$0xff] %vm114, %v4371
    %4436 = vst.msk [vmem:[#allocation5 + $0x1b8] sm:$0xff] %vm114, %v4372
    %4437 = vst.msk [vmem:[#allocation5 + $0x1c0] sm:$0xff] %vm114, %v4373
    %4438 = vst.msk [vmem:[#allocation5 + $0x1c8] sm:$0xff] %vm114, %v4374
    %4439 = vst.msk [vmem:[#allocation5 + $0x1d0] sm:$0xff] %vm114, %v4375
    %4440 = vst.msk [vmem:[#allocation5 + $0x1d8] sm:$0xff] %vm114, %v4376
    %4441 = vst.msk [vmem:[#allocation5 + $0x1e0] sm:$0xff] %vm114, %v4377
    %4442 = vst.msk [vmem:[#allocation5 + $0x1e8] sm:$0xff] %vm114, %v4378
    %4443 = vst.msk [vmem:[#allocation5 + $0x1f0] sm:$0xff] %vm114, %v4379
    %4444 = vst.msk [vmem:[#allocation5 + $0x1f8] sm:$0xff] %vm114, %v4380
    // Predicated region
    $region42: #{tpu_custom_call.1} parent=1 // pred_check
      _
    $region43: #{tpu_custom_call.1} parent=1 // pred_check_branch
      %4446 = sbr.rel (0) target = $region45
    $region44: #{tpu_custom_call.1} parent=1 // pred_region
      %s4448 = ssub.s32 8192, 8192
      %4449 = vsyncadd [#allocation4], %s4448
      %s4450 = sshll.u32 [#allocation5], 4
      %s4451 = int_to_ptr.vmem [resolvable:$true] %s4450
      %4456 = dma.vmem_to_hbm [thread:$0]  %s4451, 8192, %s9, [#allocation4], 128, 128, 8
    $region45: #{tpu_custom_call.1} parent=1 // pred_fallthru
      _
    // Predicated region
    $region46: #{tpu_custom_call.1} parent=1 // pred_check
      _
    $region47: #{tpu_custom_call.1} parent=1 // pred_check_branch
      %4458 = sbr.rel (0) target = $region49
    $region48: #{tpu_custom_call.1} parent=1 // pred_region
      %4459 = dma.done [#allocation4], 8192
    $region49: #{tpu_custom_call.1} parent=1 // pred_fallthru
      _
    %4460 = vsyncpa [#allocation3], 1
    %4461 = vsyncpa [#allocation4], 1

</llo_original>
